<compile_context>
chip_gen: v7x
topology: tpu7x:2x2x1
jax: 0.10.0
libtpu: 0.0.40
codegen_flags: <defaults>
</compile_context>

<pallas_src>
import jax
import jax.numpy as jnp
from jax.experimental import pallas as pl
from jax.experimental.pallas import tpu as pltpu


def _block_kernel(x_ref, w_ref, bias_ref, o_ref, xpad_ref, acc_ref):
    """One grid step processes one image.

    x_ref    : (1, H, W, Cin)      bf16 input tile (VMEM)
    w_ref    : (3, 3, Cin, Cout)   bf16 conv weights, HWIO, BN scale folded in
    bias_ref : (1, Cout)           f32 folded conv-bias + BN shift
    o_ref    : (1, H, W, Cout)     f32 output tile
    xpad_ref : ((H+3)*(W+2), Cin)  f32 VMEM scratch: zero-padded image,
                                   row-flattened with row stride S = W+2
    acc_ref  : (H*(W+2), Cout)     f32 VMEM accumulator (flattened output rows,
                                   2 garbage columns per row discarded at store)
    """
    _, H, W, Cout = o_ref.shape
    S = W + 2            # padded row stride
    M = H * S            # flattened matmul M dimension per tap

    # --- Stage the zero-padded input in VMEM (no padded copy in HBM). -------
    xpad_ref[...] = jnp.zeros(xpad_ref.shape, xpad_ref.dtype)
    for i in range(H):
        xpad_ref[pl.ds((i + 1) * S + 1, W), :] = (
            x_ref[0, i, :, :].astype(jnp.float32))

    # --- 3x3 conv as 9 flattened (M, Cin) x (Cin, Cout) MXU matmuls. --------
    # Tap (kh, kw) of the padded image is the contiguous flat slice starting
    # at kh*S + kw (the 2 wrap-around columns per row are discarded later).
    first = True
    for kh in range(3):
        for kw in range(3):
            patch = xpad_ref[pl.ds(kh * S + kw, M), :].astype(jnp.bfloat16)
            contrib = jnp.dot(patch, w_ref[kh, kw, :, :],
                              preferred_element_type=jnp.float32)
            if first:
                acc_ref[...] = contrib
                first = False
            else:
                acc_ref[...] += contrib

    # --- Fused bias (BN shift) + ReLU epilogue, drop the 2 pad columns. -----
    y = jnp.maximum(acc_ref[...] + bias_ref[...], 0.0).astype(o_ref.dtype)
    for i in range(H):
        o_ref[0, i, :, :] = y[i * S:i * S + W, :]


def block_forward_nhwc(x_nhwc, w_oihw, conv_bias, gamma, beta, run_mean,
                       run_var, eps=1e-5):
    """Conv3x3(pad=1) + BatchNorm2d(eval) + ReLU; NHWC in / NHWC out."""
    N, H, W, Cin = x_nhwc.shape
    Cout = w_oihw.shape[0]
    S = W + 2
    M = H * S

    # ---- BN (eval) folding: scale -> weights, shift -> bias ----------------
    bn_scale = (gamma / jnp.sqrt(run_var + eps)).astype(jnp.float32)     # (Cout,)
    w_hwio = jnp.transpose(w_oihw, (2, 3, 1, 0)).astype(jnp.float32)     # OIHW->HWIO
    w_folded = (w_hwio * bn_scale[None, None, None, :]).astype(jnp.bfloat16)
    bias = ((conv_bias - run_mean) * bn_scale + beta).reshape(1, Cout)
    bias = bias.astype(jnp.float32)

    x_bf16 = x_nhwc.astype(jnp.bfloat16)

    out_nhwc = pl.pallas_call(
        _block_kernel,
        out_shape=jax.ShapeDtypeStruct((N, H, W, Cout), x_nhwc.dtype),
        grid_spec=pltpu.PrefetchScalarGridSpec(
            num_scalar_prefetch=0,
            grid=(N,),
            in_specs=[
                pl.BlockSpec((1, H, W, Cin), lambda n: (n, 0, 0, 0)),
                pl.BlockSpec((3, 3, Cin, Cout), lambda n: (0, 0, 0, 0)),
                pl.BlockSpec((1, Cout), lambda n: (0, 0)),
            ],
            out_specs=pl.BlockSpec((1, H, W, Cout), lambda n: (n, 0, 0, 0)),
            scratch_shapes=[
                pltpu.VMEM(((H + 3) * S, Cin), jnp.float32),   # padded image
                pltpu.VMEM((M, Cout), jnp.float32),            # accumulator
            ],
        ),
        compiler_params=pltpu.CompilerParams(
            dimension_semantics=("parallel",),
            vmem_limit_bytes=32 * 1024 * 1024),
    )(x_bf16, w_folded, bias)
    return out_nhwc


def block_forward(x_nchw, w_oihw, conv_bias, gamma, beta, run_mean, run_var,
                  eps=1e-5):
    """NCHW wrapper matching the PyTorch module interface."""
    x_nhwc = jnp.transpose(x_nchw, (0, 2, 3, 1))                 # NCHW -> NHWC
    out_nhwc = block_forward_nhwc(x_nhwc, w_oihw, conv_bias, gamma, beta,
                                  run_mean, run_var, eps)
    return jnp.transpose(out_nhwc, (0, 3, 1, 2))                 # NHWC -> NCHW


def _reference(x_nchw, w_oihw, conv_bias, gamma, beta, run_mean, run_var,
               eps=1e-5):
    """Pure-JAX f32 reference (lax conv) for a correctness sanity check."""
    y = jax.lax.conv_general_dilated(
        x_nchw, w_oihw, window_strides=(1, 1), padding=((1, 1), (1, 1)),
        dimension_numbers=("NCHW", "OIHW", "NCHW"))
    y = y + conv_bias[None, :, None, None]
    y = (y - run_mean[None, :, None, None]) / jnp.sqrt(
        run_var[None, :, None, None] + eps)
    y = y * gamma[None, :, None, None] + beta[None, :, None, None]
    return jnp.maximum(y, 0.0)


if __name__ == "__main__":
    # Small deterministic example: batch=2, in_ch=4, out_ch=8, spatial=16x16.
    N, Cin, Cout, H, W = 2, 4, 8, 16, 16

    key = jax.random.PRNGKey(0)
    k_x, k_w, k_b = jax.random.split(key, 3)

    x = jax.random.normal(k_x, (N, Cin, H, W), dtype=jnp.float32)
    w = jax.random.normal(k_w, (Cout, Cin, 3, 3), dtype=jnp.float32) * 0.1
    conv_bias = jax.random.normal(k_b, (Cout,), dtype=jnp.float32) * 0.1

    # Fresh nn.BatchNorm2d parameters / buffers (deterministic).
    gamma = jnp.ones((Cout,), jnp.float32)
    beta = jnp.zeros((Cout,), jnp.float32)
    run_mean = jnp.zeros((Cout,), jnp.float32)
    run_var = jnp.ones((Cout,), jnp.float32)

    fwd = jax.jit(block_forward)
    out = fwd(x, w, conv_bias, gamma, beta, run_mean, run_var)
    out = jax.block_until_ready(out)

    ref = _reference(x, w, conv_bias, gamma, beta, run_mean, run_var)
    assert out.shape == (N, Cout, H, W)
    # Tolerance accounts for the bf16 cast of inputs/weights inside the kernel
    # (f32 accumulation); any indexing/folding bug would be orders larger.
    assert jnp.allclose(out, ref, atol=5e-2, rtol=5e-2), "mismatch vs reference"

    print("KERNEL_OK")
</pallas_src>

<mosaic_0001>
module attributes {stable_mosaic.version = 11 : i64} {
  func.func @_block_kernel(%arg0: i32, %arg1: memref<1x16x16x4xbf16, #tpu.memory_space<vmem>>, %arg2: memref<3x3x4x8xbf16, #tpu.memory_space<vmem>>, %arg3: memref<1x8xf32, #tpu.memory_space<vmem>>, %arg4: memref<1x16x16x8xf32, #tpu.memory_space<vmem>>, %arg5: memref<342x4xf32, #tpu.memory_space<vmem>>, %arg6: memref<288x8xf32, #tpu.memory_space<vmem>>) attributes {dimension_semantics = [#tpu.dimension_semantics<parallel>], iteration_bounds = array<i64: 2>, scalar_prefetch = 0 : i64, scratch_operands = 2 : i64, tpu.core_type = #tpu.core_type<tc>, window_params = [{transform_indices = @transform_0, window_bounds = array<i64: 1, 16, 16, 4>}, {pipeline_mode = #tpu.pipeline_mode<synchronous>, transform_indices = @transform_1, window_bounds = array<i64: 3, 3, 4, 8>}, {pipeline_mode = #tpu.pipeline_mode<synchronous>, transform_indices = @transform_2, window_bounds = array<i64: 1, 8>}, {transform_indices = @transform_3, window_bounds = array<i64: 1, 16, 16, 8>}]} {
    %cst = arith.constant 0.000000e+00 : f32
    %0 = vector.broadcast %cst : f32 to vector<342x4xf32>
    %c0 = arith.constant 0 : index
    %c0_0 = arith.constant 0 : index
    %1 = vector.load %arg5[%c0, %c0_0] : memref<342x4xf32, #tpu.memory_space<vmem>>, vector<342x4xf32>
    tpu.vector_store %arg5[%c0, %c0_0], %0 {strides = array<i32>} : memref<342x4xf32, #tpu.memory_space<vmem>>, vector<342x4xf32>,
    %c0_1 = arith.constant 0 : index
    %c0_2 = arith.constant 0 : index
    %c0_3 = arith.constant 0 : index
    %c0_4 = arith.constant 0 : index
    %2 = vector.load %arg1[%c0_1, %c0_2, %c0_3, %c0_4] : memref<1x16x16x4xbf16, #tpu.memory_space<vmem>>, vector<1x1x16x4xbf16>
    %3 = vector.shape_cast %2 : vector<1x1x16x4xbf16> to vector<16x4xbf16>
    %4 = arith.extf %3 : vector<16x4xbf16> to vector<16x4xf32>
    %c19 = arith.constant 19 : index
    %c0_5 = arith.constant 0 : index
    %5 = vector.load %arg5[%c19, %c0_5] : memref<342x4xf32, #tpu.memory_space<vmem>>, vector<16x4xf32>
    tpu.vector_store %arg5[%c19, %c0_5], %4 {strides = array<i32>} : memref<342x4xf32, #tpu.memory_space<vmem>>, vector<16x4xf32>,
    %c0_6 = arith.constant 0 : index
    %c1 = arith.constant 1 : index
    %c0_7 = arith.constant 0 : index
    %c0_8 = arith.constant 0 : index
    %6 = vector.load %arg1[%c0_6, %c1, %c0_7, %c0_8] : memref<1x16x16x4xbf16, #tpu.memory_space<vmem>>, vector<1x1x16x4xbf16>
    %7 = vector.shape_cast %6 : vector<1x1x16x4xbf16> to vector<16x4xbf16>
    %8 = arith.extf %7 : vector<16x4xbf16> to vector<16x4xf32>
    %c37 = arith.constant 37 : index
    %c0_9 = arith.constant 0 : index
    %9 = vector.load %arg5[%c37, %c0_9] : memref<342x4xf32, #tpu.memory_space<vmem>>, vector<16x4xf32>
    tpu.vector_store %arg5[%c37, %c0_9], %8 {strides = array<i32>} : memref<342x4xf32, #tpu.memory_space<vmem>>, vector<16x4xf32>,
    %c0_10 = arith.constant 0 : index
    %c2 = arith.constant 2 : index
    %c0_11 = arith.constant 0 : index
    %c0_12 = arith.constant 0 : index
    %10 = vector.load %arg1[%c0_10, %c2, %c0_11, %c0_12] : memref<1x16x16x4xbf16, #tpu.memory_space<vmem>>, vector<1x1x16x4xbf16>
    %11 = vector.shape_cast %10 : vector<1x1x16x4xbf16> to vector<16x4xbf16>
    %12 = arith.extf %11 : vector<16x4xbf16> to vector<16x4xf32>
    %c55 = arith.constant 55 : index
    %c0_13 = arith.constant 0 : index
    %13 = vector.load %arg5[%c55, %c0_13] : memref<342x4xf32, #tpu.memory_space<vmem>>, vector<16x4xf32>
    tpu.vector_store %arg5[%c55, %c0_13], %12 {strides = array<i32>} : memref<342x4xf32, #tpu.memory_space<vmem>>, vector<16x4xf32>,
    %c0_14 = arith.constant 0 : index
    %c3 = arith.constant 3 : index
    %c0_15 = arith.constant 0 : index
    %c0_16 = arith.constant 0 : index
    %14 = vector.load %arg1[%c0_14, %c3, %c0_15, %c0_16] : memref<1x16x16x4xbf16, #tpu.memory_space<vmem>>, vector<1x1x16x4xbf16>
    %15 = vector.shape_cast %14 : vector<1x1x16x4xbf16> to vector<16x4xbf16>
    %16 = arith.extf %15 : vector<16x4xbf16> to vector<16x4xf32>
    %c73 = arith.constant 73 : index
    %c0_17 = arith.constant 0 : index
    %17 = vector.load %arg5[%c73, %c0_17] : memref<342x4xf32, #tpu.memory_space<vmem>>, vector<16x4xf32>
    tpu.vector_store %arg5[%c73, %c0_17], %16 {strides = array<i32>} : memref<342x4xf32, #tpu.memory_space<vmem>>, vector<16x4xf32>,
    %c0_18 = arith.constant 0 : index
    %c4 = arith.constant 4 : index
    %c0_19 = arith.constant 0 : index
    %c0_20 = arith.constant 0 : index
    %18 = vector.load %arg1[%c0_18, %c4, %c0_19, %c0_20] : memref<1x16x16x4xbf16, #tpu.memory_space<vmem>>, vector<1x1x16x4xbf16>
    %19 = vector.shape_cast %18 : vector<1x1x16x4xbf16> to vector<16x4xbf16>
    %20 = arith.extf %19 : vector<16x4xbf16> to vector<16x4xf32>
    %c91 = arith.constant 91 : index
    %c0_21 = arith.constant 0 : index
    %21 = vector.load %arg5[%c91, %c0_21] : memref<342x4xf32, #tpu.memory_space<vmem>>, vector<16x4xf32>
    tpu.vector_store %arg5[%c91, %c0_21], %20 {strides = array<i32>} : memref<342x4xf32, #tpu.memory_space<vmem>>, vector<16x4xf32>,
    %c0_22 = arith.constant 0 : index
    %c5 = arith.constant 5 : index
    %c0_23 = arith.constant 0 : index
    %c0_24 = arith.constant 0 : index
    %22 = vector.load %arg1[%c0_22, %c5, %c0_23, %c0_24] : memref<1x16x16x4xbf16, #tpu.memory_space<vmem>>, vector<1x1x16x4xbf16>
    %23 = vector.shape_cast %22 : vector<1x1x16x4xbf16> to vector<16x4xbf16>
    %24 = arith.extf %23 : vector<16x4xbf16> to vector<16x4xf32>
    %c109 = arith.constant 109 : index
    %c0_25 = arith.constant 0 : index
    %25 = vector.load %arg5[%c109, %c0_25] : memref<342x4xf32, #tpu.memory_space<vmem>>, vector<16x4xf32>
    tpu.vector_store %arg5[%c109, %c0_25], %24 {strides = array<i32>} : memref<342x4xf32, #tpu.memory_space<vmem>>, vector<16x4xf32>,
    %c0_26 = arith.constant 0 : index
    %c6 = arith.constant 6 : index
    %c0_27 = arith.constant 0 : index
    %c0_28 = arith.constant 0 : index
    %26 = vector.load %arg1[%c0_26, %c6, %c0_27, %c0_28] : memref<1x16x16x4xbf16, #tpu.memory_space<vmem>>, vector<1x1x16x4xbf16>
    %27 = vector.shape_cast %26 : vector<1x1x16x4xbf16> to vector<16x4xbf16>
    %28 = arith.extf %27 : vector<16x4xbf16> to vector<16x4xf32>
    %c127 = arith.constant 127 : index
    %c0_29 = arith.constant 0 : index
    %29 = vector.load %arg5[%c127, %c0_29] : memref<342x4xf32, #tpu.memory_space<vmem>>, vector<16x4xf32>
    tpu.vector_store %arg5[%c127, %c0_29], %28 {strides = array<i32>} : memref<342x4xf32, #tpu.memory_space<vmem>>, vector<16x4xf32>,
    %c0_30 = arith.constant 0 : index
    %c7 = arith.constant 7 : index
    %c0_31 = arith.constant 0 : index
    %c0_32 = arith.constant 0 : index
    %30 = vector.load %arg1[%c0_30, %c7, %c0_31, %c0_32] : memref<1x16x16x4xbf16, #tpu.memory_space<vmem>>, vector<1x1x16x4xbf16>
    %31 = vector.shape_cast %30 : vector<1x1x16x4xbf16> to vector<16x4xbf16>
    %32 = arith.extf %31 : vector<16x4xbf16> to vector<16x4xf32>
    %c145 = arith.constant 145 : index
    %c0_33 = arith.constant 0 : index
    %33 = vector.load %arg5[%c145, %c0_33] : memref<342x4xf32, #tpu.memory_space<vmem>>, vector<16x4xf32>
    tpu.vector_store %arg5[%c145, %c0_33], %32 {strides = array<i32>} : memref<342x4xf32, #tpu.memory_space<vmem>>, vector<16x4xf32>,
    %c0_34 = arith.constant 0 : index
    %c8 = arith.constant 8 : index
    %c0_35 = arith.constant 0 : index
    %c0_36 = arith.constant 0 : index
    %34 = vector.load %arg1[%c0_34, %c8, %c0_35, %c0_36] : memref<1x16x16x4xbf16, #tpu.memory_space<vmem>>, vector<1x1x16x4xbf16>
    %35 = vector.shape_cast %34 : vector<1x1x16x4xbf16> to vector<16x4xbf16>
    %36 = arith.extf %35 : vector<16x4xbf16> to vector<16x4xf32>
    %c163 = arith.constant 163 : index
    %c0_37 = arith.constant 0 : index
    %37 = vector.load %arg5[%c163, %c0_37] : memref<342x4xf32, #tpu.memory_space<vmem>>, vector<16x4xf32>
    tpu.vector_store %arg5[%c163, %c0_37], %36 {strides = array<i32>} : memref<342x4xf32, #tpu.memory_space<vmem>>, vector<16x4xf32>,
    %c0_38 = arith.constant 0 : index
    %c9 = arith.constant 9 : index
    %c0_39 = arith.constant 0 : index
    %c0_40 = arith.constant 0 : index
    %38 = vector.load %arg1[%c0_38, %c9, %c0_39, %c0_40] : memref<1x16x16x4xbf16, #tpu.memory_space<vmem>>, vector<1x1x16x4xbf16>
    %39 = vector.shape_cast %38 : vector<1x1x16x4xbf16> to vector<16x4xbf16>
    %40 = arith.extf %39 : vector<16x4xbf16> to vector<16x4xf32>
    %c181 = arith.constant 181 : index
    %c0_41 = arith.constant 0 : index
    %41 = vector.load %arg5[%c181, %c0_41] : memref<342x4xf32, #tpu.memory_space<vmem>>, vector<16x4xf32>
    tpu.vector_store %arg5[%c181, %c0_41], %40 {strides = array<i32>} : memref<342x4xf32, #tpu.memory_space<vmem>>, vector<16x4xf32>,
    %c0_42 = arith.constant 0 : index
    %c10 = arith.constant 10 : index
    %c0_43 = arith.constant 0 : index
    %c0_44 = arith.constant 0 : index
    %42 = vector.load %arg1[%c0_42, %c10, %c0_43, %c0_44] : memref<1x16x16x4xbf16, #tpu.memory_space<vmem>>, vector<1x1x16x4xbf16>
    %43 = vector.shape_cast %42 : vector<1x1x16x4xbf16> to vector<16x4xbf16>
    %44 = arith.extf %43 : vector<16x4xbf16> to vector<16x4xf32>
    %c199 = arith.constant 199 : index
    %c0_45 = arith.constant 0 : index
    %45 = vector.load %arg5[%c199, %c0_45] : memref<342x4xf32, #tpu.memory_space<vmem>>, vector<16x4xf32>
    tpu.vector_store %arg5[%c199, %c0_45], %44 {strides = array<i32>} : memref<342x4xf32, #tpu.memory_space<vmem>>, vector<16x4xf32>,
    %c0_46 = arith.constant 0 : index
    %c11 = arith.constant 11 : index
    %c0_47 = arith.constant 0 : index
    %c0_48 = arith.constant 0 : index
    %46 = vector.load %arg1[%c0_46, %c11, %c0_47, %c0_48] : memref<1x16x16x4xbf16, #tpu.memory_space<vmem>>, vector<1x1x16x4xbf16>
    %47 = vector.shape_cast %46 : vector<1x1x16x4xbf16> to vector<16x4xbf16>
    %48 = arith.extf %47 : vector<16x4xbf16> to vector<16x4xf32>
    %c217 = arith.constant 217 : index
    %c0_49 = arith.constant 0 : index
    %49 = vector.load %arg5[%c217, %c0_49] : memref<342x4xf32, #tpu.memory_space<vmem>>, vector<16x4xf32>
    tpu.vector_store %arg5[%c217, %c0_49], %48 {strides = array<i32>} : memref<342x4xf32, #tpu.memory_space<vmem>>, vector<16x4xf32>,
    %c0_50 = arith.constant 0 : index
    %c12 = arith.constant 12 : index
    %c0_51 = arith.constant 0 : index
    %c0_52 = arith.constant 0 : index
    %50 = vector.load %arg1[%c0_50, %c12, %c0_51, %c0_52] : memref<1x16x16x4xbf16, #tpu.memory_space<vmem>>, vector<1x1x16x4xbf16>
    %51 = vector.shape_cast %50 : vector<1x1x16x4xbf16> to vector<16x4xbf16>
    %52 = arith.extf %51 : vector<16x4xbf16> to vector<16x4xf32>
    %c235 = arith.constant 235 : index
    %c0_53 = arith.constant 0 : index
    %53 = vector.load %arg5[%c235, %c0_53] : memref<342x4xf32, #tpu.memory_space<vmem>>, vector<16x4xf32>
    tpu.vector_store %arg5[%c235, %c0_53], %52 {strides = array<i32>} : memref<342x4xf32, #tpu.memory_space<vmem>>, vector<16x4xf32>,
    %c0_54 = arith.constant 0 : index
    %c13 = arith.constant 13 : index
    %c0_55 = arith.constant 0 : index
    %c0_56 = arith.constant 0 : index
    %54 = vector.load %arg1[%c0_54, %c13, %c0_55, %c0_56] : memref<1x16x16x4xbf16, #tpu.memory_space<vmem>>, vector<1x1x16x4xbf16>
    %55 = vector.shape_cast %54 : vector<1x1x16x4xbf16> to vector<16x4xbf16>
    %56 = arith.extf %55 : vector<16x4xbf16> to vector<16x4xf32>
    %c253 = arith.constant 253 : index
    %c0_57 = arith.constant 0 : index
    %57 = vector.load %arg5[%c253, %c0_57] : memref<342x4xf32, #tpu.memory_space<vmem>>, vector<16x4xf32>
    tpu.vector_store %arg5[%c253, %c0_57], %56 {strides = array<i32>} : memref<342x4xf32, #tpu.memory_space<vmem>>, vector<16x4xf32>,
    %c0_58 = arith.constant 0 : index
    %c14 = arith.constant 14 : index
    %c0_59 = arith.constant 0 : index
    %c0_60 = arith.constant 0 : index
    %58 = vector.load %arg1[%c0_58, %c14, %c0_59, %c0_60] : memref<1x16x16x4xbf16, #tpu.memory_space<vmem>>, vector<1x1x16x4xbf16>
    %59 = vector.shape_cast %58 : vector<1x1x16x4xbf16> to vector<16x4xbf16>
    %60 = arith.extf %59 : vector<16x4xbf16> to vector<16x4xf32>
    %c271 = arith.constant 271 : index
    %c0_61 = arith.constant 0 : index
    %61 = vector.load %arg5[%c271, %c0_61] : memref<342x4xf32, #tpu.memory_space<vmem>>, vector<16x4xf32>
    tpu.vector_store %arg5[%c271, %c0_61], %60 {strides = array<i32>} : memref<342x4xf32, #tpu.memory_space<vmem>>, vector<16x4xf32>,
    %c0_62 = arith.constant 0 : index
    %c15 = arith.constant 15 : index
    %c0_63 = arith.constant 0 : index
    %c0_64 = arith.constant 0 : index
    %62 = vector.load %arg1[%c0_62, %c15, %c0_63, %c0_64] : memref<1x16x16x4xbf16, #tpu.memory_space<vmem>>, vector<1x1x16x4xbf16>
    %63 = vector.shape_cast %62 : vector<1x1x16x4xbf16> to vector<16x4xbf16>
    %64 = arith.extf %63 : vector<16x4xbf16> to vector<16x4xf32>
    %c289 = arith.constant 289 : index
    %c0_65 = arith.constant 0 : index
    %65 = vector.load %arg5[%c289, %c0_65] : memref<342x4xf32, #tpu.memory_space<vmem>>, vector<16x4xf32>
    tpu.vector_store %arg5[%c289, %c0_65], %64 {strides = array<i32>} : memref<342x4xf32, #tpu.memory_space<vmem>>, vector<16x4xf32>,
    %c0_66 = arith.constant 0 : index
    %c0_67 = arith.constant 0 : index
    %66 = vector.load %arg5[%c0_66, %c0_67] : memref<342x4xf32, #tpu.memory_space<vmem>>, vector<288x4xf32>
    %67 = arith.truncf %66 : vector<288x4xf32> to vector<288x4xbf16>
    %c0_68 = arith.constant 0 : index
    %c0_69 = arith.constant 0 : index
    %c0_70 = arith.constant 0 : index
    %c0_71 = arith.constant 0 : index
    %68 = vector.load %arg2[%c0_68, %c0_69, %c0_70, %c0_71] : memref<3x3x4x8xbf16, #tpu.memory_space<vmem>>, vector<1x1x4x8xbf16>
    %69 = vector.shape_cast %68 : vector<1x1x4x8xbf16> to vector<4x8xbf16>
    %cst_72 = arith.constant dense<0.000000e+00> : vector<288x8xf32>
    %70 = tpu.matmul %67, %69, %cst_72 {dimension_numbers = #tpu.dot_dimension_numbers<[1], [0], [0], [1], [0, 0, 1, 1], [], []>} : vector<288x4xbf16>, vector<4x8xbf16>, vector<288x8xf32> -> vector<288x8xf32>
    %c0_73 = arith.constant 0 : index
    %c0_74 = arith.constant 0 : index
    %71 = vector.load %arg6[%c0_73, %c0_74] : memref<288x8xf32, #tpu.memory_space<vmem>>, vector<288x8xf32>
    tpu.vector_store %arg6[%c0_73, %c0_74], %70 {strides = array<i32>} : memref<288x8xf32, #tpu.memory_space<vmem>>, vector<288x8xf32>,
    %c1_75 = arith.constant 1 : index
    %c0_76 = arith.constant 0 : index
    %72 = vector.load %arg5[%c1_75, %c0_76] : memref<342x4xf32, #tpu.memory_space<vmem>>, vector<288x4xf32>
    %73 = arith.truncf %72 : vector<288x4xf32> to vector<288x4xbf16>
    %c0_77 = arith.constant 0 : index
    %c1_78 = arith.constant 1 : index
    %c0_79 = arith.constant 0 : index
    %c0_80 = arith.constant 0 : index
    %74 = vector.load %arg2[%c0_77, %c1_78, %c0_79, %c0_80] : memref<3x3x4x8xbf16, #tpu.memory_space<vmem>>, vector<1x1x4x8xbf16>
    %75 = vector.shape_cast %74 : vector<1x1x4x8xbf16> to vector<4x8xbf16>
    %cst_81 = arith.constant dense<0.000000e+00> : vector<288x8xf32>
    %76 = tpu.matmul %73, %75, %cst_81 {dimension_numbers = #tpu.dot_dimension_numbers<[1], [0], [0], [1], [0, 0, 1, 1], [], []>} : vector<288x4xbf16>, vector<4x8xbf16>, vector<288x8xf32> -> vector<288x8xf32>
    %c0_82 = arith.constant 0 : index
    %c0_83 = arith.constant 0 : index
    %77 = vector.load %arg6[%c0_82, %c0_83] : memref<288x8xf32, #tpu.memory_space<vmem>>, vector<288x8xf32>
    %78 = arith.addf %77, %76 : vector<288x8xf32>
    %c0_84 = arith.constant 0 : index
    %c0_85 = arith.constant 0 : index
    %79 = vector.load %arg6[%c0_84, %c0_85] : memref<288x8xf32, #tpu.memory_space<vmem>>, vector<288x8xf32>
    tpu.vector_store %arg6[%c0_84, %c0_85], %78 {strides = array<i32>} : memref<288x8xf32, #tpu.memory_space<vmem>>, vector<288x8xf32>,
    %c2_86 = arith.constant 2 : index
    %c0_87 = arith.constant 0 : index
    %80 = vector.load %arg5[%c2_86, %c0_87] : memref<342x4xf32, #tpu.memory_space<vmem>>, vector<288x4xf32>
    %81 = arith.truncf %80 : vector<288x4xf32> to vector<288x4xbf16>
    %c0_88 = arith.constant 0 : index
    %c2_89 = arith.constant 2 : index
    %c0_90 = arith.constant 0 : index
    %c0_91 = arith.constant 0 : index
    %82 = vector.load %arg2[%c0_88, %c2_89, %c0_90, %c0_91] : memref<3x3x4x8xbf16, #tpu.memory_space<vmem>>, vector<1x1x4x8xbf16>
    %83 = vector.shape_cast %82 : vector<1x1x4x8xbf16> to vector<4x8xbf16>
    %cst_92 = arith.constant dense<0.000000e+00> : vector<288x8xf32>
    %84 = tpu.matmul %81, %83, %cst_92 {dimension_numbers = #tpu.dot_dimension_numbers<[1], [0], [0], [1], [0, 0, 1, 1], [], []>} : vector<288x4xbf16>, vector<4x8xbf16>, vector<288x8xf32> -> vector<288x8xf32>
    %c0_93 = arith.constant 0 : index
    %c0_94 = arith.constant 0 : index
    %85 = vector.load %arg6[%c0_93, %c0_94] : memref<288x8xf32, #tpu.memory_space<vmem>>, vector<288x8xf32>
    %86 = arith.addf %85, %84 : vector<288x8xf32>
    %c0_95 = arith.constant 0 : index
    %c0_96 = arith.constant 0 : index
    %87 = vector.load %arg6[%c0_95, %c0_96] : memref<288x8xf32, #tpu.memory_space<vmem>>, vector<288x8xf32>
    tpu.vector_store %arg6[%c0_95, %c0_96], %86 {strides = array<i32>} : memref<288x8xf32, #tpu.memory_space<vmem>>, vector<288x8xf32>,
    %c18 = arith.constant 18 : index
    %c0_97 = arith.constant 0 : index
    %88 = vector.load %arg5[%c18, %c0_97] : memref<342x4xf32, #tpu.memory_space<vmem>>, vector<288x4xf32>
    %89 = arith.truncf %88 : vector<288x4xf32> to vector<288x4xbf16>
    %c1_98 = arith.constant 1 : index
    %c0_99 = arith.constant 0 : index
    %c0_100 = arith.constant 0 : index
    %c0_101 = arith.constant 0 : index
    %90 = vector.load %arg2[%c1_98, %c0_99, %c0_100, %c0_101] : memref<3x3x4x8xbf16, #tpu.memory_space<vmem>>, vector<1x1x4x8xbf16>
    %91 = vector.shape_cast %90 : vector<1x1x4x8xbf16> to vector<4x8xbf16>
    %cst_102 = arith.constant dense<0.000000e+00> : vector<288x8xf32>
    %92 = tpu.matmul %89, %91, %cst_102 {dimension_numbers = #tpu.dot_dimension_numbers<[1], [0], [0], [1], [0, 0, 1, 1], [], []>} : vector<288x4xbf16>, vector<4x8xbf16>, vector<288x8xf32> -> vector<288x8xf32>
    %c0_103 = arith.constant 0 : index
    %c0_104 = arith.constant 0 : index
    %93 = vector.load %arg6[%c0_103, %c0_104] : memref<288x8xf32, #tpu.memory_space<vmem>>, vector<288x8xf32>
    %94 = arith.addf %93, %92 : vector<288x8xf32>
    %c0_105 = arith.constant 0 : index
    %c0_106 = arith.constant 0 : index
    %95 = vector.load %arg6[%c0_105, %c0_106] : memref<288x8xf32, #tpu.memory_space<vmem>>, vector<288x8xf32>
    tpu.vector_store %arg6[%c0_105, %c0_106], %94 {strides = array<i32>} : memref<288x8xf32, #tpu.memory_space<vmem>>, vector<288x8xf32>,
    %c19_107 = arith.constant 19 : index
    %c0_108 = arith.constant 0 : index
    %96 = vector.load %arg5[%c19_107, %c0_108] : memref<342x4xf32, #tpu.memory_space<vmem>>, vector<288x4xf32>
    %97 = arith.truncf %96 : vector<288x4xf32> to vector<288x4xbf16>
    %c1_109 = arith.constant 1 : index
    %c1_110 = arith.constant 1 : index
    %c0_111 = arith.constant 0 : index
    %c0_112 = arith.constant 0 : index
    %98 = vector.load %arg2[%c1_109, %c1_110, %c0_111, %c0_112] : memref<3x3x4x8xbf16, #tpu.memory_space<vmem>>, vector<1x1x4x8xbf16>
    %99 = vector.shape_cast %98 : vector<1x1x4x8xbf16> to vector<4x8xbf16>
    %cst_113 = arith.constant dense<0.000000e+00> : vector<288x8xf32>
    %100 = tpu.matmul %97, %99, %cst_113 {dimension_numbers = #tpu.dot_dimension_numbers<[1], [0], [0], [1], [0, 0, 1, 1], [], []>} : vector<288x4xbf16>, vector<4x8xbf16>, vector<288x8xf32> -> vector<288x8xf32>
    %c0_114 = arith.constant 0 : index
    %c0_115 = arith.constant 0 : index
    %101 = vector.load %arg6[%c0_114, %c0_115] : memref<288x8xf32, #tpu.memory_space<vmem>>, vector<288x8xf32>
    %102 = arith.addf %101, %100 : vector<288x8xf32>
    %c0_116 = arith.constant 0 : index
    %c0_117 = arith.constant 0 : index
    %103 = vector.load %arg6[%c0_116, %c0_117] : memref<288x8xf32, #tpu.memory_space<vmem>>, vector<288x8xf32>
    tpu.vector_store %arg6[%c0_116, %c0_117], %102 {strides = array<i32>} : memref<288x8xf32, #tpu.memory_space<vmem>>, vector<288x8xf32>,
    %c20 = arith.constant 20 : index
    %c0_118 = arith.constant 0 : index
    %104 = vector.load %arg5[%c20, %c0_118] : memref<342x4xf32, #tpu.memory_space<vmem>>, vector<288x4xf32>
    %105 = arith.truncf %104 : vector<288x4xf32> to vector<288x4xbf16>
    %c1_119 = arith.constant 1 : index
    %c2_120 = arith.constant 2 : index
    %c0_121 = arith.constant 0 : index
    %c0_122 = arith.constant 0 : index
    %106 = vector.load %arg2[%c1_119, %c2_120, %c0_121, %c0_122] : memref<3x3x4x8xbf16, #tpu.memory_space<vmem>>, vector<1x1x4x8xbf16>
    %107 = vector.shape_cast %106 : vector<1x1x4x8xbf16> to vector<4x8xbf16>
    %cst_123 = arith.constant dense<0.000000e+00> : vector<288x8xf32>
    %108 = tpu.matmul %105, %107, %cst_123 {dimension_numbers = #tpu.dot_dimension_numbers<[1], [0], [0], [1], [0, 0, 1, 1], [], []>} : vector<288x4xbf16>, vector<4x8xbf16>, vector<288x8xf32> -> vector<288x8xf32>
    %c0_124 = arith.constant 0 : index
    %c0_125 = arith.constant 0 : index
    %109 = vector.load %arg6[%c0_124, %c0_125] : memref<288x8xf32, #tpu.memory_space<vmem>>, vector<288x8xf32>
    %110 = arith.addf %109, %108 : vector<288x8xf32>
    %c0_126 = arith.constant 0 : index
    %c0_127 = arith.constant 0 : index
    %111 = vector.load %arg6[%c0_126, %c0_127] : memref<288x8xf32, #tpu.memory_space<vmem>>, vector<288x8xf32>
    tpu.vector_store %arg6[%c0_126, %c0_127], %110 {strides = array<i32>} : memref<288x8xf32, #tpu.memory_space<vmem>>, vector<288x8xf32>,
    %c36 = arith.constant 36 : index
    %c0_128 = arith.constant 0 : index
    %112 = vector.load %arg5[%c36, %c0_128] : memref<342x4xf32, #tpu.memory_space<vmem>>, vector<288x4xf32>
    %113 = arith.truncf %112 : vector<288x4xf32> to vector<288x4xbf16>
    %c2_129 = arith.constant 2 : index
    %c0_130 = arith.constant 0 : index
    %c0_131 = arith.constant 0 : index
    %c0_132 = arith.constant 0 : index
    %114 = vector.load %arg2[%c2_129, %c0_130, %c0_131, %c0_132] : memref<3x3x4x8xbf16, #tpu.memory_space<vmem>>, vector<1x1x4x8xbf16>
    %115 = vector.shape_cast %114 : vector<1x1x4x8xbf16> to vector<4x8xbf16>
    %cst_133 = arith.constant dense<0.000000e+00> : vector<288x8xf32>
    %116 = tpu.matmul %113, %115, %cst_133 {dimension_numbers = #tpu.dot_dimension_numbers<[1], [0], [0], [1], [0, 0, 1, 1], [], []>} : vector<288x4xbf16>, vector<4x8xbf16>, vector<288x8xf32> -> vector<288x8xf32>
    %c0_134 = arith.constant 0 : index
    %c0_135 = arith.constant 0 : index
    %117 = vector.load %arg6[%c0_134, %c0_135] : memref<288x8xf32, #tpu.memory_space<vmem>>, vector<288x8xf32>
    %118 = arith.addf %117, %116 : vector<288x8xf32>
    %c0_136 = arith.constant 0 : index
    %c0_137 = arith.constant 0 : index
    %119 = vector.load %arg6[%c0_136, %c0_137] : memref<288x8xf32, #tpu.memory_space<vmem>>, vector<288x8xf32>
    tpu.vector_store %arg6[%c0_136, %c0_137], %118 {strides = array<i32>} : memref<288x8xf32, #tpu.memory_space<vmem>>, vector<288x8xf32>,
    %c37_138 = arith.constant 37 : index
    %c0_139 = arith.constant 0 : index
    %120 = vector.load %arg5[%c37_138, %c0_139] : memref<342x4xf32, #tpu.memory_space<vmem>>, vector<288x4xf32>
    %121 = arith.truncf %120 : vector<288x4xf32> to vector<288x4xbf16>
    %c2_140 = arith.constant 2 : index
    %c1_141 = arith.constant 1 : index
    %c0_142 = arith.constant 0 : index
    %c0_143 = arith.constant 0 : index
    %122 = vector.load %arg2[%c2_140, %c1_141, %c0_142, %c0_143] : memref<3x3x4x8xbf16, #tpu.memory_space<vmem>>, vector<1x1x4x8xbf16>
    %123 = vector.shape_cast %122 : vector<1x1x4x8xbf16> to vector<4x8xbf16>
    %cst_144 = arith.constant dense<0.000000e+00> : vector<288x8xf32>
    %124 = tpu.matmul %121, %123, %cst_144 {dimension_numbers = #tpu.dot_dimension_numbers<[1], [0], [0], [1], [0, 0, 1, 1], [], []>} : vector<288x4xbf16>, vector<4x8xbf16>, vector<288x8xf32> -> vector<288x8xf32>
    %c0_145 = arith.constant 0 : index
    %c0_146 = arith.constant 0 : index
    %125 = vector.load %arg6[%c0_145, %c0_146] : memref<288x8xf32, #tpu.memory_space<vmem>>, vector<288x8xf32>
    %126 = arith.addf %125, %124 : vector<288x8xf32>
    %c0_147 = arith.constant 0 : index
    %c0_148 = arith.constant 0 : index
    %127 = vector.load %arg6[%c0_147, %c0_148] : memref<288x8xf32, #tpu.memory_space<vmem>>, vector<288x8xf32>
    tpu.vector_store %arg6[%c0_147, %c0_148], %126 {strides = array<i32>} : memref<288x8xf32, #tpu.memory_space<vmem>>, vector<288x8xf32>,
    %c38 = arith.constant 38 : index
    %c0_149 = arith.constant 0 : index
    %128 = vector.load %arg5[%c38, %c0_149] : memref<342x4xf32, #tpu.memory_space<vmem>>, vector<288x4xf32>
    %129 = arith.truncf %128 : vector<288x4xf32> to vector<288x4xbf16>
    %c2_150 = arith.constant 2 : index
    %c2_151 = arith.constant 2 : index
    %c0_152 = arith.constant 0 : index
    %c0_153 = arith.constant 0 : index
    %130 = vector.load %arg2[%c2_150, %c2_151, %c0_152, %c0_153] : memref<3x3x4x8xbf16, #tpu.memory_space<vmem>>, vector<1x1x4x8xbf16>
    %131 = vector.shape_cast %130 : vector<1x1x4x8xbf16> to vector<4x8xbf16>
    %cst_154 = arith.constant dense<0.000000e+00> : vector<288x8xf32>
    %132 = tpu.matmul %129, %131, %cst_154 {dimension_numbers = #tpu.dot_dimension_numbers<[1], [0], [0], [1], [0, 0, 1, 1], [], []>} : vector<288x4xbf16>, vector<4x8xbf16>, vector<288x8xf32> -> vector<288x8xf32>
    %c0_155 = arith.constant 0 : index
    %c0_156 = arith.constant 0 : index
    %133 = vector.load %arg6[%c0_155, %c0_156] : memref<288x8xf32, #tpu.memory_space<vmem>>, vector<288x8xf32>
    %134 = arith.addf %133, %132 : vector<288x8xf32>
    %c0_157 = arith.constant 0 : index
    %c0_158 = arith.constant 0 : index
    %135 = vector.load %arg6[%c0_157, %c0_158] : memref<288x8xf32, #tpu.memory_space<vmem>>, vector<288x8xf32>
    tpu.vector_store %arg6[%c0_157, %c0_158], %134 {strides = array<i32>} : memref<288x8xf32, #tpu.memory_space<vmem>>, vector<288x8xf32>,
    %c0_159 = arith.constant 0 : index
    %c0_160 = arith.constant 0 : index
    %136 = vector.load %arg6[%c0_159, %c0_160] : memref<288x8xf32, #tpu.memory_space<vmem>>, vector<288x8xf32>
    %c0_161 = arith.constant 0 : index
    %c0_162 = arith.constant 0 : index
    %137 = vector.load %arg3[%c0_161, %c0_162] : memref<1x8xf32, #tpu.memory_space<vmem>>, vector<1x8xf32>
    %138 = vector.broadcast %137 : vector<1x8xf32> to vector<288x8xf32>
    %139 = arith.addf %136, %138 : vector<288x8xf32>
    %cst_163 = arith.constant 0.000000e+00 : f32
    %140 = vector.broadcast %cst_163 : f32 to vector<288x8xf32>
    %141 = arith.maximumf %139, %140 : vector<288x8xf32>
    %142 = vector.extract_strided_slice %141 {offsets = [0, 0], sizes = [16, 8], strides = [1, 1]} : vector<288x8xf32> to vector<16x8xf32>
    %c0_164 = arith.constant 0 : index
    %c0_165 = arith.constant 0 : index
    %c0_166 = arith.constant 0 : index
    %c0_167 = arith.constant 0 : index
    %143 = vector.load %arg4[%c0_164, %c0_165, %c0_166, %c0_167] : memref<1x16x16x8xf32, #tpu.memory_space<vmem>>, vector<1x1x16x8xf32>
    %144 = vector.shape_cast %143 : vector<1x1x16x8xf32> to vector<16x8xf32>
    %145 = vector.shape_cast %142 : vector<16x8xf32> to vector<1x1x16x8xf32>
    tpu.vector_store %arg4[%c0_164, %c0_165, %c0_166, %c0_167], %145 {strides = array<i32>} : memref<1x16x16x8xf32, #tpu.memory_space<vmem>>, vector<1x1x16x8xf32>,
    %146 = vector.extract_strided_slice %141 {offsets = [18, 0], sizes = [16, 8], strides = [1, 1]} : vector<288x8xf32> to vector<16x8xf32>
    %c0_168 = arith.constant 0 : index
    %c1_169 = arith.constant 1 : index
    %c0_170 = arith.constant 0 : index
    %c0_171 = arith.constant 0 : index
    %147 = vector.load %arg4[%c0_168, %c1_169, %c0_170, %c0_171] : memref<1x16x16x8xf32, #tpu.memory_space<vmem>>, vector<1x1x16x8xf32>
    %148 = vector.shape_cast %147 : vector<1x1x16x8xf32> to vector<16x8xf32>
    %149 = vector.shape_cast %146 : vector<16x8xf32> to vector<1x1x16x8xf32>
    tpu.vector_store %arg4[%c0_168, %c1_169, %c0_170, %c0_171], %149 {strides = array<i32>} : memref<1x16x16x8xf32, #tpu.memory_space<vmem>>, vector<1x1x16x8xf32>,
    %150 = vector.extract_strided_slice %141 {offsets = [36, 0], sizes = [16, 8], strides = [1, 1]} : vector<288x8xf32> to vector<16x8xf32>
    %c0_172 = arith.constant 0 : index
    %c2_173 = arith.constant 2 : index
    %c0_174 = arith.constant 0 : index
    %c0_175 = arith.constant 0 : index
    %151 = vector.load %arg4[%c0_172, %c2_173, %c0_174, %c0_175] : memref<1x16x16x8xf32, #tpu.memory_space<vmem>>, vector<1x1x16x8xf32>
    %152 = vector.shape_cast %151 : vector<1x1x16x8xf32> to vector<16x8xf32>
    %153 = vector.shape_cast %150 : vector<16x8xf32> to vector<1x1x16x8xf32>
    tpu.vector_store %arg4[%c0_172, %c2_173, %c0_174, %c0_175], %153 {strides = array<i32>} : memref<1x16x16x8xf32, #tpu.memory_space<vmem>>, vector<1x1x16x8xf32>,
    %154 = vector.extract_strided_slice %141 {offsets = [54, 0], sizes = [16, 8], strides = [1, 1]} : vector<288x8xf32> to vector<16x8xf32>
    %c0_176 = arith.constant 0 : index
    %c3_177 = arith.constant 3 : index
    %c0_178 = arith.constant 0 : index
    %c0_179 = arith.constant 0 : index
    %155 = vector.load %arg4[%c0_176, %c3_177, %c0_178, %c0_179] : memref<1x16x16x8xf32, #tpu.memory_space<vmem>>, vector<1x1x16x8xf32>
    %156 = vector.shape_cast %155 : vector<1x1x16x8xf32> to vector<16x8xf32>
    %157 = vector.shape_cast %154 : vector<16x8xf32> to vector<1x1x16x8xf32>
    tpu.vector_store %arg4[%c0_176, %c3_177, %c0_178, %c0_179], %157 {strides = array<i32>} : memref<1x16x16x8xf32, #tpu.memory_space<vmem>>, vector<1x1x16x8xf32>,
    %158 = vector.extract_strided_slice %141 {offsets = [72, 0], sizes = [16, 8], strides = [1, 1]} : vector<288x8xf32> to vector<16x8xf32>
    %c0_180 = arith.constant 0 : index
    %c4_181 = arith.constant 4 : index
    %c0_182 = arith.constant 0 : index
    %c0_183 = arith.constant 0 : index
    %159 = vector.load %arg4[%c0_180, %c4_181, %c0_182, %c0_183] : memref<1x16x16x8xf32, #tpu.memory_space<vmem>>, vector<1x1x16x8xf32>
    %160 = vector.shape_cast %159 : vector<1x1x16x8xf32> to vector<16x8xf32>
    %161 = vector.shape_cast %158 : vector<16x8xf32> to vector<1x1x16x8xf32>
    tpu.vector_store %arg4[%c0_180, %c4_181, %c0_182, %c0_183], %161 {strides = array<i32>} : memref<1x16x16x8xf32, #tpu.memory_space<vmem>>, vector<1x1x16x8xf32>,
    %162 = vector.extract_strided_slice %141 {offsets = [90, 0], sizes = [16, 8], strides = [1, 1]} : vector<288x8xf32> to vector<16x8xf32>
    %c0_184 = arith.constant 0 : index
    %c5_185 = arith.constant 5 : index
    %c0_186 = arith.constant 0 : index
    %c0_187 = arith.constant 0 : index
    %163 = vector.load %arg4[%c0_184, %c5_185, %c0_186, %c0_187] : memref<1x16x16x8xf32, #tpu.memory_space<vmem>>, vector<1x1x16x8xf32>
    %164 = vector.shape_cast %163 : vector<1x1x16x8xf32> to vector<16x8xf32>
    %165 = vector.shape_cast %162 : vector<16x8xf32> to vector<1x1x16x8xf32>
    tpu.vector_store %arg4[%c0_184, %c5_185, %c0_186, %c0_187], %165 {strides = array<i32>} : memref<1x16x16x8xf32, #tpu.memory_space<vmem>>, vector<1x1x16x8xf32>,
    %166 = vector.extract_strided_slice %141 {offsets = [108, 0], sizes = [16, 8], strides = [1, 1]} : vector<288x8xf32> to vector<16x8xf32>
    %c0_188 = arith.constant 0 : index
    %c6_189 = arith.constant 6 : index
    %c0_190 = arith.constant 0 : index
    %c0_191 = arith.constant 0 : index
    %167 = vector.load %arg4[%c0_188, %c6_189, %c0_190, %c0_191] : memref<1x16x16x8xf32, #tpu.memory_space<vmem>>, vector<1x1x16x8xf32>
    %168 = vector.shape_cast %167 : vector<1x1x16x8xf32> to vector<16x8xf32>
    %169 = vector.shape_cast %166 : vector<16x8xf32> to vector<1x1x16x8xf32>
    tpu.vector_store %arg4[%c0_188, %c6_189, %c0_190, %c0_191], %169 {strides = array<i32>} : memref<1x16x16x8xf32, #tpu.memory_space<vmem>>, vector<1x1x16x8xf32>,
    %170 = vector.extract_strided_slice %141 {offsets = [126, 0], sizes = [16, 8], strides = [1, 1]} : vector<288x8xf32> to vector<16x8xf32>
    %c0_192 = arith.constant 0 : index
    %c7_193 = arith.constant 7 : index
    %c0_194 = arith.constant 0 : index
    %c0_195 = arith.constant 0 : index
    %171 = vector.load %arg4[%c0_192, %c7_193, %c0_194, %c0_195] : memref<1x16x16x8xf32, #tpu.memory_space<vmem>>, vector<1x1x16x8xf32>
    %172 = vector.shape_cast %171 : vector<1x1x16x8xf32> to vector<16x8xf32>
    %173 = vector.shape_cast %170 : vector<16x8xf32> to vector<1x1x16x8xf32>
    tpu.vector_store %arg4[%c0_192, %c7_193, %c0_194, %c0_195], %173 {strides = array<i32>} : memref<1x16x16x8xf32, #tpu.memory_space<vmem>>, vector<1x1x16x8xf32>,
    %174 = vector.extract_strided_slice %141 {offsets = [144, 0], sizes = [16, 8], strides = [1, 1]} : vector<288x8xf32> to vector<16x8xf32>
    %c0_196 = arith.constant 0 : index
    %c8_197 = arith.constant 8 : index
    %c0_198 = arith.constant 0 : index
    %c0_199 = arith.constant 0 : index
    %175 = vector.load %arg4[%c0_196, %c8_197, %c0_198, %c0_199] : memref<1x16x16x8xf32, #tpu.memory_space<vmem>>, vector<1x1x16x8xf32>
    %176 = vector.shape_cast %175 : vector<1x1x16x8xf32> to vector<16x8xf32>
    %177 = vector.shape_cast %174 : vector<16x8xf32> to vector<1x1x16x8xf32>
    tpu.vector_store %arg4[%c0_196, %c8_197, %c0_198, %c0_199], %177 {strides = array<i32>} : memref<1x16x16x8xf32, #tpu.memory_space<vmem>>, vector<1x1x16x8xf32>,
    %178 = vector.extract_strided_slice %141 {offsets = [162, 0], sizes = [16, 8], strides = [1, 1]} : vector<288x8xf32> to vector<16x8xf32>
    %c0_200 = arith.constant 0 : index
    %c9_201 = arith.constant 9 : index
    %c0_202 = arith.constant 0 : index
    %c0_203 = arith.constant 0 : index
    %179 = vector.load %arg4[%c0_200, %c9_201, %c0_202, %c0_203] : memref<1x16x16x8xf32, #tpu.memory_space<vmem>>, vector<1x1x16x8xf32>
    %180 = vector.shape_cast %179 : vector<1x1x16x8xf32> to vector<16x8xf32>
    %181 = vector.shape_cast %178 : vector<16x8xf32> to vector<1x1x16x8xf32>
    tpu.vector_store %arg4[%c0_200, %c9_201, %c0_202, %c0_203], %181 {strides = array<i32>} : memref<1x16x16x8xf32, #tpu.memory_space<vmem>>, vector<1x1x16x8xf32>,
    %182 = vector.extract_strided_slice %141 {offsets = [180, 0], sizes = [16, 8], strides = [1, 1]} : vector<288x8xf32> to vector<16x8xf32>
    %c0_204 = arith.constant 0 : index
    %c10_205 = arith.constant 10 : index
    %c0_206 = arith.constant 0 : index
    %c0_207 = arith.constant 0 : index
    %183 = vector.load %arg4[%c0_204, %c10_205, %c0_206, %c0_207] : memref<1x16x16x8xf32, #tpu.memory_space<vmem>>, vector<1x1x16x8xf32>
    %184 = vector.shape_cast %183 : vector<1x1x16x8xf32> to vector<16x8xf32>
    %185 = vector.shape_cast %182 : vector<16x8xf32> to vector<1x1x16x8xf32>
    tpu.vector_store %arg4[%c0_204, %c10_205, %c0_206, %c0_207], %185 {strides = array<i32>} : memref<1x16x16x8xf32, #tpu.memory_space<vmem>>, vector<1x1x16x8xf32>,
    %186 = vector.extract_strided_slice %141 {offsets = [198, 0], sizes = [16, 8], strides = [1, 1]} : vector<288x8xf32> to vector<16x8xf32>
    %c0_208 = arith.constant 0 : index
    %c11_209 = arith.constant 11 : index
    %c0_210 = arith.constant 0 : index
    %c0_211 = arith.constant 0 : index
    %187 = vector.load %arg4[%c0_208, %c11_209, %c0_210, %c0_211] : memref<1x16x16x8xf32, #tpu.memory_space<vmem>>, vector<1x1x16x8xf32>
    %188 = vector.shape_cast %187 : vector<1x1x16x8xf32> to vector<16x8xf32>
    %189 = vector.shape_cast %186 : vector<16x8xf32> to vector<1x1x16x8xf32>
    tpu.vector_store %arg4[%c0_208, %c11_209, %c0_210, %c0_211], %189 {strides = array<i32>} : memref<1x16x16x8xf32, #tpu.memory_space<vmem>>, vector<1x1x16x8xf32>,
    %190 = vector.extract_strided_slice %141 {offsets = [216, 0], sizes = [16, 8], strides = [1, 1]} : vector<288x8xf32> to vector<16x8xf32>
    %c0_212 = arith.constant 0 : index
    %c12_213 = arith.constant 12 : index
    %c0_214 = arith.constant 0 : index
    %c0_215 = arith.constant 0 : index
    %191 = vector.load %arg4[%c0_212, %c12_213, %c0_214, %c0_215] : memref<1x16x16x8xf32, #tpu.memory_space<vmem>>, vector<1x1x16x8xf32>
    %192 = vector.shape_cast %191 : vector<1x1x16x8xf32> to vector<16x8xf32>
    %193 = vector.shape_cast %190 : vector<16x8xf32> to vector<1x1x16x8xf32>
    tpu.vector_store %arg4[%c0_212, %c12_213, %c0_214, %c0_215], %193 {strides = array<i32>} : memref<1x16x16x8xf32, #tpu.memory_space<vmem>>, vector<1x1x16x8xf32>,
    %194 = vector.extract_strided_slice %141 {offsets = [234, 0], sizes = [16, 8], strides = [1, 1]} : vector<288x8xf32> to vector<16x8xf32>
    %c0_216 = arith.constant 0 : index
    %c13_217 = arith.constant 13 : index
    %c0_218 = arith.constant 0 : index
    %c0_219 = arith.constant 0 : index
    %195 = vector.load %arg4[%c0_216, %c13_217, %c0_218, %c0_219] : memref<1x16x16x8xf32, #tpu.memory_space<vmem>>, vector<1x1x16x8xf32>
    %196 = vector.shape_cast %195 : vector<1x1x16x8xf32> to vector<16x8xf32>
    %197 = vector.shape_cast %194 : vector<16x8xf32> to vector<1x1x16x8xf32>
    tpu.vector_store %arg4[%c0_216, %c13_217, %c0_218, %c0_219], %197 {strides = array<i32>} : memref<1x16x16x8xf32, #tpu.memory_space<vmem>>, vector<1x1x16x8xf32>,
    %198 = vector.extract_strided_slice %141 {offsets = [252, 0], sizes = [16, 8], strides = [1, 1]} : vector<288x8xf32> to vector<16x8xf32>
    %c0_220 = arith.constant 0 : index
    %c14_221 = arith.constant 14 : index
    %c0_222 = arith.constant 0 : index
    %c0_223 = arith.constant 0 : index
    %199 = vector.load %arg4[%c0_220, %c14_221, %c0_222, %c0_223] : memref<1x16x16x8xf32, #tpu.memory_space<vmem>>, vector<1x1x16x8xf32>
    %200 = vector.shape_cast %199 : vector<1x1x16x8xf32> to vector<16x8xf32>
    %201 = vector.shape_cast %198 : vector<16x8xf32> to vector<1x1x16x8xf32>
    tpu.vector_store %arg4[%c0_220, %c14_221, %c0_222, %c0_223], %201 {strides = array<i32>} : memref<1x16x16x8xf32, #tpu.memory_space<vmem>>, vector<1x1x16x8xf32>,
    %202 = vector.extract_strided_slice %141 {offsets = [270, 0], sizes = [16, 8], strides = [1, 1]} : vector<288x8xf32> to vector<16x8xf32>
    %c0_224 = arith.constant 0 : index
    %c15_225 = arith.constant 15 : index
    %c0_226 = arith.constant 0 : index
    %c0_227 = arith.constant 0 : index
    %203 = vector.load %arg4[%c0_224, %c15_225, %c0_226, %c0_227] : memref<1x16x16x8xf32, #tpu.memory_space<vmem>>, vector<1x1x16x8xf32>
    %204 = vector.shape_cast %203 : vector<1x1x16x8xf32> to vector<16x8xf32>
    %205 = vector.shape_cast %202 : vector<16x8xf32> to vector<1x1x16x8xf32>
    tpu.vector_store %arg4[%c0_224, %c15_225, %c0_226, %c0_227], %205 {strides = array<i32>} : memref<1x16x16x8xf32, #tpu.memory_space<vmem>>, vector<1x1x16x8xf32>,
    return
  }
  func.func @transform_0(%arg0: i32) -> (i32, i32, i32, i32) {
    %c0_i32 = arith.constant 0 : i32
    %c0_i32_0 = arith.constant 0 : i32
    %c0_i32_1 = arith.constant 0 : i32
    %c0_i32_2 = arith.constant 0 : i32
    return %arg0, %c0_i32, %c0_i32_0, %c0_i32_1 : i32, i32, i32, i32
  }
  func.func @transform_1(%arg0: i32) -> (i32, i32, i32, i32) {
    %c0_i32 = arith.constant 0 : i32
    %c0_i32_0 = arith.constant 0 : i32
    %c0_i32_1 = arith.constant 0 : i32
    %c0_i32_2 = arith.constant 0 : i32
    %c0_i32_3 = arith.constant 0 : i32
    return %c0_i32, %c0_i32_0, %c0_i32_1, %c0_i32_2 : i32, i32, i32, i32
  }
  func.func @transform_2(%arg0: i32) -> (i32, i32) {
    %c0_i32 = arith.constant 0 : i32
    %c0_i32_0 = arith.constant 0 : i32
    %c0_i32_1 = arith.constant 0 : i32
    return %c0_i32, %c0_i32_0 : i32, i32
  }
  func.func @transform_3(%arg0: i32) -> (i32, i32, i32, i32) {
    %c0_i32 = arith.constant 0 : i32
    %c0_i32_0 = arith.constant 0 : i32
    %c0_i32_1 = arith.constant 0 : i32
    %c0_i32_2 = arith.constant 0 : i32
    return %arg0, %c0_i32, %c0_i32_0, %c0_i32_1 : i32, i32, i32, i32
  }
}

</mosaic_0001>

<llo_original>
// kernel: block_forward.1
$region0: #{block_forward.1}
  #allocation0 [shape = 'u32[]', space=smem, size = 0x4, offset = 0x4, fixed_abs, tag = 'smem constant byte address 0x4 - core index']
  #allocation1 [shape = 'u32[144,128]{1,0:T(1,128)}', space=vmem, size = 0x12000, scoped, tag = 'internal scratch']
  #allocation2 [shape = 'f32[342,4]{1,0:T(8,128)}', space=vmem, size = 0x2b000, scoped, tag = 'scratch operand']
  #allocation3 [shape = 'f32[288,8]{1,0:T(8,128)}', space=vmem, size = 0x24000, scoped, tag = 'scratch operand']
  %s0 = inlined_call_operand.vmem [shape: bf16[2,16,16,4], index: 0, kind: input, shape index: {}]
  %s1 = inlined_call_operand.vmem [shape: bf16[3,3,4,8], index: 1, kind: input, shape index: {}]
  %s2 = inlined_call_operand.vmem [shape: f32[1,8], index: 2, kind: input, shape index: {}]
  %s3 = inlined_call_operand.vmem [shape: f32[2,16,16,8], index: 3, kind: output, shape index: {}]
  %s4 = sld [smem:[#allocation0]]
  $region45: #{block_forward.1} parent=0
    _
  %s6 = ssub.s32 1, %s4
  %s7 = scalar_select 0, %s6, %s4
  loop: start=0, step=1, limit=4
  $region2: #{block_forward.1} parent=0 // loop_pre_header
    _
  $region3: #{block_forward.1} parent=0 // loop_header
    %s9 = sphi 0, %s13
    %p10 = scmp.ge.s32.totalorder %s9, 4
    %s19 = sphi 0, %s21
    %s22 = sphi 0, %s19
    %s23 = sphi 0, %s22
    %s39 = sphi 0, %s23
    %s43 = sphi 0, %s43
    %s45 = sphi 0, %s43
    %s46 = sphi 0, %s45
    %s60 = sphi 0, %s46
    %s64 = sphi 0, %s64
    %s66 = sphi 0, %s64
    %s67 = sphi 0, %s66
    %s81 = sphi 0, %s67
    %s87 = sphi 0, %s89
    %s90 = sphi 0, %s87
    %s91 = sphi 0, %s90
    %s107 = sphi 0, %s91
  $region4: #{block_forward.1} parent=0 // loop_header_branch
    %12 = sbr.rel (%p10) target = $region8
  $region5: #{block_forward.1} parent=0 // loop_body
    %s14 = ssub.s32 %s9, 1
    %s15 = ssub.s32 %s9, 2
    %s16 = sadd.s32 %s9, 1
    %s17 = ssub.s32 %s9, %s16
    %p18 = scmp.eq.s32.totalorder %s17, 0
    %s20 = sadd.s32 %s19, 1
    %s21 = scalar_select %p18, %s19, %s20
    %p24 = pneg %p18
    %p25 = scmp.eq.s32.totalorder %s9, 1
    %p26 = por %p24, %p25
    %p27 = scmp.ne.s32.totalorder %s19, %s22
    %p28 = scmp.eq.s32.totalorder %s9, 0
    %p29 = por %p27, %p28
    %p30 = scmp.ne.s32.totalorder %s19, %s22
    %p31 = scmp.eq.s32.totalorder %s14, 1
    %p32 = por %p30, %p31
    %p33 = scmp.ne.s32.totalorder %s22, %s23
    %p34 = scmp.eq.s32.totalorder %s14, 0
    %p35 = por %p33, %p34
    %p36 = scmp.ne.s32.totalorder %s22, %s23
    %p37 = scmp.eq.s32.totalorder %s15, 1
    %p38 = por %p36, %p37
    %p40 = scmp.ne.s32.totalorder %s23, %s39
    %p41 = scmp.eq.s32.totalorder %s15, 0
    %p42 = por %p40, %p41
    %s44 = sadd.s32 %s43, 1
    %p47 = scmp.eq.s32.totalorder %s9, 1
    %p48 = scmp.ne.s32.totalorder %s43, %s45
    %p49 = scmp.eq.s32.totalorder %s9, 0
    %p50 = por %p48, %p49
    %p51 = scmp.ne.s32.totalorder %s43, %s45
    %p52 = scmp.eq.s32.totalorder %s14, 1
    %p53 = por %p51, %p52
    %p54 = scmp.ne.s32.totalorder %s45, %s46
    %p55 = scmp.eq.s32.totalorder %s14, 0
    %p56 = por %p54, %p55
    %p57 = scmp.ne.s32.totalorder %s45, %s46
    %p58 = scmp.eq.s32.totalorder %s15, 1
    %p59 = por %p57, %p58
    %p61 = scmp.ne.s32.totalorder %s46, %s60
    %p62 = scmp.eq.s32.totalorder %s15, 0
    %p63 = por %p61, %p62
    %s65 = sadd.s32 %s64, 1
    %p68 = scmp.eq.s32.totalorder %s9, 1
    %p69 = scmp.ne.s32.totalorder %s64, %s66
    %p70 = scmp.eq.s32.totalorder %s9, 0
    %p71 = por %p69, %p70
    %p72 = scmp.ne.s32.totalorder %s64, %s66
    %p73 = scmp.eq.s32.totalorder %s14, 1
    %p74 = por %p72, %p73
    %p75 = scmp.ne.s32.totalorder %s66, %s67
    %p76 = scmp.eq.s32.totalorder %s14, 0
    %p77 = por %p75, %p76
    %p78 = scmp.ne.s32.totalorder %s66, %s67
    %p79 = scmp.eq.s32.totalorder %s15, 1
    %p80 = por %p78, %p79
    %p82 = scmp.ne.s32.totalorder %s67, %s81
    %p83 = scmp.eq.s32.totalorder %s15, 0
    %p84 = por %p82, %p83
    %s85 = ssub.s32 %s9, %s16
    %p86 = scmp.eq.s32.totalorder %s85, 0
    %s88 = sadd.s32 %s87, 1
    %s89 = scalar_select %p86, %s87, %s88
    %p92 = pneg %p86
    %p93 = scmp.eq.s32.totalorder %s9, 1
    %p94 = por %p92, %p93
    %p95 = scmp.ne.s32.totalorder %s87, %s90
    %p96 = scmp.eq.s32.totalorder %s9, 0
    %p97 = por %p95, %p96
    %p98 = scmp.ne.s32.totalorder %s87, %s90
    %p99 = scmp.eq.s32.totalorder %s14, 1
    %p100 = por %p98, %p99
    %p101 = scmp.ne.s32.totalorder %s90, %s91
    %p102 = scmp.eq.s32.totalorder %s14, 0
    %p103 = por %p101, %p102
    %p104 = scmp.ne.s32.totalorder %s90, %s91
    %p105 = scmp.eq.s32.totalorder %s15, 1
    %p106 = por %p104, %p105
    %p108 = scmp.ne.s32.totalorder %s91, %s107
    %p109 = scmp.eq.s32.totalorder %s15, 0
    %p110 = por %p108, %p109
    %p111 = scmp.le.s32.totalorder 1, %s9
    %p112 = scmp.lt.s32.totalorder %s9, 3
    %p113 = pnand %p111, %p112
    %p114 = pneg %p113
    // Predicated region
    $region9: #{block_forward.1} parent=5 // pred_check
      _
    $region10: #{block_forward.1} parent=5 // pred_check_branch
      %116 = sbr.rel (%p113) target = $region12
    $region11: #{block_forward.1} parent=5 // pred_region
      %s117 = ssub.s32 %s9, 1
      // Predicated region
      $region13: #{block_forward.1} parent=11 // pred_check
        %p118 = pneg %p56
      $region14: #{block_forward.1} parent=11 // pred_check_branch
        %120 = sbr.rel (%p118) target = $region16
      $region15: #{block_forward.1} parent=11 // pred_region
        _
      $region16: #{block_forward.1} parent=11 // pred_fallthru
        _
      // Predicated region
      $region17: #{block_forward.1} parent=11 // pred_check
        %p121 = pneg %p77
      $region18: #{block_forward.1} parent=11 // pred_check_branch
        %123 = sbr.rel (%p121) target = $region20
      $region19: #{block_forward.1} parent=11 // pred_region
        _
      $region20: #{block_forward.1} parent=11 // pred_fallthru
        _
    $region12: #{block_forward.1} parent=5 // pred_fallthru
      _
    %p124 = scmp.lt.s32.totalorder %s9, 2
    // Predicated region
    $region21: #{block_forward.1} parent=5 // pred_check
      %p125 = pneg %p124
    $region22: #{block_forward.1} parent=5 // pred_check_branch
      %127 = sbr.rel (%p125) target = $region24
    $region23: #{block_forward.1} parent=5 // pred_region
      // Predicated region
      $region25: #{block_forward.1} parent=23 // pred_check
        %p128 = pneg %p29
      $region26: #{block_forward.1} parent=23 // pred_check_branch
        %130 = sbr.rel (%p128) target = $region28
      $region27: #{block_forward.1} parent=23 // pred_region
        %p131 = scmp.lt.s32.totalorder %s9, 1
        %s132 = scalar_select %p131, %s9, 1
        %s133 = smul.addr %s132, 32
        %s134 = smul.addr %s133, 4
        %s135 = scalar_lea.vmem %s0, %s134
      $region28: #{block_forward.1} parent=23 // pred_fallthru
        _
    $region24: #{block_forward.1} parent=5 // pred_fallthru
      _
    %p136 = scmp.le.s32.totalorder 1, %s9
    %p137 = scmp.lt.s32.totalorder %s9, 3
    %p138 = pnand %p136, %p137
    %p139 = pneg %p138
    // Predicated region
    $region29: #{block_forward.1} parent=5 // pred_check
      _
    $region30: #{block_forward.1} parent=5 // pred_check_branch
      %141 = sbr.rel (%p138) target = $region32
    $region31: #{block_forward.1} parent=5 // pred_region
      %s142 = ssub.s32 %s9, 1
      %p143 = scmp.lt.s32.totalorder %s14, 1
      %s144 = scalar_select %p143, %s14, 1
      %s145 = smul.addr %s144, 32
      %s146 = smul.addr %s145, 4
      %s147 = scalar_lea.vmem %s0, %s146
      %p148 = pneg %p35
      %p149 = pneg %p32
      %p150 = pneg %p56
      %p151 = pneg %p53
      %p152 = pneg %p77
      %p153 = pneg %p74
      %p154 = pneg %p103
      %p155 = pneg %p100
      %p156 = scmp.lt.s32.totalorder %s14, 1
      %s157 = scalar_select %p156, %s14, 1
      %s158 = smul.addr %s157, 32
      %s159 = smul.addr %s158, 8
      %s160 = scalar_lea.vmem %s3, %s159
      %p161 = scmp.lt.s32.totalorder %s14, 1
      %s162 = scalar_select %p161, %s14, 1
      %s163 = smul.addr %s162, 32
      %s164 = smul.addr %s163, 4
      %s165 = scalar_lea.vmem %s0, %s164
      %p166 = scmp.lt.s32.totalorder %s14, 1
      %s167 = scalar_select %p166, %s14, 1
      %s168 = smul.addr %s167, 32
      %s169 = smul.addr %s168, 8
      %s170 = scalar_lea.vmem %s3, %s169
      %vm172 = vcmask 31744
      %173 = vst.msk [vmem:[#allocation2] sm:$0xff] %vm172, 0.0
      %174 = vst.msk [vmem:[#allocation2 + $0x8] sm:$0xff] %vm172, 0.0
      %175 = vst.msk [vmem:[#allocation2 + $0x10] sm:$0xff] %vm172, 0.0
      %176 = vst.msk [vmem:[#allocation2 + $0x18] sm:$0xff] %vm172, 0.0
      %177 = vst.msk [vmem:[#allocation2 + $0x20] sm:$0xff] %vm172, 0.0
      %178 = vst.msk [vmem:[#allocation2 + $0x28] sm:$0xff] %vm172, 0.0
      %179 = vst.msk [vmem:[#allocation2 + $0x30] sm:$0xff] %vm172, 0.0
      %180 = vst.msk [vmem:[#allocation2 + $0x38] sm:$0xff] %vm172, 0.0
      %181 = vst.msk [vmem:[#allocation2 + $0x40] sm:$0xff] %vm172, 0.0
      %182 = vst.msk [vmem:[#allocation2 + $0x48] sm:$0xff] %vm172, 0.0
      %183 = vst.msk [vmem:[#allocation2 + $0x50] sm:$0xff] %vm172, 0.0
      %184 = vst.msk [vmem:[#allocation2 + $0x58] sm:$0xff] %vm172, 0.0
      %185 = vst.msk [vmem:[#allocation2 + $0x60] sm:$0xff] %vm172, 0.0
      %186 = vst.msk [vmem:[#allocation2 + $0x68] sm:$0xff] %vm172, 0.0
      %187 = vst.msk [vmem:[#allocation2 + $0x70] sm:$0xff] %vm172, 0.0
      %188 = vst.msk [vmem:[#allocation2 + $0x78] sm:$0xff] %vm172, 0.0
      %189 = vst.msk [vmem:[#allocation2 + $0x80] sm:$0xff] %vm172, 0.0
      %190 = vst.msk [vmem:[#allocation2 + $0x88] sm:$0xff] %vm172, 0.0
      %191 = vst.msk [vmem:[#allocation2 + $0x90] sm:$0xff] %vm172, 0.0
      %192 = vst.msk [vmem:[#allocation2 + $0x98] sm:$0xff] %vm172, 0.0
      %193 = vst.msk [vmem:[#allocation2 + $0xa0] sm:$0xff] %vm172, 0.0
      %194 = vst.msk [vmem:[#allocation2 + $0xa8] sm:$0xff] %vm172, 0.0
      %195 = vst.msk [vmem:[#allocation2 + $0xb0] sm:$0xff] %vm172, 0.0
      %196 = vst.msk [vmem:[#allocation2 + $0xb8] sm:$0xff] %vm172, 0.0
      %197 = vst.msk [vmem:[#allocation2 + $0xc0] sm:$0xff] %vm172, 0.0
      %198 = vst.msk [vmem:[#allocation2 + $0xc8] sm:$0xff] %vm172, 0.0
      %199 = vst.msk [vmem:[#allocation2 + $0xd0] sm:$0xff] %vm172, 0.0
      %200 = vst.msk [vmem:[#allocation2 + $0xd8] sm:$0xff] %vm172, 0.0
      %201 = vst.msk [vmem:[#allocation2 + $0xe0] sm:$0xff] %vm172, 0.0
      %202 = vst.msk [vmem:[#allocation2 + $0xe8] sm:$0xff] %vm172, 0.0
      %203 = vst.msk [vmem:[#allocation2 + $0xf0] sm:$0xff] %vm172, 0.0
      %204 = vst.msk [vmem:[#allocation2 + $0xf8] sm:$0xff] %vm172, 0.0
      %205 = vst.msk [vmem:[#allocation2 + $0x100] sm:$0xff] %vm172, 0.0
      %206 = vst.msk [vmem:[#allocation2 + $0x108] sm:$0xff] %vm172, 0.0
      %207 = vst.msk [vmem:[#allocation2 + $0x110] sm:$0xff] %vm172, 0.0
      %208 = vst.msk [vmem:[#allocation2 + $0x118] sm:$0xff] %vm172, 0.0
      %209 = vst.msk [vmem:[#allocation2 + $0x120] sm:$0xff] %vm172, 0.0
      %210 = vst.msk [vmem:[#allocation2 + $0x128] sm:$0xff] %vm172, 0.0
      %211 = vst.msk [vmem:[#allocation2 + $0x130] sm:$0xff] %vm172, 0.0
      %212 = vst.msk [vmem:[#allocation2 + $0x138] sm:$0xff] %vm172, 0.0
      %213 = vst.msk [vmem:[#allocation2 + $0x140] sm:$0xff] %vm172, 0.0
      %214 = vst.msk [vmem:[#allocation2 + $0x148] sm:$0xff] %vm172, 0.0
      %vm215 = vcmask 29696
      %216 = vst.msk [vmem:[#allocation2 + $0x150] sm:$0x3f] %vm215, 0.0
      %v217 = vld [vmem:[%s165] sm:$0xf]
      %v218 = vld [vmem:[%s165 + $0x4] sm:$0xf]
      %v219 = vunpack.c.l.bf16 %v217
      %v220 = vunpack.c.l.bf16 %v218
      %221 = vst.msk [vmem:[#allocation2 + $0x13] sm:$0xff] %vm172, %v219
      %222 = vst.msk [vmem:[#allocation2 + $0x1b] sm:$0xff] %vm172, %v220
      %s223 = scalar_lea.vmem %s165, 8
      %v224 = vld [vmem:[%s223] sm:$0xf]
      %v225 = vld [vmem:[%s223 + $0x4] sm:$0xf]
      %v226 = vunpack.c.l.bf16 %v224
      %v227 = vunpack.c.l.bf16 %v225
      %228 = vst.msk [vmem:[#allocation2 + $0x25] sm:$0xff] %vm172, %v226
      %229 = vst.msk [vmem:[#allocation2 + $0x2d] sm:$0xff] %vm172, %v227
      %s230 = scalar_lea.vmem %s165, 16
      %v231 = vld [vmem:[%s230] sm:$0xf]
      %v232 = vld [vmem:[%s230 + $0x4] sm:$0xf]
      %v233 = vunpack.c.l.bf16 %v231
      %v234 = vunpack.c.l.bf16 %v232
      %235 = vst.msk [vmem:[#allocation2 + $0x37] sm:$0xff] %vm172, %v233
      %236 = vst.msk [vmem:[#allocation2 + $0x3f] sm:$0xff] %vm172, %v234
      %s237 = scalar_lea.vmem %s165, 24
      %v238 = vld [vmem:[%s237] sm:$0xf]
      %v239 = vld [vmem:[%s237 + $0x4] sm:$0xf]
      %v240 = vunpack.c.l.bf16 %v238
      %v241 = vunpack.c.l.bf16 %v239
      %242 = vst.msk [vmem:[#allocation2 + $0x49] sm:$0xff] %vm172, %v240
      %243 = vst.msk [vmem:[#allocation2 + $0x51] sm:$0xff] %vm172, %v241
      %s244 = scalar_lea.vmem %s165, 32
      %v245 = vld [vmem:[%s244] sm:$0xf]
      %v246 = vld [vmem:[%s244 + $0x4] sm:$0xf]
      %v247 = vunpack.c.l.bf16 %v245
      %v248 = vunpack.c.l.bf16 %v246
      %249 = vst.msk [vmem:[#allocation2 + $0x5b] sm:$0xff] %vm172, %v247
      %250 = vst.msk [vmem:[#allocation2 + $0x63] sm:$0xff] %vm172, %v248
      %s251 = scalar_lea.vmem %s165, 40
      %v252 = vld [vmem:[%s251] sm:$0xf]
      %v253 = vld [vmem:[%s251 + $0x4] sm:$0xf]
      %v254 = vunpack.c.l.bf16 %v252
      %v255 = vunpack.c.l.bf16 %v253
      %256 = vst.msk [vmem:[#allocation2 + $0x6d] sm:$0xff] %vm172, %v254
      %257 = vst.msk [vmem:[#allocation2 + $0x75] sm:$0xff] %vm172, %v255
      %s258 = scalar_lea.vmem %s165, 48
      %v259 = vld [vmem:[%s258] sm:$0xf]
      %v260 = vld [vmem:[%s258 + $0x4] sm:$0xf]
      %v261 = vunpack.c.l.bf16 %v259
      %v262 = vunpack.c.l.bf16 %v260
      %263 = vst.msk [vmem:[#allocation2 + $0x7f] sm:$0xff] %vm172, %v261
      %264 = vst.msk [vmem:[#allocation2 + $0x87] sm:$0xff] %vm172, %v262
      %s265 = scalar_lea.vmem %s165, 56
      %v266 = vld [vmem:[%s265] sm:$0xf]
      %v267 = vld [vmem:[%s265 + $0x4] sm:$0xf]
      %v268 = vunpack.c.l.bf16 %v266
      %v269 = vunpack.c.l.bf16 %v267
      %270 = vst.msk [vmem:[#allocation2 + $0x91] sm:$0xff] %vm172, %v268
      %271 = vst.msk [vmem:[#allocation2 + $0x99] sm:$0xff] %vm172, %v269
      %s272 = scalar_lea.vmem %s165, 64
      %v273 = vld [vmem:[%s272] sm:$0xf]
      %v274 = vld [vmem:[%s272 + $0x4] sm:$0xf]
      %v275 = vunpack.c.l.bf16 %v273
      %v276 = vunpack.c.l.bf16 %v274
      %277 = vst.msk [vmem:[#allocation2 + $0xa3] sm:$0xff] %vm172, %v275
      %278 = vst.msk [vmem:[#allocation2 + $0xab] sm:$0xff] %vm172, %v276
      %s279 = scalar_lea.vmem %s165, 72
      %v280 = vld [vmem:[%s279] sm:$0xf]
      %v281 = vld [vmem:[%s279 + $0x4] sm:$0xf]
      %v282 = vunpack.c.l.bf16 %v280
      %v283 = vunpack.c.l.bf16 %v281
      %284 = vst.msk [vmem:[#allocation2 + $0xb5] sm:$0xff] %vm172, %v282
      %285 = vst.msk [vmem:[#allocation2 + $0xbd] sm:$0xff] %vm172, %v283
      %s286 = scalar_lea.vmem %s165, 80
      %v287 = vld [vmem:[%s286] sm:$0xf]
      %v288 = vld [vmem:[%s286 + $0x4] sm:$0xf]
      %v289 = vunpack.c.l.bf16 %v287
      %v290 = vunpack.c.l.bf16 %v288
      %291 = vst.msk [vmem:[#allocation2 + $0xc7] sm:$0xff] %vm172, %v289
      %292 = vst.msk [vmem:[#allocation2 + $0xcf] sm:$0xff] %vm172, %v290
      %s293 = scalar_lea.vmem %s165, 88
      %v294 = vld [vmem:[%s293] sm:$0xf]
      %v295 = vld [vmem:[%s293 + $0x4] sm:$0xf]
      %v296 = vunpack.c.l.bf16 %v294
      %v297 = vunpack.c.l.bf16 %v295
      %298 = vst.msk [vmem:[#allocation2 + $0xd9] sm:$0xff] %vm172, %v296
      %299 = vst.msk [vmem:[#allocation2 + $0xe1] sm:$0xff] %vm172, %v297
      %s300 = scalar_lea.vmem %s165, 96
      %v301 = vld [vmem:[%s300] sm:$0xf]
      %v302 = vld [vmem:[%s300 + $0x4] sm:$0xf]
      %v303 = vunpack.c.l.bf16 %v301
      %v304 = vunpack.c.l.bf16 %v302
      %305 = vst.msk [vmem:[#allocation2 + $0xeb] sm:$0xff] %vm172, %v303
      %306 = vst.msk [vmem:[#allocation2 + $0xf3] sm:$0xff] %vm172, %v304
      %s307 = scalar_lea.vmem %s165, 104
      %v308 = vld [vmem:[%s307] sm:$0xf]
      %v309 = vld [vmem:[%s307 + $0x4] sm:$0xf]
      %v310 = vunpack.c.l.bf16 %v308
      %v311 = vunpack.c.l.bf16 %v309
      %312 = vst.msk [vmem:[#allocation2 + $0xfd] sm:$0xff] %vm172, %v310
      %313 = vst.msk [vmem:[#allocation2 + $0x105] sm:$0xff] %vm172, %v311
      %s314 = scalar_lea.vmem %s165, 112
      %v315 = vld [vmem:[%s314] sm:$0xf]
      %v316 = vld [vmem:[%s314 + $0x4] sm:$0xf]
      %v317 = vunpack.c.l.bf16 %v315
      %v318 = vunpack.c.l.bf16 %v316
      %319 = vst.msk [vmem:[#allocation2 + $0x10f] sm:$0xff] %vm172, %v317
      %320 = vst.msk [vmem:[#allocation2 + $0x117] sm:$0xff] %vm172, %v318
      %s321 = scalar_lea.vmem %s165, 120
      %v322 = vld [vmem:[%s321] sm:$0xf]
      %v323 = vld [vmem:[%s321 + $0x4] sm:$0xf]
      %v324 = vunpack.c.l.bf16 %v322
      %v325 = vunpack.c.l.bf16 %v323
      %326 = vst.msk [vmem:[#allocation2 + $0x121] sm:$0xff] %vm172, %v324
      %327 = vst.msk [vmem:[#allocation2 + $0x129] sm:$0xff] %vm172, %v325
      %v328 = vld [vmem:[#allocation2] sm:$0xff]
      %v329 = vld [vmem:[#allocation2 + $0x8] sm:$0xff]
      %v330 = vld [vmem:[#allocation2 + $0x10] sm:$0xff]
      %v331 = vld [vmem:[#allocation2 + $0x18] sm:$0xff]
      %v332 = vld [vmem:[#allocation2 + $0x20] sm:$0xff]
      %v333 = vld [vmem:[#allocation2 + $0x28] sm:$0xff]
      %v334 = vld [vmem:[#allocation2 + $0x30] sm:$0xff]
      %v335 = vld [vmem:[#allocation2 + $0x38] sm:$0xff]
      %v336 = vld [vmem:[#allocation2 + $0x40] sm:$0xff]
      %v337 = vld [vmem:[#allocation2 + $0x48] sm:$0xff]
      %v338 = vld [vmem:[#allocation2 + $0x50] sm:$0xff]
      %v339 = vld [vmem:[#allocation2 + $0x58] sm:$0xff]
      %v340 = vld [vmem:[#allocation2 + $0x60] sm:$0xff]
      %v341 = vld [vmem:[#allocation2 + $0x68] sm:$0xff]
      %v342 = vld [vmem:[#allocation2 + $0x70] sm:$0xff]
      %v343 = vld [vmem:[#allocation2 + $0x78] sm:$0xff]
      %v344 = vld [vmem:[#allocation2 + $0x80] sm:$0xff]
      %v345 = vld [vmem:[#allocation2 + $0x88] sm:$0xff]
      %v346 = vld [vmem:[#allocation2 + $0x90] sm:$0xff]
      %v347 = vld [vmem:[#allocation2 + $0x98] sm:$0xff]
      %v348 = vld [vmem:[#allocation2 + $0xa0] sm:$0xff]
      %v349 = vld [vmem:[#allocation2 + $0xa8] sm:$0xff]
      %v350 = vld [vmem:[#allocation2 + $0xb0] sm:$0xff]
      %v351 = vld [vmem:[#allocation2 + $0xb8] sm:$0xff]
      %v352 = vld [vmem:[#allocation2 + $0xc0] sm:$0xff]
      %v353 = vld [vmem:[#allocation2 + $0xc8] sm:$0xff]
      %v354 = vld [vmem:[#allocation2 + $0xd0] sm:$0xff]
      %v355 = vld [vmem:[#allocation2 + $0xd8] sm:$0xff]
      %v356 = vld [vmem:[#allocation2 + $0xe0] sm:$0xff]
      %v357 = vld [vmem:[#allocation2 + $0xe8] sm:$0xff]
      %v358 = vld [vmem:[#allocation2 + $0xf0] sm:$0xff]
      %v359 = vld [vmem:[#allocation2 + $0xf8] sm:$0xff]
      %v360 = vld [vmem:[#allocation2 + $0x100] sm:$0xff]
      %v361 = vld [vmem:[#allocation2 + $0x108] sm:$0xff]
      %v362 = vld [vmem:[#allocation2 + $0x110] sm:$0xff]
      %v363 = vld [vmem:[#allocation2 + $0x118] sm:$0xff]
      %v364 = vpack.c.bf16 %v329, %v328
      %v365 = vpack.c.bf16 %v331, %v330
      %v366 = vpack.c.bf16 %v333, %v332
      %v367 = vpack.c.bf16 %v335, %v334
      %v368 = vpack.c.bf16 %v337, %v336
      %v369 = vpack.c.bf16 %v339, %v338
      %v370 = vpack.c.bf16 %v341, %v340
      %v371 = vpack.c.bf16 %v343, %v342
      %v372 = vpack.c.bf16 %v345, %v344
      %v373 = vpack.c.bf16 %v347, %v346
      %v374 = vpack.c.bf16 %v349, %v348
      %v375 = vpack.c.bf16 %v351, %v350
      %v376 = vpack.c.bf16 %v353, %v352
      %v377 = vpack.c.bf16 %v355, %v354
      %v378 = vpack.c.bf16 %v357, %v356
      %v379 = vpack.c.bf16 %v359, %v358
      %v380 = vpack.c.bf16 %v361, %v360
      %v381 = vpack.c.bf16 %v363, %v362
      %v382 = vld [vmem:[%s1] sm:$0x3]
      %v384 = vsel %vm172, %v364, 0
      %v387 = vsel %vm172, %v365, 0
      %v390 = vsel %vm172, %v366, 0
      %v393 = vsel %vm172, %v367, 0
      %v396 = vsel %vm172, %v368, 0
      %v399 = vsel %vm172, %v369, 0
      %v402 = vsel %vm172, %v370, 0
      %v405 = vsel %vm172, %v371, 0
      %v408 = vsel %vm172, %v372, 0
      %v411 = vsel %vm172, %v373, 0
      %v414 = vsel %vm172, %v374, 0
      %v417 = vsel %vm172, %v375, 0
      %v420 = vsel %vm172, %v376, 0
      %v423 = vsel %vm172, %v377, 0
      %v426 = vsel %vm172, %v378, 0
      %v429 = vsel %vm172, %v379, 0
      %v432 = vsel %vm172, %v380, 0
      %v435 = vsel %vm172, %v381, 0
      %vm437 = vcmask 1041408
      %v439 = vsel %vm437, %v382, 0
      %441 = vmatprep.subr.bf16.mxu0 0
      %442 = vmatpush1.bf16.msra.mxu0 %v439
      %443 = vmatprep.subr.bf16.mxu0 0
      %444 = vmatpush1.bf16.msra.mxu0 0
      %445 = vmatprep.subr.bf16.mxu0 0
      %446 = vmatpush1.bf16.msra.mxu0 0
      %447 = vmatprep.subr.bf16.mxu0 0
      %448 = vmatpush1.bf16.msra.mxu0 0
      %449 = vmatprep.subr.bf16.mxu0 0
      %450 = vmatpush1.bf16.msra.mxu0 0
      %451 = vmatprep.subr.bf16.mxu0 0
      %452 = vmatpush1.bf16.msra.mxu0 0
      %453 = vmatprep.subr.bf16.mxu0 0
      %454 = vmatpush1.bf16.msra.mxu0 0
      %455 = vmatprep.subr.bf16.mxu0 0
      %456 = vmatpush1.bf16.msra.mxu0 0
      %457 = vmatprep.subr.bf16.mxu0 0
      %458 = vmatpush1.bf16.msra.mxu0 0
      %459 = vmatprep.subr.bf16.mxu0 0
      %460 = vmatpush1.bf16.msra.mxu0 0
      %461 = vmatprep.subr.bf16.mxu0 0
      %462 = vmatpush1.bf16.msra.mxu0 0
      %463 = vmatprep.subr.bf16.mxu0 0
      %464 = vmatpush1.bf16.msra.mxu0 0
      %465 = vmatprep.subr.bf16.mxu0 0
      %466 = vmatpush1.bf16.msra.mxu0 0
      %467 = vmatprep.subr.bf16.mxu0 0
      %468 = vmatpush1.bf16.msra.mxu0 0
      %469 = vmatprep.subr.bf16.mxu0 0
      %470 = vmatpush1.bf16.msra.mxu0 0
      %471 = vmatprep.subr.bf16.mxu0 0
      %472 = vmatpush1.bf16.msra.mxu0 0
      %473 = vmatprep.mubr.bf16.mxu0 0
      %474 = vmatmul.mubr.bf16.gmra.mrb[0].mxu0 %v384
      %v475 = vpop.f32.mrb[0].mxu0
      %v476 = vadd.f32 0.0, %v475
      %v477 = vpop.f32.mrb[0].mxu0
      %v478 = vpop.f32.mrb[0].mxu0
      %v479 = vadd.f32 0.0, %v478
      %v480 = vpop.f32.mrb[0].mxu0
      %481 = vmatprep.mubr.bf16.mxu0 0
      %482 = vmatmul.mubr.bf16.gmra.mrb[0].mxu0 %v387
      %v483 = vpop.f32.mrb[0].mxu0
      %v484 = vadd.f32 0.0, %v483
      %v485 = vpop.f32.mrb[0].mxu0
      %v486 = vpop.f32.mrb[0].mxu0
      %v487 = vadd.f32 0.0, %v486
      %v488 = vpop.f32.mrb[0].mxu0
      %489 = vmatprep.mubr.bf16.mxu0 0
      %490 = vmatmul.mubr.bf16.gmra.mrb[0].mxu0 %v390
      %v491 = vpop.f32.mrb[0].mxu0
      %v492 = vadd.f32 0.0, %v491
      %v493 = vpop.f32.mrb[0].mxu0
      %v494 = vpop.f32.mrb[0].mxu0
      %v495 = vadd.f32 0.0, %v494
      %v496 = vpop.f32.mrb[0].mxu0
      %497 = vmatprep.mubr.bf16.mxu0 0
      %498 = vmatmul.mubr.bf16.gmra.mrb[0].mxu0 %v393
      %v499 = vpop.f32.mrb[0].mxu0
      %v500 = vadd.f32 0.0, %v499
      %v501 = vpop.f32.mrb[0].mxu0
      %v502 = vpop.f32.mrb[0].mxu0
      %v503 = vadd.f32 0.0, %v502
      %v504 = vpop.f32.mrb[0].mxu0
      %505 = vmatprep.mubr.bf16.mxu0 0
      %506 = vmatmul.mubr.bf16.gmra.mrb[0].mxu0 %v396
      %v507 = vpop.f32.mrb[0].mxu0
      %v508 = vadd.f32 0.0, %v507
      %v509 = vpop.f32.mrb[0].mxu0
      %v510 = vpop.f32.mrb[0].mxu0
      %v511 = vadd.f32 0.0, %v510
      %v512 = vpop.f32.mrb[0].mxu0
      %513 = vmatprep.mubr.bf16.mxu0 0
      %514 = vmatmul.mubr.bf16.gmra.mrb[0].mxu0 %v399
      %v515 = vpop.f32.mrb[0].mxu0
      %v516 = vadd.f32 0.0, %v515
      %v517 = vpop.f32.mrb[0].mxu0
      %v518 = vpop.f32.mrb[0].mxu0
      %v519 = vadd.f32 0.0, %v518
      %v520 = vpop.f32.mrb[0].mxu0
      %521 = vmatprep.mubr.bf16.mxu0 0
      %522 = vmatmul.mubr.bf16.gmra.mrb[0].mxu0 %v402
      %v523 = vpop.f32.mrb[0].mxu0
      %v524 = vadd.f32 0.0, %v523
      %v525 = vpop.f32.mrb[0].mxu0
      %v526 = vpop.f32.mrb[0].mxu0
      %v527 = vadd.f32 0.0, %v526
      %v528 = vpop.f32.mrb[0].mxu0
      %529 = vmatprep.mubr.bf16.mxu0 0
      %530 = vmatmul.mubr.bf16.gmra.mrb[0].mxu0 %v405
      %v531 = vpop.f32.mrb[0].mxu0
      %v532 = vadd.f32 0.0, %v531
      %v533 = vpop.f32.mrb[0].mxu0
      %v534 = vpop.f32.mrb[0].mxu0
      %v535 = vadd.f32 0.0, %v534
      %v536 = vpop.f32.mrb[0].mxu0
      %537 = vmatprep.mubr.bf16.mxu0 0
      %538 = vmatmul.mubr.bf16.gmra.mrb[0].mxu0 %v408
      %v539 = vpop.f32.mrb[0].mxu0
      %v540 = vadd.f32 0.0, %v539
      %v541 = vpop.f32.mrb[0].mxu0
      %v542 = vpop.f32.mrb[0].mxu0
      %v543 = vadd.f32 0.0, %v542
      %v544 = vpop.f32.mrb[0].mxu0
      %545 = vmatprep.mubr.bf16.mxu0 0
      %546 = vmatmul.mubr.bf16.gmra.mrb[0].mxu0 %v411
      %v547 = vpop.f32.mrb[0].mxu0
      %v548 = vadd.f32 0.0, %v547
      %v549 = vpop.f32.mrb[0].mxu0
      %v550 = vpop.f32.mrb[0].mxu0
      %v551 = vadd.f32 0.0, %v550
      %v552 = vpop.f32.mrb[0].mxu0
      %553 = vmatprep.mubr.bf16.mxu0 0
      %554 = vmatmul.mubr.bf16.gmra.mrb[0].mxu0 %v414
      %v555 = vpop.f32.mrb[0].mxu0
      %v556 = vadd.f32 0.0, %v555
      %v557 = vpop.f32.mrb[0].mxu0
      %v558 = vpop.f32.mrb[0].mxu0
      %v559 = vadd.f32 0.0, %v558
      %v560 = vpop.f32.mrb[0].mxu0
      %561 = vmatprep.mubr.bf16.mxu0 0
      %562 = vmatmul.mubr.bf16.gmra.mrb[0].mxu0 %v417
      %v563 = vpop.f32.mrb[0].mxu0
      %v564 = vadd.f32 0.0, %v563
      %v565 = vpop.f32.mrb[0].mxu0
      %v566 = vpop.f32.mrb[0].mxu0
      %v567 = vadd.f32 0.0, %v566
      %v568 = vpop.f32.mrb[0].mxu0
      %569 = vmatprep.mubr.bf16.mxu0 0
      %570 = vmatmul.mubr.bf16.gmra.mrb[0].mxu0 %v420
      %v571 = vpop.f32.mrb[0].mxu0
      %v572 = vadd.f32 0.0, %v571
      %v573 = vpop.f32.mrb[0].mxu0
      %v574 = vpop.f32.mrb[0].mxu0
      %v575 = vadd.f32 0.0, %v574
      %v576 = vpop.f32.mrb[0].mxu0
      %577 = vmatprep.mubr.bf16.mxu0 0
      %578 = vmatmul.mubr.bf16.gmra.mrb[0].mxu0 %v423
      %v579 = vpop.f32.mrb[0].mxu0
      %v580 = vadd.f32 0.0, %v579
      %v581 = vpop.f32.mrb[0].mxu0
      %v582 = vpop.f32.mrb[0].mxu0
      %v583 = vadd.f32 0.0, %v582
      %v584 = vpop.f32.mrb[0].mxu0
      %585 = vmatprep.mubr.bf16.mxu0 0
      %586 = vmatmul.mubr.bf16.gmra.mrb[0].mxu0 %v426
      %v587 = vpop.f32.mrb[0].mxu0
      %v588 = vadd.f32 0.0, %v587
      %v589 = vpop.f32.mrb[0].mxu0
      %v590 = vpop.f32.mrb[0].mxu0
      %v591 = vadd.f32 0.0, %v590
      %v592 = vpop.f32.mrb[0].mxu0
      %593 = vmatprep.mubr.bf16.mxu0 0
      %594 = vmatmul.mubr.bf16.gmra.mrb[0].mxu0 %v429
      %v595 = vpop.f32.mrb[0].mxu0
      %v596 = vadd.f32 0.0, %v595
      %v597 = vpop.f32.mrb[0].mxu0
      %v598 = vpop.f32.mrb[0].mxu0
      %v599 = vadd.f32 0.0, %v598
      %v600 = vpop.f32.mrb[0].mxu0
      %601 = vmatprep.mubr.bf16.mxu0 0
      %602 = vmatmul.mubr.bf16.gmra.mrb[0].mxu0 %v432
      %v603 = vpop.f32.mrb[0].mxu0
      %v604 = vadd.f32 0.0, %v603
      %v605 = vpop.f32.mrb[0].mxu0
      %v606 = vpop.f32.mrb[0].mxu0
      %v607 = vadd.f32 0.0, %v606
      %v608 = vpop.f32.mrb[0].mxu0
      %609 = vmatprep.mubr.bf16.mxu0 0
      %610 = vmatmul.mubr.bf16.gmra.mrb[0].mxu0 %v435
      %v611 = vpop.f32.mrb[0].mxu0
      %v612 = vadd.f32 0.0, %v611
      %v613 = vpop.f32.mrb[0].mxu0
      %v614 = vpop.f32.mrb[0].mxu0
      %v615 = vadd.f32 0.0, %v614
      %v616 = vpop.f32.mrb[0].mxu0
      %617 = vdwg.mxu0
      %vm618 = vcmask 64512
      %619 = vst.msk [vmem:[#allocation3] sm:$0xff] %vm618, %v476
      %620 = vst.msk [vmem:[#allocation3 + $0x8] sm:$0xff] %vm618, %v479
      %621 = vst.msk [vmem:[#allocation3 + $0x10] sm:$0xff] %vm618, %v484
      %622 = vst.msk [vmem:[#allocation3 + $0x18] sm:$0xff] %vm618, %v487
      %623 = vst.msk [vmem:[#allocation3 + $0x20] sm:$0xff] %vm618, %v492
      %624 = vst.msk [vmem:[#allocation3 + $0x28] sm:$0xff] %vm618, %v495
      %625 = vst.msk [vmem:[#allocation3 + $0x30] sm:$0xff] %vm618, %v500
      %626 = vst.msk [vmem:[#allocation3 + $0x38] sm:$0xff] %vm618, %v503
      %627 = vst.msk [vmem:[#allocation3 + $0x40] sm:$0xff] %vm618, %v508
      %628 = vst.msk [vmem:[#allocation3 + $0x48] sm:$0xff] %vm618, %v511
      %629 = vst.msk [vmem:[#allocation3 + $0x50] sm:$0xff] %vm618, %v516
      %630 = vst.msk [vmem:[#allocation3 + $0x58] sm:$0xff] %vm618, %v519
      %631 = vst.msk [vmem:[#allocation3 + $0x60] sm:$0xff] %vm618, %v524
      %632 = vst.msk [vmem:[#allocation3 + $0x68] sm:$0xff] %vm618, %v527
      %633 = vst.msk [vmem:[#allocation3 + $0x70] sm:$0xff] %vm618, %v532
      %634 = vst.msk [vmem:[#allocation3 + $0x78] sm:$0xff] %vm618, %v535
      %635 = vst.msk [vmem:[#allocation3 + $0x80] sm:$0xff] %vm618, %v540
      %636 = vst.msk [vmem:[#allocation3 + $0x88] sm:$0xff] %vm618, %v543
      %637 = vst.msk [vmem:[#allocation3 + $0x90] sm:$0xff] %vm618, %v548
      %638 = vst.msk [vmem:[#allocation3 + $0x98] sm:$0xff] %vm618, %v551
      %639 = vst.msk [vmem:[#allocation3 + $0xa0] sm:$0xff] %vm618, %v556
      %640 = vst.msk [vmem:[#allocation3 + $0xa8] sm:$0xff] %vm618, %v559
      %641 = vst.msk [vmem:[#allocation3 + $0xb0] sm:$0xff] %vm618, %v564
      %642 = vst.msk [vmem:[#allocation3 + $0xb8] sm:$0xff] %vm618, %v567
      %643 = vst.msk [vmem:[#allocation3 + $0xc0] sm:$0xff] %vm618, %v572
      %644 = vst.msk [vmem:[#allocation3 + $0xc8] sm:$0xff] %vm618, %v575
      %645 = vst.msk [vmem:[#allocation3 + $0xd0] sm:$0xff] %vm618, %v580
      %646 = vst.msk [vmem:[#allocation3 + $0xd8] sm:$0xff] %vm618, %v583
      %647 = vst.msk [vmem:[#allocation3 + $0xe0] sm:$0xff] %vm618, %v588
      %648 = vst.msk [vmem:[#allocation3 + $0xe8] sm:$0xff] %vm618, %v591
      %649 = vst.msk [vmem:[#allocation3 + $0xf0] sm:$0xff] %vm618, %v596
      %650 = vst.msk [vmem:[#allocation3 + $0xf8] sm:$0xff] %vm618, %v599
      %651 = vst.msk [vmem:[#allocation3 + $0x100] sm:$0xff] %vm618, %v604
      %652 = vst.msk [vmem:[#allocation3 + $0x108] sm:$0xff] %vm618, %v607
      %653 = vst.msk [vmem:[#allocation3 + $0x110] sm:$0xff] %vm618, %v612
      %654 = vst.msk [vmem:[#allocation3 + $0x118] sm:$0xff] %vm618, %v615
      %v655 = vld [vmem:[#allocation2 + $0x1] sm:$0xff]
      %v656 = vld [vmem:[#allocation2 + $0x9] sm:$0xff]
      %v657 = vld [vmem:[#allocation2 + $0x11] sm:$0xff]
      %v658 = vld [vmem:[#allocation2 + $0x19] sm:$0xff]
      %v659 = vld [vmem:[#allocation2 + $0x21] sm:$0xff]
      %v660 = vld [vmem:[#allocation2 + $0x29] sm:$0xff]
      %v661 = vld [vmem:[#allocation2 + $0x31] sm:$0xff]
      %v662 = vld [vmem:[#allocation2 + $0x39] sm:$0xff]
      %v663 = vld [vmem:[#allocation2 + $0x41] sm:$0xff]
      %v664 = vld [vmem:[#allocation2 + $0x49] sm:$0xff]
      %v665 = vld [vmem:[#allocation2 + $0x51] sm:$0xff]
      %v666 = vld [vmem:[#allocation2 + $0x59] sm:$0xff]
      %v667 = vld [vmem:[#allocation2 + $0x61] sm:$0xff]
      %v668 = vld [vmem:[#allocation2 + $0x69] sm:$0xff]
      %v669 = vld [vmem:[#allocation2 + $0x71] sm:$0xff]
      %v670 = vld [vmem:[#allocation2 + $0x79] sm:$0xff]
      %v671 = vld [vmem:[#allocation2 + $0x81] sm:$0xff]
      %v672 = vld [vmem:[#allocation2 + $0x89] sm:$0xff]
      %v673 = vld [vmem:[#allocation2 + $0x91] sm:$0xff]
      %v674 = vld [vmem:[#allocation2 + $0x99] sm:$0xff]
      %v675 = vld [vmem:[#allocation2 + $0xa1] sm:$0xff]
      %v676 = vld [vmem:[#allocation2 + $0xa9] sm:$0xff]
      %v677 = vld [vmem:[#allocation2 + $0xb1] sm:$0xff]
      %v678 = vld [vmem:[#allocation2 + $0xb9] sm:$0xff]
      %v679 = vld [vmem:[#allocation2 + $0xc1] sm:$0xff]
      %v680 = vld [vmem:[#allocation2 + $0xc9] sm:$0xff]
      %v681 = vld [vmem:[#allocation2 + $0xd1] sm:$0xff]
      %v682 = vld [vmem:[#allocation2 + $0xd9] sm:$0xff]
      %v683 = vld [vmem:[#allocation2 + $0xe1] sm:$0xff]
      %v684 = vld [vmem:[#allocation2 + $0xe9] sm:$0xff]
      %v685 = vld [vmem:[#allocation2 + $0xf1] sm:$0xff]
      %v686 = vld [vmem:[#allocation2 + $0xf9] sm:$0xff]
      %v687 = vld [vmem:[#allocation2 + $0x101] sm:$0xff]
      %v688 = vld [vmem:[#allocation2 + $0x109] sm:$0xff]
      %v689 = vld [vmem:[#allocation2 + $0x111] sm:$0xff]
      %v690 = vld [vmem:[#allocation2 + $0x119] sm:$0xff]
      %v691 = vpack.c.bf16 %v656, %v655
      %v692 = vpack.c.bf16 %v658, %v657
      %v693 = vpack.c.bf16 %v660, %v659
      %v694 = vpack.c.bf16 %v662, %v661
      %v695 = vpack.c.bf16 %v664, %v663
      %v696 = vpack.c.bf16 %v666, %v665
      %v697 = vpack.c.bf16 %v668, %v667
      %v698 = vpack.c.bf16 %v670, %v669
      %v699 = vpack.c.bf16 %v672, %v671
      %v700 = vpack.c.bf16 %v674, %v673
      %v701 = vpack.c.bf16 %v676, %v675
      %v702 = vpack.c.bf16 %v678, %v677
      %v703 = vpack.c.bf16 %v680, %v679
      %v704 = vpack.c.bf16 %v682, %v681
      %v705 = vpack.c.bf16 %v684, %v683
      %v706 = vpack.c.bf16 %v686, %v685
      %v707 = vpack.c.bf16 %v688, %v687
      %v708 = vpack.c.bf16 %v690, %v689
      %s709 = scalar_lea.vmem %s1, 2
      %v710 = vld [vmem:[%s709] sm:$0x3]
      %v712 = vsel %vm172, %v691, 0
      %v715 = vsel %vm172, %v692, 0
      %v718 = vsel %vm172, %v693, 0
      %v721 = vsel %vm172, %v694, 0
      %v724 = vsel %vm172, %v695, 0
      %v727 = vsel %vm172, %v696, 0
      %v730 = vsel %vm172, %v697, 0
      %v733 = vsel %vm172, %v698, 0
      %v736 = vsel %vm172, %v699, 0
      %v739 = vsel %vm172, %v700, 0
      %v742 = vsel %vm172, %v701, 0
      %v745 = vsel %vm172, %v702, 0
      %v748 = vsel %vm172, %v703, 0
      %v751 = vsel %vm172, %v704, 0
      %v754 = vsel %vm172, %v705, 0
      %v757 = vsel %vm172, %v706, 0
      %v760 = vsel %vm172, %v707, 0
      %v763 = vsel %vm172, %v708, 0
      %v766 = vsel %vm437, %v710, 0
      %768 = vmatprep.subr.bf16.mxu0 0
      %769 = vmatpush1.bf16.msra.mxu0 %v766
      %770 = vmatprep.subr.bf16.mxu0 0
      %771 = vmatpush1.bf16.msra.mxu0 0
      %772 = vmatprep.subr.bf16.mxu0 0
      %773 = vmatpush1.bf16.msra.mxu0 0
      %774 = vmatprep.subr.bf16.mxu0 0
      %775 = vmatpush1.bf16.msra.mxu0 0
      %776 = vmatprep.subr.bf16.mxu0 0
      %777 = vmatpush1.bf16.msra.mxu0 0
      %778 = vmatprep.subr.bf16.mxu0 0
      %779 = vmatpush1.bf16.msra.mxu0 0
      %780 = vmatprep.subr.bf16.mxu0 0
      %781 = vmatpush1.bf16.msra.mxu0 0
      %782 = vmatprep.subr.bf16.mxu0 0
      %783 = vmatpush1.bf16.msra.mxu0 0
      %784 = vmatprep.subr.bf16.mxu0 0
      %785 = vmatpush1.bf16.msra.mxu0 0
      %786 = vmatprep.subr.bf16.mxu0 0
      %787 = vmatpush1.bf16.msra.mxu0 0
      %788 = vmatprep.subr.bf16.mxu0 0
      %789 = vmatpush1.bf16.msra.mxu0 0
      %790 = vmatprep.subr.bf16.mxu0 0
      %791 = vmatpush1.bf16.msra.mxu0 0
      %792 = vmatprep.subr.bf16.mxu0 0
      %793 = vmatpush1.bf16.msra.mxu0 0
      %794 = vmatprep.subr.bf16.mxu0 0
      %795 = vmatpush1.bf16.msra.mxu0 0
      %796 = vmatprep.subr.bf16.mxu0 0
      %797 = vmatpush1.bf16.msra.mxu0 0
      %798 = vmatprep.subr.bf16.mxu0 0
      %799 = vmatpush1.bf16.msra.mxu0 0
      %800 = vmatprep.mubr.bf16.mxu0 0
      %801 = vmatmul.mubr.bf16.gmra.mrb[0].mxu0 %v712
      %v802 = vpop.f32.mrb[0].mxu0
      %v803 = vadd.f32 0.0, %v802
      %v804 = vpop.f32.mrb[0].mxu0
      %v805 = vpop.f32.mrb[0].mxu0
      %v806 = vadd.f32 0.0, %v805
      %v807 = vpop.f32.mrb[0].mxu0
      %808 = vmatprep.mubr.bf16.mxu0 0
      %809 = vmatmul.mubr.bf16.gmra.mrb[0].mxu0 %v715
      %v810 = vpop.f32.mrb[0].mxu0
      %v811 = vadd.f32 0.0, %v810
      %v812 = vpop.f32.mrb[0].mxu0
      %v813 = vpop.f32.mrb[0].mxu0
      %v814 = vadd.f32 0.0, %v813
      %v815 = vpop.f32.mrb[0].mxu0
      %816 = vmatprep.mubr.bf16.mxu0 0
      %817 = vmatmul.mubr.bf16.gmra.mrb[0].mxu0 %v718
      %v818 = vpop.f32.mrb[0].mxu0
      %v819 = vadd.f32 0.0, %v818
      %v820 = vpop.f32.mrb[0].mxu0
      %v821 = vpop.f32.mrb[0].mxu0
      %v822 = vadd.f32 0.0, %v821
      %v823 = vpop.f32.mrb[0].mxu0
      %824 = vmatprep.mubr.bf16.mxu0 0
      %825 = vmatmul.mubr.bf16.gmra.mrb[0].mxu0 %v721
      %v826 = vpop.f32.mrb[0].mxu0
      %v827 = vadd.f32 0.0, %v826
      %v828 = vpop.f32.mrb[0].mxu0
      %v829 = vpop.f32.mrb[0].mxu0
      %v830 = vadd.f32 0.0, %v829
      %v831 = vpop.f32.mrb[0].mxu0
      %832 = vmatprep.mubr.bf16.mxu0 0
      %833 = vmatmul.mubr.bf16.gmra.mrb[0].mxu0 %v724
      %v834 = vpop.f32.mrb[0].mxu0
      %v835 = vadd.f32 0.0, %v834
      %v836 = vpop.f32.mrb[0].mxu0
      %v837 = vpop.f32.mrb[0].mxu0
      %v838 = vadd.f32 0.0, %v837
      %v839 = vpop.f32.mrb[0].mxu0
      %840 = vmatprep.mubr.bf16.mxu0 0
      %841 = vmatmul.mubr.bf16.gmra.mrb[0].mxu0 %v727
      %v842 = vpop.f32.mrb[0].mxu0
      %v843 = vadd.f32 0.0, %v842
      %v844 = vpop.f32.mrb[0].mxu0
      %v845 = vpop.f32.mrb[0].mxu0
      %v846 = vadd.f32 0.0, %v845
      %v847 = vpop.f32.mrb[0].mxu0
      %848 = vmatprep.mubr.bf16.mxu0 0
      %849 = vmatmul.mubr.bf16.gmra.mrb[0].mxu0 %v730
      %v850 = vpop.f32.mrb[0].mxu0
      %v851 = vadd.f32 0.0, %v850
      %v852 = vpop.f32.mrb[0].mxu0
      %v853 = vpop.f32.mrb[0].mxu0
      %v854 = vadd.f32 0.0, %v853
      %v855 = vpop.f32.mrb[0].mxu0
      %856 = vmatprep.mubr.bf16.mxu0 0
      %857 = vmatmul.mubr.bf16.gmra.mrb[0].mxu0 %v733
      %v858 = vpop.f32.mrb[0].mxu0
      %v859 = vadd.f32 0.0, %v858
      %v860 = vpop.f32.mrb[0].mxu0
      %v861 = vpop.f32.mrb[0].mxu0
      %v862 = vadd.f32 0.0, %v861
      %v863 = vpop.f32.mrb[0].mxu0
      %864 = vmatprep.mubr.bf16.mxu0 0
      %865 = vmatmul.mubr.bf16.gmra.mrb[0].mxu0 %v736
      %v866 = vpop.f32.mrb[0].mxu0
      %v867 = vadd.f32 0.0, %v866
      %v868 = vpop.f32.mrb[0].mxu0
      %v869 = vpop.f32.mrb[0].mxu0
      %v870 = vadd.f32 0.0, %v869
      %v871 = vpop.f32.mrb[0].mxu0
      %872 = vmatprep.mubr.bf16.mxu0 0
      %873 = vmatmul.mubr.bf16.gmra.mrb[0].mxu0 %v739
      %v874 = vpop.f32.mrb[0].mxu0
      %v875 = vadd.f32 0.0, %v874
      %v876 = vpop.f32.mrb[0].mxu0
      %v877 = vpop.f32.mrb[0].mxu0
      %v878 = vadd.f32 0.0, %v877
      %v879 = vpop.f32.mrb[0].mxu0
      %880 = vmatprep.mubr.bf16.mxu0 0
      %881 = vmatmul.mubr.bf16.gmra.mrb[0].mxu0 %v742
      %v882 = vpop.f32.mrb[0].mxu0
      %v883 = vadd.f32 0.0, %v882
      %v884 = vpop.f32.mrb[0].mxu0
      %v885 = vpop.f32.mrb[0].mxu0
      %v886 = vadd.f32 0.0, %v885
      %v887 = vpop.f32.mrb[0].mxu0
      %888 = vmatprep.mubr.bf16.mxu0 0
      %889 = vmatmul.mubr.bf16.gmra.mrb[0].mxu0 %v745
      %v890 = vpop.f32.mrb[0].mxu0
      %v891 = vadd.f32 0.0, %v890
      %v892 = vpop.f32.mrb[0].mxu0
      %v893 = vpop.f32.mrb[0].mxu0
      %v894 = vadd.f32 0.0, %v893
      %v895 = vpop.f32.mrb[0].mxu0
      %896 = vmatprep.mubr.bf16.mxu0 0
      %897 = vmatmul.mubr.bf16.gmra.mrb[0].mxu0 %v748
      %v898 = vpop.f32.mrb[0].mxu0
      %v899 = vadd.f32 0.0, %v898
      %v900 = vpop.f32.mrb[0].mxu0
      %v901 = vpop.f32.mrb[0].mxu0
      %v902 = vadd.f32 0.0, %v901
      %v903 = vpop.f32.mrb[0].mxu0
      %904 = vmatprep.mubr.bf16.mxu0 0
      %905 = vmatmul.mubr.bf16.gmra.mrb[0].mxu0 %v751
      %v906 = vpop.f32.mrb[0].mxu0
      %v907 = vadd.f32 0.0, %v906
      %v908 = vpop.f32.mrb[0].mxu0
      %v909 = vpop.f32.mrb[0].mxu0
      %v910 = vadd.f32 0.0, %v909
      %v911 = vpop.f32.mrb[0].mxu0
      %912 = vmatprep.mubr.bf16.mxu0 0
      %913 = vmatmul.mubr.bf16.gmra.mrb[0].mxu0 %v754
      %v914 = vpop.f32.mrb[0].mxu0
      %v915 = vadd.f32 0.0, %v914
      %v916 = vpop.f32.mrb[0].mxu0
      %v917 = vpop.f32.mrb[0].mxu0
      %v918 = vadd.f32 0.0, %v917
      %v919 = vpop.f32.mrb[0].mxu0
      %920 = vmatprep.mubr.bf16.mxu0 0
      %921 = vmatmul.mubr.bf16.gmra.mrb[0].mxu0 %v757
      %v922 = vpop.f32.mrb[0].mxu0
      %v923 = vadd.f32 0.0, %v922
      %v924 = vpop.f32.mrb[0].mxu0
      %v925 = vpop.f32.mrb[0].mxu0
      %v926 = vadd.f32 0.0, %v925
      %v927 = vpop.f32.mrb[0].mxu0
      %928 = vmatprep.mubr.bf16.mxu0 0
      %929 = vmatmul.mubr.bf16.gmra.mrb[0].mxu0 %v760
      %v930 = vpop.f32.mrb[0].mxu0
      %v931 = vadd.f32 0.0, %v930
      %v932 = vpop.f32.mrb[0].mxu0
      %v933 = vpop.f32.mrb[0].mxu0
      %v934 = vadd.f32 0.0, %v933
      %v935 = vpop.f32.mrb[0].mxu0
      %936 = vmatprep.mubr.bf16.mxu0 0
      %937 = vmatmul.mubr.bf16.gmra.mrb[0].mxu0 %v763
      %v938 = vpop.f32.mrb[0].mxu0
      %v939 = vadd.f32 0.0, %v938
      %v940 = vpop.f32.mrb[0].mxu0
      %v941 = vpop.f32.mrb[0].mxu0
      %v942 = vadd.f32 0.0, %v941
      %v943 = vpop.f32.mrb[0].mxu0
      %944 = vdwg.mxu0
      %v945 = vld [vmem:[#allocation3] sm:$0xff]
      %v946 = vld [vmem:[#allocation3 + $0x8] sm:$0xff]
      %v947 = vld [vmem:[#allocation3 + $0x10] sm:$0xff]
      %v948 = vld [vmem:[#allocation3 + $0x18] sm:$0xff]
      %v949 = vld [vmem:[#allocation3 + $0x20] sm:$0xff]
      %v950 = vld [vmem:[#allocation3 + $0x28] sm:$0xff]
      %v951 = vld [vmem:[#allocation3 + $0x30] sm:$0xff]
      %v952 = vld [vmem:[#allocation3 + $0x38] sm:$0xff]
      %v953 = vld [vmem:[#allocation3 + $0x40] sm:$0xff]
      %v954 = vld [vmem:[#allocation3 + $0x48] sm:$0xff]
      %v955 = vld [vmem:[#allocation3 + $0x50] sm:$0xff]
      %v956 = vld [vmem:[#allocation3 + $0x58] sm:$0xff]
      %v957 = vld [vmem:[#allocation3 + $0x60] sm:$0xff]
      %v958 = vld [vmem:[#allocation3 + $0x68] sm:$0xff]
      %v959 = vld [vmem:[#allocation3 + $0x70] sm:$0xff]
      %v960 = vld [vmem:[#allocation3 + $0x78] sm:$0xff]
      %v961 = vld [vmem:[#allocation3 + $0x80] sm:$0xff]
      %v962 = vld [vmem:[#allocation3 + $0x88] sm:$0xff]
      %v963 = vld [vmem:[#allocation3 + $0x90] sm:$0xff]
      %v964 = vld [vmem:[#allocation3 + $0x98] sm:$0xff]
      %v965 = vld [vmem:[#allocation3 + $0xa0] sm:$0xff]
      %v966 = vld [vmem:[#allocation3 + $0xa8] sm:$0xff]
      %v967 = vld [vmem:[#allocation3 + $0xb0] sm:$0xff]
      %v968 = vld [vmem:[#allocation3 + $0xb8] sm:$0xff]
      %v969 = vld [vmem:[#allocation3 + $0xc0] sm:$0xff]
      %v970 = vld [vmem:[#allocation3 + $0xc8] sm:$0xff]
      %v971 = vld [vmem:[#allocation3 + $0xd0] sm:$0xff]
      %v972 = vld [vmem:[#allocation3 + $0xd8] sm:$0xff]
      %v973 = vld [vmem:[#allocation3 + $0xe0] sm:$0xff]
      %v974 = vld [vmem:[#allocation3 + $0xe8] sm:$0xff]
      %v975 = vld [vmem:[#allocation3 + $0xf0] sm:$0xff]
      %v976 = vld [vmem:[#allocation3 + $0xf8] sm:$0xff]
      %v977 = vld [vmem:[#allocation3 + $0x100] sm:$0xff]
      %v978 = vld [vmem:[#allocation3 + $0x108] sm:$0xff]
      %v979 = vld [vmem:[#allocation3 + $0x110] sm:$0xff]
      %v980 = vld [vmem:[#allocation3 + $0x118] sm:$0xff]
      %v981 = vadd.f32 %v945, %v803
      %v982 = vadd.f32 %v946, %v806
      %v983 = vadd.f32 %v947, %v811
      %v984 = vadd.f32 %v948, %v814
      %v985 = vadd.f32 %v949, %v819
      %v986 = vadd.f32 %v950, %v822
      %v987 = vadd.f32 %v951, %v827
      %v988 = vadd.f32 %v952, %v830
      %v989 = vadd.f32 %v953, %v835
      %v990 = vadd.f32 %v954, %v838
      %v991 = vadd.f32 %v955, %v843
      %v992 = vadd.f32 %v956, %v846
      %v993 = vadd.f32 %v957, %v851
      %v994 = vadd.f32 %v958, %v854
      %v995 = vadd.f32 %v959, %v859
      %v996 = vadd.f32 %v960, %v862
      %v997 = vadd.f32 %v961, %v867
      %v998 = vadd.f32 %v962, %v870
      %v999 = vadd.f32 %v963, %v875
      %v1000 = vadd.f32 %v964, %v878
      %v1001 = vadd.f32 %v965, %v883
      %v1002 = vadd.f32 %v966, %v886
      %v1003 = vadd.f32 %v967, %v891
      %v1004 = vadd.f32 %v968, %v894
      %v1005 = vadd.f32 %v969, %v899
      %v1006 = vadd.f32 %v970, %v902
      %v1007 = vadd.f32 %v971, %v907
      %v1008 = vadd.f32 %v972, %v910
      %v1009 = vadd.f32 %v973, %v915
      %v1010 = vadd.f32 %v974, %v918
      %v1011 = vadd.f32 %v975, %v923
      %v1012 = vadd.f32 %v976, %v926
      %v1013 = vadd.f32 %v977, %v931
      %v1014 = vadd.f32 %v978, %v934
      %v1015 = vadd.f32 %v979, %v939
      %v1016 = vadd.f32 %v980, %v942
      %1017 = vst.msk [vmem:[#allocation3] sm:$0xff] %vm618, %v981
      %1018 = vst.msk [vmem:[#allocation3 + $0x8] sm:$0xff] %vm618, %v982
      %1019 = vst.msk [vmem:[#allocation3 + $0x10] sm:$0xff] %vm618, %v983
      %1020 = vst.msk [vmem:[#allocation3 + $0x18] sm:$0xff] %vm618, %v984
      %1021 = vst.msk [vmem:[#allocation3 + $0x20] sm:$0xff] %vm618, %v985
      %1022 = vst.msk [vmem:[#allocation3 + $0x28] sm:$0xff] %vm618, %v986
      %1023 = vst.msk [vmem:[#allocation3 + $0x30] sm:$0xff] %vm618, %v987
      %1024 = vst.msk [vmem:[#allocation3 + $0x38] sm:$0xff] %vm618, %v988
      %1025 = vst.msk [vmem:[#allocation3 + $0x40] sm:$0xff] %vm618, %v989
      %1026 = vst.msk [vmem:[#allocation3 + $0x48] sm:$0xff] %vm618, %v990
      %1027 = vst.msk [vmem:[#allocation3 + $0x50] sm:$0xff] %vm618, %v991
      %1028 = vst.msk [vmem:[#allocation3 + $0x58] sm:$0xff] %vm618, %v992
      %1029 = vst.msk [vmem:[#allocation3 + $0x60] sm:$0xff] %vm618, %v993
      %1030 = vst.msk [vmem:[#allocation3 + $0x68] sm:$0xff] %vm618, %v994
      %1031 = vst.msk [vmem:[#allocation3 + $0x70] sm:$0xff] %vm618, %v995
      %1032 = vst.msk [vmem:[#allocation3 + $0x78] sm:$0xff] %vm618, %v996
      %1033 = vst.msk [vmem:[#allocation3 + $0x80] sm:$0xff] %vm618, %v997
      %1034 = vst.msk [vmem:[#allocation3 + $0x88] sm:$0xff] %vm618, %v998
      %1035 = vst.msk [vmem:[#allocation3 + $0x90] sm:$0xff] %vm618, %v999
      %1036 = vst.msk [vmem:[#allocation3 + $0x98] sm:$0xff] %vm618, %v1000
      %1037 = vst.msk [vmem:[#allocation3 + $0xa0] sm:$0xff] %vm618, %v1001
      %1038 = vst.msk [vmem:[#allocation3 + $0xa8] sm:$0xff] %vm618, %v1002
      %1039 = vst.msk [vmem:[#allocation3 + $0xb0] sm:$0xff] %vm618, %v1003
      %1040 = vst.msk [vmem:[#allocation3 + $0xb8] sm:$0xff] %vm618, %v1004
      %1041 = vst.msk [vmem:[#allocation3 + $0xc0] sm:$0xff] %vm618, %v1005
      %1042 = vst.msk [vmem:[#allocation3 + $0xc8] sm:$0xff] %vm618, %v1006
      %1043 = vst.msk [vmem:[#allocation3 + $0xd0] sm:$0xff] %vm618, %v1007
      %1044 = vst.msk [vmem:[#allocation3 + $0xd8] sm:$0xff] %vm618, %v1008
      %1045 = vst.msk [vmem:[#allocation3 + $0xe0] sm:$0xff] %vm618, %v1009
      %1046 = vst.msk [vmem:[#allocation3 + $0xe8] sm:$0xff] %vm618, %v1010
      %1047 = vst.msk [vmem:[#allocation3 + $0xf0] sm:$0xff] %vm618, %v1011
      %1048 = vst.msk [vmem:[#allocation3 + $0xf8] sm:$0xff] %vm618, %v1012
      %1049 = vst.msk [vmem:[#allocation3 + $0x100] sm:$0xff] %vm618, %v1013
      %1050 = vst.msk [vmem:[#allocation3 + $0x108] sm:$0xff] %vm618, %v1014
      %1051 = vst.msk [vmem:[#allocation3 + $0x110] sm:$0xff] %vm618, %v1015
      %1052 = vst.msk [vmem:[#allocation3 + $0x118] sm:$0xff] %vm618, %v1016
      %v1053 = vld [vmem:[#allocation2 + $0x2] sm:$0xff]
      %v1054 = vld [vmem:[#allocation2 + $0xa] sm:$0xff]
      %v1055 = vld [vmem:[#allocation2 + $0x12] sm:$0xff]
      %v1056 = vld [vmem:[#allocation2 + $0x1a] sm:$0xff]
      %v1057 = vld [vmem:[#allocation2 + $0x22] sm:$0xff]
      %v1058 = vld [vmem:[#allocation2 + $0x2a] sm:$0xff]
      %v1059 = vld [vmem:[#allocation2 + $0x32] sm:$0xff]
      %v1060 = vld [vmem:[#allocation2 + $0x3a] sm:$0xff]
      %v1061 = vld [vmem:[#allocation2 + $0x42] sm:$0xff]
      %v1062 = vld [vmem:[#allocation2 + $0x4a] sm:$0xff]
      %v1063 = vld [vmem:[#allocation2 + $0x52] sm:$0xff]
      %v1064 = vld [vmem:[#allocation2 + $0x5a] sm:$0xff]
      %v1065 = vld [vmem:[#allocation2 + $0x62] sm:$0xff]
      %v1066 = vld [vmem:[#allocation2 + $0x6a] sm:$0xff]
      %v1067 = vld [vmem:[#allocation2 + $0x72] sm:$0xff]
      %v1068 = vld [vmem:[#allocation2 + $0x7a] sm:$0xff]
      %v1069 = vld [vmem:[#allocation2 + $0x82] sm:$0xff]
      %v1070 = vld [vmem:[#allocation2 + $0x8a] sm:$0xff]
      %v1071 = vld [vmem:[#allocation2 + $0x92] sm:$0xff]
      %v1072 = vld [vmem:[#allocation2 + $0x9a] sm:$0xff]
      %v1073 = vld [vmem:[#allocation2 + $0xa2] sm:$0xff]
      %v1074 = vld [vmem:[#allocation2 + $0xaa] sm:$0xff]
      %v1075 = vld [vmem:[#allocation2 + $0xb2] sm:$0xff]
      %v1076 = vld [vmem:[#allocation2 + $0xba] sm:$0xff]
      %v1077 = vld [vmem:[#allocation2 + $0xc2] sm:$0xff]
      %v1078 = vld [vmem:[#allocation2 + $0xca] sm:$0xff]
      %v1079 = vld [vmem:[#allocation2 + $0xd2] sm:$0xff]
      %v1080 = vld [vmem:[#allocation2 + $0xda] sm:$0xff]
      %v1081 = vld [vmem:[#allocation2 + $0xe2] sm:$0xff]
      %v1082 = vld [vmem:[#allocation2 + $0xea] sm:$0xff]
      %v1083 = vld [vmem:[#allocation2 + $0xf2] sm:$0xff]
      %v1084 = vld [vmem:[#allocation2 + $0xfa] sm:$0xff]
      %v1085 = vld [vmem:[#allocation2 + $0x102] sm:$0xff]
      %v1086 = vld [vmem:[#allocation2 + $0x10a] sm:$0xff]
      %v1087 = vld [vmem:[#allocation2 + $0x112] sm:$0xff]
      %v1088 = vld [vmem:[#allocation2 + $0x11a] sm:$0xff]
      %v1089 = vpack.c.bf16 %v1054, %v1053
      %v1090 = vpack.c.bf16 %v1056, %v1055
      %v1091 = vpack.c.bf16 %v1058, %v1057
      %v1092 = vpack.c.bf16 %v1060, %v1059
      %v1093 = vpack.c.bf16 %v1062, %v1061
      %v1094 = vpack.c.bf16 %v1064, %v1063
      %v1095 = vpack.c.bf16 %v1066, %v1065
      %v1096 = vpack.c.bf16 %v1068, %v1067
      %v1097 = vpack.c.bf16 %v1070, %v1069
      %v1098 = vpack.c.bf16 %v1072, %v1071
      %v1099 = vpack.c.bf16 %v1074, %v1073
      %v1100 = vpack.c.bf16 %v1076, %v1075
      %v1101 = vpack.c.bf16 %v1078, %v1077
      %v1102 = vpack.c.bf16 %v1080, %v1079
      %v1103 = vpack.c.bf16 %v1082, %v1081
      %v1104 = vpack.c.bf16 %v1084, %v1083
      %v1105 = vpack.c.bf16 %v1086, %v1085
      %v1106 = vpack.c.bf16 %v1088, %v1087
      %s1107 = scalar_lea.vmem %s1, 4
      %v1108 = vld [vmem:[%s1107] sm:$0x3]
      %v1110 = vsel %vm172, %v1089, 0
      %v1113 = vsel %vm172, %v1090, 0
      %v1116 = vsel %vm172, %v1091, 0
      %v1119 = vsel %vm172, %v1092, 0
      %v1122 = vsel %vm172, %v1093, 0
      %v1125 = vsel %vm172, %v1094, 0
      %v1128 = vsel %vm172, %v1095, 0
      %v1131 = vsel %vm172, %v1096, 0
      %v1134 = vsel %vm172, %v1097, 0
      %v1137 = vsel %vm172, %v1098, 0
      %v1140 = vsel %vm172, %v1099, 0
      %v1143 = vsel %vm172, %v1100, 0
      %v1146 = vsel %vm172, %v1101, 0
      %v1149 = vsel %vm172, %v1102, 0
      %v1152 = vsel %vm172, %v1103, 0
      %v1155 = vsel %vm172, %v1104, 0
      %v1158 = vsel %vm172, %v1105, 0
      %v1161 = vsel %vm172, %v1106, 0
      %v1164 = vsel %vm437, %v1108, 0
      %1166 = vmatprep.subr.bf16.mxu0 0
      %1167 = vmatpush1.bf16.msra.mxu0 %v1164
      %1168 = vmatprep.subr.bf16.mxu0 0
      %1169 = vmatpush1.bf16.msra.mxu0 0
      %1170 = vmatprep.subr.bf16.mxu0 0
      %1171 = vmatpush1.bf16.msra.mxu0 0
      %1172 = vmatprep.subr.bf16.mxu0 0
      %1173 = vmatpush1.bf16.msra.mxu0 0
      %1174 = vmatprep.subr.bf16.mxu0 0
      %1175 = vmatpush1.bf16.msra.mxu0 0
      %1176 = vmatprep.subr.bf16.mxu0 0
      %1177 = vmatpush1.bf16.msra.mxu0 0
      %1178 = vmatprep.subr.bf16.mxu0 0
      %1179 = vmatpush1.bf16.msra.mxu0 0
      %1180 = vmatprep.subr.bf16.mxu0 0
      %1181 = vmatpush1.bf16.msra.mxu0 0
      %1182 = vmatprep.subr.bf16.mxu0 0
      %1183 = vmatpush1.bf16.msra.mxu0 0
      %1184 = vmatprep.subr.bf16.mxu0 0
      %1185 = vmatpush1.bf16.msra.mxu0 0
      %1186 = vmatprep.subr.bf16.mxu0 0
      %1187 = vmatpush1.bf16.msra.mxu0 0
      %1188 = vmatprep.subr.bf16.mxu0 0
      %1189 = vmatpush1.bf16.msra.mxu0 0
      %1190 = vmatprep.subr.bf16.mxu0 0
      %1191 = vmatpush1.bf16.msra.mxu0 0
      %1192 = vmatprep.subr.bf16.mxu0 0
      %1193 = vmatpush1.bf16.msra.mxu0 0
      %1194 = vmatprep.subr.bf16.mxu0 0
      %1195 = vmatpush1.bf16.msra.mxu0 0
      %1196 = vmatprep.subr.bf16.mxu0 0
      %1197 = vmatpush1.bf16.msra.mxu0 0
      %1198 = vmatprep.mubr.bf16.mxu0 0
      %1199 = vmatmul.mubr.bf16.gmra.mrb[0].mxu0 %v1110
      %v1200 = vpop.f32.mrb[0].mxu0
      %v1201 = vadd.f32 0.0, %v1200
      %v1202 = vpop.f32.mrb[0].mxu0
      %v1203 = vpop.f32.mrb[0].mxu0
      %v1204 = vadd.f32 0.0, %v1203
      %v1205 = vpop.f32.mrb[0].mxu0
      %1206 = vmatprep.mubr.bf16.mxu0 0
      %1207 = vmatmul.mubr.bf16.gmra.mrb[0].mxu0 %v1113
      %v1208 = vpop.f32.mrb[0].mxu0
      %v1209 = vadd.f32 0.0, %v1208
      %v1210 = vpop.f32.mrb[0].mxu0
      %v1211 = vpop.f32.mrb[0].mxu0
      %v1212 = vadd.f32 0.0, %v1211
      %v1213 = vpop.f32.mrb[0].mxu0
      %1214 = vmatprep.mubr.bf16.mxu0 0
      %1215 = vmatmul.mubr.bf16.gmra.mrb[0].mxu0 %v1116
      %v1216 = vpop.f32.mrb[0].mxu0
      %v1217 = vadd.f32 0.0, %v1216
      %v1218 = vpop.f32.mrb[0].mxu0
      %v1219 = vpop.f32.mrb[0].mxu0
      %v1220 = vadd.f32 0.0, %v1219
      %v1221 = vpop.f32.mrb[0].mxu0
      %1222 = vmatprep.mubr.bf16.mxu0 0
      %1223 = vmatmul.mubr.bf16.gmra.mrb[0].mxu0 %v1119
      %v1224 = vpop.f32.mrb[0].mxu0
      %v1225 = vadd.f32 0.0, %v1224
      %v1226 = vpop.f32.mrb[0].mxu0
      %v1227 = vpop.f32.mrb[0].mxu0
      %v1228 = vadd.f32 0.0, %v1227
      %v1229 = vpop.f32.mrb[0].mxu0
      %1230 = vmatprep.mubr.bf16.mxu0 0
      %1231 = vmatmul.mubr.bf16.gmra.mrb[0].mxu0 %v1122
      %v1232 = vpop.f32.mrb[0].mxu0
      %v1233 = vadd.f32 0.0, %v1232
      %v1234 = vpop.f32.mrb[0].mxu0
      %v1235 = vpop.f32.mrb[0].mxu0
      %v1236 = vadd.f32 0.0, %v1235
      %v1237 = vpop.f32.mrb[0].mxu0
      %1238 = vmatprep.mubr.bf16.mxu0 0
      %1239 = vmatmul.mubr.bf16.gmra.mrb[0].mxu0 %v1125
      %v1240 = vpop.f32.mrb[0].mxu0
      %v1241 = vadd.f32 0.0, %v1240
      %v1242 = vpop.f32.mrb[0].mxu0
      %v1243 = vpop.f32.mrb[0].mxu0
      %v1244 = vadd.f32 0.0, %v1243
      %v1245 = vpop.f32.mrb[0].mxu0
      %1246 = vmatprep.mubr.bf16.mxu0 0
      %1247 = vmatmul.mubr.bf16.gmra.mrb[0].mxu0 %v1128
      %v1248 = vpop.f32.mrb[0].mxu0
      %v1249 = vadd.f32 0.0, %v1248
      %v1250 = vpop.f32.mrb[0].mxu0
      %v1251 = vpop.f32.mrb[0].mxu0
      %v1252 = vadd.f32 0.0, %v1251
      %v1253 = vpop.f32.mrb[0].mxu0
      %1254 = vmatprep.mubr.bf16.mxu0 0
      %1255 = vmatmul.mubr.bf16.gmra.mrb[0].mxu0 %v1131
      %v1256 = vpop.f32.mrb[0].mxu0
      %v1257 = vadd.f32 0.0, %v1256
      %v1258 = vpop.f32.mrb[0].mxu0
      %v1259 = vpop.f32.mrb[0].mxu0
      %v1260 = vadd.f32 0.0, %v1259
      %v1261 = vpop.f32.mrb[0].mxu0
      %1262 = vmatprep.mubr.bf16.mxu0 0
      %1263 = vmatmul.mubr.bf16.gmra.mrb[0].mxu0 %v1134
      %v1264 = vpop.f32.mrb[0].mxu0
      %v1265 = vadd.f32 0.0, %v1264
      %v1266 = vpop.f32.mrb[0].mxu0
      %v1267 = vpop.f32.mrb[0].mxu0
      %v1268 = vadd.f32 0.0, %v1267
      %v1269 = vpop.f32.mrb[0].mxu0
      %1270 = vmatprep.mubr.bf16.mxu0 0
      %1271 = vmatmul.mubr.bf16.gmra.mrb[0].mxu0 %v1137
      %v1272 = vpop.f32.mrb[0].mxu0
      %v1273 = vadd.f32 0.0, %v1272
      %v1274 = vpop.f32.mrb[0].mxu0
      %v1275 = vpop.f32.mrb[0].mxu0
      %v1276 = vadd.f32 0.0, %v1275
      %v1277 = vpop.f32.mrb[0].mxu0
      %1278 = vmatprep.mubr.bf16.mxu0 0
      %1279 = vmatmul.mubr.bf16.gmra.mrb[0].mxu0 %v1140
      %v1280 = vpop.f32.mrb[0].mxu0
      %v1281 = vadd.f32 0.0, %v1280
      %v1282 = vpop.f32.mrb[0].mxu0
      %v1283 = vpop.f32.mrb[0].mxu0
      %v1284 = vadd.f32 0.0, %v1283
      %v1285 = vpop.f32.mrb[0].mxu0
      %1286 = vmatprep.mubr.bf16.mxu0 0
      %1287 = vmatmul.mubr.bf16.gmra.mrb[0].mxu0 %v1143
      %v1288 = vpop.f32.mrb[0].mxu0
      %v1289 = vadd.f32 0.0, %v1288
      %v1290 = vpop.f32.mrb[0].mxu0
      %v1291 = vpop.f32.mrb[0].mxu0
      %v1292 = vadd.f32 0.0, %v1291
      %v1293 = vpop.f32.mrb[0].mxu0
      %1294 = vmatprep.mubr.bf16.mxu0 0
      %1295 = vmatmul.mubr.bf16.gmra.mrb[0].mxu0 %v1146
      %v1296 = vpop.f32.mrb[0].mxu0
      %v1297 = vadd.f32 0.0, %v1296
      %v1298 = vpop.f32.mrb[0].mxu0
      %v1299 = vpop.f32.mrb[0].mxu0
      %v1300 = vadd.f32 0.0, %v1299
      %v1301 = vpop.f32.mrb[0].mxu0
      %1302 = vmatprep.mubr.bf16.mxu0 0
      %1303 = vmatmul.mubr.bf16.gmra.mrb[0].mxu0 %v1149
      %v1304 = vpop.f32.mrb[0].mxu0
      %v1305 = vadd.f32 0.0, %v1304
      %v1306 = vpop.f32.mrb[0].mxu0
      %v1307 = vpop.f32.mrb[0].mxu0
      %v1308 = vadd.f32 0.0, %v1307
      %v1309 = vpop.f32.mrb[0].mxu0
      %1310 = vmatprep.mubr.bf16.mxu0 0
      %1311 = vmatmul.mubr.bf16.gmra.mrb[0].mxu0 %v1152
      %v1312 = vpop.f32.mrb[0].mxu0
      %v1313 = vadd.f32 0.0, %v1312
      %v1314 = vpop.f32.mrb[0].mxu0
      %v1315 = vpop.f32.mrb[0].mxu0
      %v1316 = vadd.f32 0.0, %v1315
      %v1317 = vpop.f32.mrb[0].mxu0
      %1318 = vmatprep.mubr.bf16.mxu0 0
      %1319 = vmatmul.mubr.bf16.gmra.mrb[0].mxu0 %v1155
      %v1320 = vpop.f32.mrb[0].mxu0
      %v1321 = vadd.f32 0.0, %v1320
      %v1322 = vpop.f32.mrb[0].mxu0
      %v1323 = vpop.f32.mrb[0].mxu0
      %v1324 = vadd.f32 0.0, %v1323
      %v1325 = vpop.f32.mrb[0].mxu0
      %1326 = vmatprep.mubr.bf16.mxu0 0
      %1327 = vmatmul.mubr.bf16.gmra.mrb[0].mxu0 %v1158
      %v1328 = vpop.f32.mrb[0].mxu0
      %v1329 = vadd.f32 0.0, %v1328
      %v1330 = vpop.f32.mrb[0].mxu0
      %v1331 = vpop.f32.mrb[0].mxu0
      %v1332 = vadd.f32 0.0, %v1331
      %v1333 = vpop.f32.mrb[0].mxu0
      %1334 = vmatprep.mubr.bf16.mxu0 0
      %1335 = vmatmul.mubr.bf16.gmra.mrb[0].mxu0 %v1161
      %v1336 = vpop.f32.mrb[0].mxu0
      %v1337 = vadd.f32 0.0, %v1336
      %v1338 = vpop.f32.mrb[0].mxu0
      %v1339 = vpop.f32.mrb[0].mxu0
      %v1340 = vadd.f32 0.0, %v1339
      %v1341 = vpop.f32.mrb[0].mxu0
      %1342 = vdwg.mxu0
      %v1343 = vld [vmem:[#allocation3] sm:$0xff]
      %v1344 = vld [vmem:[#allocation3 + $0x8] sm:$0xff]
      %v1345 = vld [vmem:[#allocation3 + $0x10] sm:$0xff]
      %v1346 = vld [vmem:[#allocation3 + $0x18] sm:$0xff]
      %v1347 = vld [vmem:[#allocation3 + $0x20] sm:$0xff]
      %v1348 = vld [vmem:[#allocation3 + $0x28] sm:$0xff]
      %v1349 = vld [vmem:[#allocation3 + $0x30] sm:$0xff]
      %v1350 = vld [vmem:[#allocation3 + $0x38] sm:$0xff]
      %v1351 = vld [vmem:[#allocation3 + $0x40] sm:$0xff]
      %v1352 = vld [vmem:[#allocation3 + $0x48] sm:$0xff]
      %v1353 = vld [vmem:[#allocation3 + $0x50] sm:$0xff]
      %v1354 = vld [vmem:[#allocation3 + $0x58] sm:$0xff]
      %v1355 = vld [vmem:[#allocation3 + $0x60] sm:$0xff]
      %v1356 = vld [vmem:[#allocation3 + $0x68] sm:$0xff]
      %v1357 = vld [vmem:[#allocation3 + $0x70] sm:$0xff]
      %v1358 = vld [vmem:[#allocation3 + $0x78] sm:$0xff]
      %v1359 = vld [vmem:[#allocation3 + $0x80] sm:$0xff]
      %v1360 = vld [vmem:[#allocation3 + $0x88] sm:$0xff]
      %v1361 = vld [vmem:[#allocation3 + $0x90] sm:$0xff]
      %v1362 = vld [vmem:[#allocation3 + $0x98] sm:$0xff]
      %v1363 = vld [vmem:[#allocation3 + $0xa0] sm:$0xff]
      %v1364 = vld [vmem:[#allocation3 + $0xa8] sm:$0xff]
      %v1365 = vld [vmem:[#allocation3 + $0xb0] sm:$0xff]
      %v1366 = vld [vmem:[#allocation3 + $0xb8] sm:$0xff]
      %v1367 = vld [vmem:[#allocation3 + $0xc0] sm:$0xff]
      %v1368 = vld [vmem:[#allocation3 + $0xc8] sm:$0xff]
      %v1369 = vld [vmem:[#allocation3 + $0xd0] sm:$0xff]
      %v1370 = vld [vmem:[#allocation3 + $0xd8] sm:$0xff]
      %v1371 = vld [vmem:[#allocation3 + $0xe0] sm:$0xff]
      %v1372 = vld [vmem:[#allocation3 + $0xe8] sm:$0xff]
      %v1373 = vld [vmem:[#allocation3 + $0xf0] sm:$0xff]
      %v1374 = vld [vmem:[#allocation3 + $0xf8] sm:$0xff]
      %v1375 = vld [vmem:[#allocation3 + $0x100] sm:$0xff]
      %v1376 = vld [vmem:[#allocation3 + $0x108] sm:$0xff]
      %v1377 = vld [vmem:[#allocation3 + $0x110] sm:$0xff]
      %v1378 = vld [vmem:[#allocation3 + $0x118] sm:$0xff]
      %v1379 = vadd.f32 %v1343, %v1201
      %v1380 = vadd.f32 %v1344, %v1204
      %v1381 = vadd.f32 %v1345, %v1209
      %v1382 = vadd.f32 %v1346, %v1212
      %v1383 = vadd.f32 %v1347, %v1217
      %v1384 = vadd.f32 %v1348, %v1220
      %v1385 = vadd.f32 %v1349, %v1225
      %v1386 = vadd.f32 %v1350, %v1228
      %v1387 = vadd.f32 %v1351, %v1233
      %v1388 = vadd.f32 %v1352, %v1236
      %v1389 = vadd.f32 %v1353, %v1241
      %v1390 = vadd.f32 %v1354, %v1244
      %v1391 = vadd.f32 %v1355, %v1249
      %v1392 = vadd.f32 %v1356, %v1252
      %v1393 = vadd.f32 %v1357, %v1257
      %v1394 = vadd.f32 %v1358, %v1260
      %v1395 = vadd.f32 %v1359, %v1265
      %v1396 = vadd.f32 %v1360, %v1268
      %v1397 = vadd.f32 %v1361, %v1273
      %v1398 = vadd.f32 %v1362, %v1276
      %v1399 = vadd.f32 %v1363, %v1281
      %v1400 = vadd.f32 %v1364, %v1284
      %v1401 = vadd.f32 %v1365, %v1289
      %v1402 = vadd.f32 %v1366, %v1292
      %v1403 = vadd.f32 %v1367, %v1297
      %v1404 = vadd.f32 %v1368, %v1300
      %v1405 = vadd.f32 %v1369, %v1305
      %v1406 = vadd.f32 %v1370, %v1308
      %v1407 = vadd.f32 %v1371, %v1313
      %v1408 = vadd.f32 %v1372, %v1316
      %v1409 = vadd.f32 %v1373, %v1321
      %v1410 = vadd.f32 %v1374, %v1324
      %v1411 = vadd.f32 %v1375, %v1329
      %v1412 = vadd.f32 %v1376, %v1332
      %v1413 = vadd.f32 %v1377, %v1337
      %v1414 = vadd.f32 %v1378, %v1340
      %1415 = vst.msk [vmem:[#allocation3] sm:$0xff] %vm618, %v1379
      %1416 = vst.msk [vmem:[#allocation3 + $0x8] sm:$0xff] %vm618, %v1380
      %1417 = vst.msk [vmem:[#allocation3 + $0x10] sm:$0xff] %vm618, %v1381
      %1418 = vst.msk [vmem:[#allocation3 + $0x18] sm:$0xff] %vm618, %v1382
      %1419 = vst.msk [vmem:[#allocation3 + $0x20] sm:$0xff] %vm618, %v1383
      %1420 = vst.msk [vmem:[#allocation3 + $0x28] sm:$0xff] %vm618, %v1384
      %1421 = vst.msk [vmem:[#allocation3 + $0x30] sm:$0xff] %vm618, %v1385
      %1422 = vst.msk [vmem:[#allocation3 + $0x38] sm:$0xff] %vm618, %v1386
      %1423 = vst.msk [vmem:[#allocation3 + $0x40] sm:$0xff] %vm618, %v1387
      %1424 = vst.msk [vmem:[#allocation3 + $0x48] sm:$0xff] %vm618, %v1388
      %1425 = vst.msk [vmem:[#allocation3 + $0x50] sm:$0xff] %vm618, %v1389
      %1426 = vst.msk [vmem:[#allocation3 + $0x58] sm:$0xff] %vm618, %v1390
      %1427 = vst.msk [vmem:[#allocation3 + $0x60] sm:$0xff] %vm618, %v1391
      %1428 = vst.msk [vmem:[#allocation3 + $0x68] sm:$0xff] %vm618, %v1392
      %1429 = vst.msk [vmem:[#allocation3 + $0x70] sm:$0xff] %vm618, %v1393
      %1430 = vst.msk [vmem:[#allocation3 + $0x78] sm:$0xff] %vm618, %v1394
      %1431 = vst.msk [vmem:[#allocation3 + $0x80] sm:$0xff] %vm618, %v1395
      %1432 = vst.msk [vmem:[#allocation3 + $0x88] sm:$0xff] %vm618, %v1396
      %1433 = vst.msk [vmem:[#allocation3 + $0x90] sm:$0xff] %vm618, %v1397
      %1434 = vst.msk [vmem:[#allocation3 + $0x98] sm:$0xff] %vm618, %v1398
      %1435 = vst.msk [vmem:[#allocation3 + $0xa0] sm:$0xff] %vm618, %v1399
      %1436 = vst.msk [vmem:[#allocation3 + $0xa8] sm:$0xff] %vm618, %v1400
      %1437 = vst.msk [vmem:[#allocation3 + $0xb0] sm:$0xff] %vm618, %v1401
      %1438 = vst.msk [vmem:[#allocation3 + $0xb8] sm:$0xff] %vm618, %v1402
      %1439 = vst.msk [vmem:[#allocation3 + $0xc0] sm:$0xff] %vm618, %v1403
      %1440 = vst.msk [vmem:[#allocation3 + $0xc8] sm:$0xff] %vm618, %v1404
      %1441 = vst.msk [vmem:[#allocation3 + $0xd0] sm:$0xff] %vm618, %v1405
      %1442 = vst.msk [vmem:[#allocation3 + $0xd8] sm:$0xff] %vm618, %v1406
      %1443 = vst.msk [vmem:[#allocation3 + $0xe0] sm:$0xff] %vm618, %v1407
      %1444 = vst.msk [vmem:[#allocation3 + $0xe8] sm:$0xff] %vm618, %v1408
      %1445 = vst.msk [vmem:[#allocation3 + $0xf0] sm:$0xff] %vm618, %v1409
      %1446 = vst.msk [vmem:[#allocation3 + $0xf8] sm:$0xff] %vm618, %v1410
      %1447 = vst.msk [vmem:[#allocation3 + $0x100] sm:$0xff] %vm618, %v1411
      %1448 = vst.msk [vmem:[#allocation3 + $0x108] sm:$0xff] %vm618, %v1412
      %1449 = vst.msk [vmem:[#allocation3 + $0x110] sm:$0xff] %vm618, %v1413
      %1450 = vst.msk [vmem:[#allocation3 + $0x118] sm:$0xff] %vm618, %v1414
      %v1451 = vld [vmem:[#allocation2 + $0x12] sm:$0xff]
      %v1452 = vld [vmem:[#allocation2 + $0x1a] sm:$0xff]
      %v1453 = vld [vmem:[#allocation2 + $0x22] sm:$0xff]
      %v1454 = vld [vmem:[#allocation2 + $0x2a] sm:$0xff]
      %v1455 = vld [vmem:[#allocation2 + $0x32] sm:$0xff]
      %v1456 = vld [vmem:[#allocation2 + $0x3a] sm:$0xff]
      %v1457 = vld [vmem:[#allocation2 + $0x42] sm:$0xff]
      %v1458 = vld [vmem:[#allocation2 + $0x4a] sm:$0xff]
      %v1459 = vld [vmem:[#allocation2 + $0x52] sm:$0xff]
      %v1460 = vld [vmem:[#allocation2 + $0x5a] sm:$0xff]
      %v1461 = vld [vmem:[#allocation2 + $0x62] sm:$0xff]
      %v1462 = vld [vmem:[#allocation2 + $0x6a] sm:$0xff]
      %v1463 = vld [vmem:[#allocation2 + $0x72] sm:$0xff]
      %v1464 = vld [vmem:[#allocation2 + $0x7a] sm:$0xff]
      %v1465 = vld [vmem:[#allocation2 + $0x82] sm:$0xff]
      %v1466 = vld [vmem:[#allocation2 + $0x8a] sm:$0xff]
      %v1467 = vld [vmem:[#allocation2 + $0x92] sm:$0xff]
      %v1468 = vld [vmem:[#allocation2 + $0x9a] sm:$0xff]
      %v1469 = vld [vmem:[#allocation2 + $0xa2] sm:$0xff]
      %v1470 = vld [vmem:[#allocation2 + $0xaa] sm:$0xff]
      %v1471 = vld [vmem:[#allocation2 + $0xb2] sm:$0xff]
      %v1472 = vld [vmem:[#allocation2 + $0xba] sm:$0xff]
      %v1473 = vld [vmem:[#allocation2 + $0xc2] sm:$0xff]
      %v1474 = vld [vmem:[#allocation2 + $0xca] sm:$0xff]
      %v1475 = vld [vmem:[#allocation2 + $0xd2] sm:$0xff]
      %v1476 = vld [vmem:[#allocation2 + $0xda] sm:$0xff]
      %v1477 = vld [vmem:[#allocation2 + $0xe2] sm:$0xff]
      %v1478 = vld [vmem:[#allocation2 + $0xea] sm:$0xff]
      %v1479 = vld [vmem:[#allocation2 + $0xf2] sm:$0xff]
      %v1480 = vld [vmem:[#allocation2 + $0xfa] sm:$0xff]
      %v1481 = vld [vmem:[#allocation2 + $0x102] sm:$0xff]
      %v1482 = vld [vmem:[#allocation2 + $0x10a] sm:$0xff]
      %v1483 = vld [vmem:[#allocation2 + $0x112] sm:$0xff]
      %v1484 = vld [vmem:[#allocation2 + $0x11a] sm:$0xff]
      %v1485 = vld [vmem:[#allocation2 + $0x122] sm:$0xff]
      %v1486 = vld [vmem:[#allocation2 + $0x12a] sm:$0xff]
      %v1487 = vpack.c.bf16 %v1452, %v1451
      %v1488 = vpack.c.bf16 %v1454, %v1453
      %v1489 = vpack.c.bf16 %v1456, %v1455
      %v1490 = vpack.c.bf16 %v1458, %v1457
      %v1491 = vpack.c.bf16 %v1460, %v1459
      %v1492 = vpack.c.bf16 %v1462, %v1461
      %v1493 = vpack.c.bf16 %v1464, %v1463
      %v1494 = vpack.c.bf16 %v1466, %v1465
      %v1495 = vpack.c.bf16 %v1468, %v1467
      %v1496 = vpack.c.bf16 %v1470, %v1469
      %v1497 = vpack.c.bf16 %v1472, %v1471
      %v1498 = vpack.c.bf16 %v1474, %v1473
      %v1499 = vpack.c.bf16 %v1476, %v1475
      %v1500 = vpack.c.bf16 %v1478, %v1477
      %v1501 = vpack.c.bf16 %v1480, %v1479
      %v1502 = vpack.c.bf16 %v1482, %v1481
      %v1503 = vpack.c.bf16 %v1484, %v1483
      %v1504 = vpack.c.bf16 %v1486, %v1485
      %s1505 = scalar_lea.vmem %s1, 6
      %v1506 = vld [vmem:[%s1505] sm:$0x3]
      %v1508 = vsel %vm172, %v1487, 0
      %v1511 = vsel %vm172, %v1488, 0
      %v1514 = vsel %vm172, %v1489, 0
      %v1517 = vsel %vm172, %v1490, 0
      %v1520 = vsel %vm172, %v1491, 0
      %v1523 = vsel %vm172, %v1492, 0
      %v1526 = vsel %vm172, %v1493, 0
      %v1529 = vsel %vm172, %v1494, 0
      %v1532 = vsel %vm172, %v1495, 0
      %v1535 = vsel %vm172, %v1496, 0
      %v1538 = vsel %vm172, %v1497, 0
      %v1541 = vsel %vm172, %v1498, 0
      %v1544 = vsel %vm172, %v1499, 0
      %v1547 = vsel %vm172, %v1500, 0
      %v1550 = vsel %vm172, %v1501, 0
      %v1553 = vsel %vm172, %v1502, 0
      %v1556 = vsel %vm172, %v1503, 0
      %v1559 = vsel %vm172, %v1504, 0
      %v1562 = vsel %vm437, %v1506, 0
      %1564 = vmatprep.subr.bf16.mxu0 0
      %1565 = vmatpush1.bf16.msra.mxu0 %v1562
      %1566 = vmatprep.subr.bf16.mxu0 0
      %1567 = vmatpush1.bf16.msra.mxu0 0
      %1568 = vmatprep.subr.bf16.mxu0 0
      %1569 = vmatpush1.bf16.msra.mxu0 0
      %1570 = vmatprep.subr.bf16.mxu0 0
      %1571 = vmatpush1.bf16.msra.mxu0 0
      %1572 = vmatprep.subr.bf16.mxu0 0
      %1573 = vmatpush1.bf16.msra.mxu0 0
      %1574 = vmatprep.subr.bf16.mxu0 0
      %1575 = vmatpush1.bf16.msra.mxu0 0
      %1576 = vmatprep.subr.bf16.mxu0 0
      %1577 = vmatpush1.bf16.msra.mxu0 0
      %1578 = vmatprep.subr.bf16.mxu0 0
      %1579 = vmatpush1.bf16.msra.mxu0 0
      %1580 = vmatprep.subr.bf16.mxu0 0
      %1581 = vmatpush1.bf16.msra.mxu0 0
      %1582 = vmatprep.subr.bf16.mxu0 0
      %1583 = vmatpush1.bf16.msra.mxu0 0
      %1584 = vmatprep.subr.bf16.mxu0 0
      %1585 = vmatpush1.bf16.msra.mxu0 0
      %1586 = vmatprep.subr.bf16.mxu0 0
      %1587 = vmatpush1.bf16.msra.mxu0 0
      %1588 = vmatprep.subr.bf16.mxu0 0
      %1589 = vmatpush1.bf16.msra.mxu0 0
      %1590 = vmatprep.subr.bf16.mxu0 0
      %1591 = vmatpush1.bf16.msra.mxu0 0
      %1592 = vmatprep.subr.bf16.mxu0 0
      %1593 = vmatpush1.bf16.msra.mxu0 0
      %1594 = vmatprep.subr.bf16.mxu0 0
      %1595 = vmatpush1.bf16.msra.mxu0 0
      %1596 = vmatprep.mubr.bf16.mxu0 0
      %1597 = vmatmul.mubr.bf16.gmra.mrb[0].mxu0 %v1508
      %v1598 = vpop.f32.mrb[0].mxu0
      %v1599 = vadd.f32 0.0, %v1598
      %v1600 = vpop.f32.mrb[0].mxu0
      %v1601 = vpop.f32.mrb[0].mxu0
      %v1602 = vadd.f32 0.0, %v1601
      %v1603 = vpop.f32.mrb[0].mxu0
      %1604 = vmatprep.mubr.bf16.mxu0 0
      %1605 = vmatmul.mubr.bf16.gmra.mrb[0].mxu0 %v1511
      %v1606 = vpop.f32.mrb[0].mxu0
      %v1607 = vadd.f32 0.0, %v1606
      %v1608 = vpop.f32.mrb[0].mxu0
      %v1609 = vpop.f32.mrb[0].mxu0
      %v1610 = vadd.f32 0.0, %v1609
      %v1611 = vpop.f32.mrb[0].mxu0
      %1612 = vmatprep.mubr.bf16.mxu0 0
      %1613 = vmatmul.mubr.bf16.gmra.mrb[0].mxu0 %v1514
      %v1614 = vpop.f32.mrb[0].mxu0
      %v1615 = vadd.f32 0.0, %v1614
      %v1616 = vpop.f32.mrb[0].mxu0
      %v1617 = vpop.f32.mrb[0].mxu0
      %v1618 = vadd.f32 0.0, %v1617
      %v1619 = vpop.f32.mrb[0].mxu0
      %1620 = vmatprep.mubr.bf16.mxu0 0
      %1621 = vmatmul.mubr.bf16.gmra.mrb[0].mxu0 %v1517
      %v1622 = vpop.f32.mrb[0].mxu0
      %v1623 = vadd.f32 0.0, %v1622
      %v1624 = vpop.f32.mrb[0].mxu0
      %v1625 = vpop.f32.mrb[0].mxu0
      %v1626 = vadd.f32 0.0, %v1625
      %v1627 = vpop.f32.mrb[0].mxu0
      %1628 = vmatprep.mubr.bf16.mxu0 0
      %1629 = vmatmul.mubr.bf16.gmra.mrb[0].mxu0 %v1520
      %v1630 = vpop.f32.mrb[0].mxu0
      %v1631 = vadd.f32 0.0, %v1630
      %v1632 = vpop.f32.mrb[0].mxu0
      %v1633 = vpop.f32.mrb[0].mxu0
      %v1634 = vadd.f32 0.0, %v1633
      %v1635 = vpop.f32.mrb[0].mxu0
      %1636 = vmatprep.mubr.bf16.mxu0 0
      %1637 = vmatmul.mubr.bf16.gmra.mrb[0].mxu0 %v1523
      %v1638 = vpop.f32.mrb[0].mxu0
      %v1639 = vadd.f32 0.0, %v1638
      %v1640 = vpop.f32.mrb[0].mxu0
      %v1641 = vpop.f32.mrb[0].mxu0
      %v1642 = vadd.f32 0.0, %v1641
      %v1643 = vpop.f32.mrb[0].mxu0
      %1644 = vmatprep.mubr.bf16.mxu0 0
      %1645 = vmatmul.mubr.bf16.gmra.mrb[0].mxu0 %v1526
      %v1646 = vpop.f32.mrb[0].mxu0
      %v1647 = vadd.f32 0.0, %v1646
      %v1648 = vpop.f32.mrb[0].mxu0
      %v1649 = vpop.f32.mrb[0].mxu0
      %v1650 = vadd.f32 0.0, %v1649
      %v1651 = vpop.f32.mrb[0].mxu0
      %1652 = vmatprep.mubr.bf16.mxu0 0
      %1653 = vmatmul.mubr.bf16.gmra.mrb[0].mxu0 %v1529
      %v1654 = vpop.f32.mrb[0].mxu0
      %v1655 = vadd.f32 0.0, %v1654
      %v1656 = vpop.f32.mrb[0].mxu0
      %v1657 = vpop.f32.mrb[0].mxu0
      %v1658 = vadd.f32 0.0, %v1657
      %v1659 = vpop.f32.mrb[0].mxu0
      %1660 = vmatprep.mubr.bf16.mxu0 0
      %1661 = vmatmul.mubr.bf16.gmra.mrb[0].mxu0 %v1532
      %v1662 = vpop.f32.mrb[0].mxu0
      %v1663 = vadd.f32 0.0, %v1662
      %v1664 = vpop.f32.mrb[0].mxu0
      %v1665 = vpop.f32.mrb[0].mxu0
      %v1666 = vadd.f32 0.0, %v1665
      %v1667 = vpop.f32.mrb[0].mxu0
      %1668 = vmatprep.mubr.bf16.mxu0 0
      %1669 = vmatmul.mubr.bf16.gmra.mrb[0].mxu0 %v1535
      %v1670 = vpop.f32.mrb[0].mxu0
      %v1671 = vadd.f32 0.0, %v1670
      %v1672 = vpop.f32.mrb[0].mxu0
      %v1673 = vpop.f32.mrb[0].mxu0
      %v1674 = vadd.f32 0.0, %v1673
      %v1675 = vpop.f32.mrb[0].mxu0
      %1676 = vmatprep.mubr.bf16.mxu0 0
      %1677 = vmatmul.mubr.bf16.gmra.mrb[0].mxu0 %v1538
      %v1678 = vpop.f32.mrb[0].mxu0
      %v1679 = vadd.f32 0.0, %v1678
      %v1680 = vpop.f32.mrb[0].mxu0
      %v1681 = vpop.f32.mrb[0].mxu0
      %v1682 = vadd.f32 0.0, %v1681
      %v1683 = vpop.f32.mrb[0].mxu0
      %1684 = vmatprep.mubr.bf16.mxu0 0
      %1685 = vmatmul.mubr.bf16.gmra.mrb[0].mxu0 %v1541
      %v1686 = vpop.f32.mrb[0].mxu0
      %v1687 = vadd.f32 0.0, %v1686
      %v1688 = vpop.f32.mrb[0].mxu0
      %v1689 = vpop.f32.mrb[0].mxu0
      %v1690 = vadd.f32 0.0, %v1689
      %v1691 = vpop.f32.mrb[0].mxu0
      %1692 = vmatprep.mubr.bf16.mxu0 0
      %1693 = vmatmul.mubr.bf16.gmra.mrb[0].mxu0 %v1544
      %v1694 = vpop.f32.mrb[0].mxu0
      %v1695 = vadd.f32 0.0, %v1694
      %v1696 = vpop.f32.mrb[0].mxu0
      %v1697 = vpop.f32.mrb[0].mxu0
      %v1698 = vadd.f32 0.0, %v1697
      %v1699 = vpop.f32.mrb[0].mxu0
      %1700 = vmatprep.mubr.bf16.mxu0 0
      %1701 = vmatmul.mubr.bf16.gmra.mrb[0].mxu0 %v1547
      %v1702 = vpop.f32.mrb[0].mxu0
      %v1703 = vadd.f32 0.0, %v1702
      %v1704 = vpop.f32.mrb[0].mxu0
      %v1705 = vpop.f32.mrb[0].mxu0
      %v1706 = vadd.f32 0.0, %v1705
      %v1707 = vpop.f32.mrb[0].mxu0
      %1708 = vmatprep.mubr.bf16.mxu0 0
      %1709 = vmatmul.mubr.bf16.gmra.mrb[0].mxu0 %v1550
      %v1710 = vpop.f32.mrb[0].mxu0
      %v1711 = vadd.f32 0.0, %v1710
      %v1712 = vpop.f32.mrb[0].mxu0
      %v1713 = vpop.f32.mrb[0].mxu0
      %v1714 = vadd.f32 0.0, %v1713
      %v1715 = vpop.f32.mrb[0].mxu0
      %1716 = vmatprep.mubr.bf16.mxu0 0
      %1717 = vmatmul.mubr.bf16.gmra.mrb[0].mxu0 %v1553
      %v1718 = vpop.f32.mrb[0].mxu0
      %v1719 = vadd.f32 0.0, %v1718
      %v1720 = vpop.f32.mrb[0].mxu0
      %v1721 = vpop.f32.mrb[0].mxu0
      %v1722 = vadd.f32 0.0, %v1721
      %v1723 = vpop.f32.mrb[0].mxu0
      %1724 = vmatprep.mubr.bf16.mxu0 0
      %1725 = vmatmul.mubr.bf16.gmra.mrb[0].mxu0 %v1556
      %v1726 = vpop.f32.mrb[0].mxu0
      %v1727 = vadd.f32 0.0, %v1726
      %v1728 = vpop.f32.mrb[0].mxu0
      %v1729 = vpop.f32.mrb[0].mxu0
      %v1730 = vadd.f32 0.0, %v1729
      %v1731 = vpop.f32.mrb[0].mxu0
      %1732 = vmatprep.mubr.bf16.mxu0 0
      %1733 = vmatmul.mubr.bf16.gmra.mrb[0].mxu0 %v1559
      %v1734 = vpop.f32.mrb[0].mxu0
      %v1735 = vadd.f32 0.0, %v1734
      %v1736 = vpop.f32.mrb[0].mxu0
      %v1737 = vpop.f32.mrb[0].mxu0
      %v1738 = vadd.f32 0.0, %v1737
      %v1739 = vpop.f32.mrb[0].mxu0
      %1740 = vdwg.mxu0
      %v1741 = vld [vmem:[#allocation3] sm:$0xff]
      %v1742 = vld [vmem:[#allocation3 + $0x8] sm:$0xff]
      %v1743 = vld [vmem:[#allocation3 + $0x10] sm:$0xff]
      %v1744 = vld [vmem:[#allocation3 + $0x18] sm:$0xff]
      %v1745 = vld [vmem:[#allocation3 + $0x20] sm:$0xff]
      %v1746 = vld [vmem:[#allocation3 + $0x28] sm:$0xff]
      %v1747 = vld [vmem:[#allocation3 + $0x30] sm:$0xff]
      %v1748 = vld [vmem:[#allocation3 + $0x38] sm:$0xff]
      %v1749 = vld [vmem:[#allocation3 + $0x40] sm:$0xff]
      %v1750 = vld [vmem:[#allocation3 + $0x48] sm:$0xff]
      %v1751 = vld [vmem:[#allocation3 + $0x50] sm:$0xff]
      %v1752 = vld [vmem:[#allocation3 + $0x58] sm:$0xff]
      %v1753 = vld [vmem:[#allocation3 + $0x60] sm:$0xff]
      %v1754 = vld [vmem:[#allocation3 + $0x68] sm:$0xff]
      %v1755 = vld [vmem:[#allocation3 + $0x70] sm:$0xff]
      %v1756 = vld [vmem:[#allocation3 + $0x78] sm:$0xff]
      %v1757 = vld [vmem:[#allocation3 + $0x80] sm:$0xff]
      %v1758 = vld [vmem:[#allocation3 + $0x88] sm:$0xff]
      %v1759 = vld [vmem:[#allocation3 + $0x90] sm:$0xff]
      %v1760 = vld [vmem:[#allocation3 + $0x98] sm:$0xff]
      %v1761 = vld [vmem:[#allocation3 + $0xa0] sm:$0xff]
      %v1762 = vld [vmem:[#allocation3 + $0xa8] sm:$0xff]
      %v1763 = vld [vmem:[#allocation3 + $0xb0] sm:$0xff]
      %v1764 = vld [vmem:[#allocation3 + $0xb8] sm:$0xff]
      %v1765 = vld [vmem:[#allocation3 + $0xc0] sm:$0xff]
      %v1766 = vld [vmem:[#allocation3 + $0xc8] sm:$0xff]
      %v1767 = vld [vmem:[#allocation3 + $0xd0] sm:$0xff]
      %v1768 = vld [vmem:[#allocation3 + $0xd8] sm:$0xff]
      %v1769 = vld [vmem:[#allocation3 + $0xe0] sm:$0xff]
      %v1770 = vld [vmem:[#allocation3 + $0xe8] sm:$0xff]
      %v1771 = vld [vmem:[#allocation3 + $0xf0] sm:$0xff]
      %v1772 = vld [vmem:[#allocation3 + $0xf8] sm:$0xff]
      %v1773 = vld [vmem:[#allocation3 + $0x100] sm:$0xff]
      %v1774 = vld [vmem:[#allocation3 + $0x108] sm:$0xff]
      %v1775 = vld [vmem:[#allocation3 + $0x110] sm:$0xff]
      %v1776 = vld [vmem:[#allocation3 + $0x118] sm:$0xff]
      %v1777 = vadd.f32 %v1741, %v1599
      %v1778 = vadd.f32 %v1742, %v1602
      %v1779 = vadd.f32 %v1743, %v1607
      %v1780 = vadd.f32 %v1744, %v1610
      %v1781 = vadd.f32 %v1745, %v1615
      %v1782 = vadd.f32 %v1746, %v1618
      %v1783 = vadd.f32 %v1747, %v1623
      %v1784 = vadd.f32 %v1748, %v1626
      %v1785 = vadd.f32 %v1749, %v1631
      %v1786 = vadd.f32 %v1750, %v1634
      %v1787 = vadd.f32 %v1751, %v1639
      %v1788 = vadd.f32 %v1752, %v1642
      %v1789 = vadd.f32 %v1753, %v1647
      %v1790 = vadd.f32 %v1754, %v1650
      %v1791 = vadd.f32 %v1755, %v1655
      %v1792 = vadd.f32 %v1756, %v1658
      %v1793 = vadd.f32 %v1757, %v1663
      %v1794 = vadd.f32 %v1758, %v1666
      %v1795 = vadd.f32 %v1759, %v1671
      %v1796 = vadd.f32 %v1760, %v1674
      %v1797 = vadd.f32 %v1761, %v1679
      %v1798 = vadd.f32 %v1762, %v1682
      %v1799 = vadd.f32 %v1763, %v1687
      %v1800 = vadd.f32 %v1764, %v1690
      %v1801 = vadd.f32 %v1765, %v1695
      %v1802 = vadd.f32 %v1766, %v1698
      %v1803 = vadd.f32 %v1767, %v1703
      %v1804 = vadd.f32 %v1768, %v1706
      %v1805 = vadd.f32 %v1769, %v1711
      %v1806 = vadd.f32 %v1770, %v1714
      %v1807 = vadd.f32 %v1771, %v1719
      %v1808 = vadd.f32 %v1772, %v1722
      %v1809 = vadd.f32 %v1773, %v1727
      %v1810 = vadd.f32 %v1774, %v1730
      %v1811 = vadd.f32 %v1775, %v1735
      %v1812 = vadd.f32 %v1776, %v1738
      %1813 = vst.msk [vmem:[#allocation3] sm:$0xff] %vm618, %v1777
      %1814 = vst.msk [vmem:[#allocation3 + $0x8] sm:$0xff] %vm618, %v1778
      %1815 = vst.msk [vmem:[#allocation3 + $0x10] sm:$0xff] %vm618, %v1779
      %1816 = vst.msk [vmem:[#allocation3 + $0x18] sm:$0xff] %vm618, %v1780
      %1817 = vst.msk [vmem:[#allocation3 + $0x20] sm:$0xff] %vm618, %v1781
      %1818 = vst.msk [vmem:[#allocation3 + $0x28] sm:$0xff] %vm618, %v1782
      %1819 = vst.msk [vmem:[#allocation3 + $0x30] sm:$0xff] %vm618, %v1783
      %1820 = vst.msk [vmem:[#allocation3 + $0x38] sm:$0xff] %vm618, %v1784
      %1821 = vst.msk [vmem:[#allocation3 + $0x40] sm:$0xff] %vm618, %v1785
      %1822 = vst.msk [vmem:[#allocation3 + $0x48] sm:$0xff] %vm618, %v1786
      %1823 = vst.msk [vmem:[#allocation3 + $0x50] sm:$0xff] %vm618, %v1787
      %1824 = vst.msk [vmem:[#allocation3 + $0x58] sm:$0xff] %vm618, %v1788
      %1825 = vst.msk [vmem:[#allocation3 + $0x60] sm:$0xff] %vm618, %v1789
      %1826 = vst.msk [vmem:[#allocation3 + $0x68] sm:$0xff] %vm618, %v1790
      %1827 = vst.msk [vmem:[#allocation3 + $0x70] sm:$0xff] %vm618, %v1791
      %1828 = vst.msk [vmem:[#allocation3 + $0x78] sm:$0xff] %vm618, %v1792
      %1829 = vst.msk [vmem:[#allocation3 + $0x80] sm:$0xff] %vm618, %v1793
      %1830 = vst.msk [vmem:[#allocation3 + $0x88] sm:$0xff] %vm618, %v1794
      %1831 = vst.msk [vmem:[#allocation3 + $0x90] sm:$0xff] %vm618, %v1795
      %1832 = vst.msk [vmem:[#allocation3 + $0x98] sm:$0xff] %vm618, %v1796
      %1833 = vst.msk [vmem:[#allocation3 + $0xa0] sm:$0xff] %vm618, %v1797
      %1834 = vst.msk [vmem:[#allocation3 + $0xa8] sm:$0xff] %vm618, %v1798
      %1835 = vst.msk [vmem:[#allocation3 + $0xb0] sm:$0xff] %vm618, %v1799
      %1836 = vst.msk [vmem:[#allocation3 + $0xb8] sm:$0xff] %vm618, %v1800
      %1837 = vst.msk [vmem:[#allocation3 + $0xc0] sm:$0xff] %vm618, %v1801
      %1838 = vst.msk [vmem:[#allocation3 + $0xc8] sm:$0xff] %vm618, %v1802
      %1839 = vst.msk [vmem:[#allocation3 + $0xd0] sm:$0xff] %vm618, %v1803
      %1840 = vst.msk [vmem:[#allocation3 + $0xd8] sm:$0xff] %vm618, %v1804
      %1841 = vst.msk [vmem:[#allocation3 + $0xe0] sm:$0xff] %vm618, %v1805
      %1842 = vst.msk [vmem:[#allocation3 + $0xe8] sm:$0xff] %vm618, %v1806
      %1843 = vst.msk [vmem:[#allocation3 + $0xf0] sm:$0xff] %vm618, %v1807
      %1844 = vst.msk [vmem:[#allocation3 + $0xf8] sm:$0xff] %vm618, %v1808
      %1845 = vst.msk [vmem:[#allocation3 + $0x100] sm:$0xff] %vm618, %v1809
      %1846 = vst.msk [vmem:[#allocation3 + $0x108] sm:$0xff] %vm618, %v1810
      %1847 = vst.msk [vmem:[#allocation3 + $0x110] sm:$0xff] %vm618, %v1811
      %1848 = vst.msk [vmem:[#allocation3 + $0x118] sm:$0xff] %vm618, %v1812
      %v1849 = vld [vmem:[#allocation2 + $0x13] sm:$0xff]
      %v1850 = vld [vmem:[#allocation2 + $0x1b] sm:$0xff]
      %v1851 = vld [vmem:[#allocation2 + $0x23] sm:$0xff]
      %v1852 = vld [vmem:[#allocation2 + $0x2b] sm:$0xff]
      %v1853 = vld [vmem:[#allocation2 + $0x33] sm:$0xff]
      %v1854 = vld [vmem:[#allocation2 + $0x3b] sm:$0xff]
      %v1855 = vld [vmem:[#allocation2 + $0x43] sm:$0xff]
      %v1856 = vld [vmem:[#allocation2 + $0x4b] sm:$0xff]
      %v1857 = vld [vmem:[#allocation2 + $0x53] sm:$0xff]
      %v1858 = vld [vmem:[#allocation2 + $0x5b] sm:$0xff]
      %v1859 = vld [vmem:[#allocation2 + $0x63] sm:$0xff]
      %v1860 = vld [vmem:[#allocation2 + $0x6b] sm:$0xff]
      %v1861 = vld [vmem:[#allocation2 + $0x73] sm:$0xff]
      %v1862 = vld [vmem:[#allocation2 + $0x7b] sm:$0xff]
      %v1863 = vld [vmem:[#allocation2 + $0x83] sm:$0xff]
      %v1864 = vld [vmem:[#allocation2 + $0x8b] sm:$0xff]
      %v1865 = vld [vmem:[#allocation2 + $0x93] sm:$0xff]
      %v1866 = vld [vmem:[#allocation2 + $0x9b] sm:$0xff]
      %v1867 = vld [vmem:[#allocation2 + $0xa3] sm:$0xff]
      %v1868 = vld [vmem:[#allocation2 + $0xab] sm:$0xff]
      %v1869 = vld [vmem:[#allocation2 + $0xb3] sm:$0xff]
      %v1870 = vld [vmem:[#allocation2 + $0xbb] sm:$0xff]
      %v1871 = vld [vmem:[#allocation2 + $0xc3] sm:$0xff]
      %v1872 = vld [vmem:[#allocation2 + $0xcb] sm:$0xff]
      %v1873 = vld [vmem:[#allocation2 + $0xd3] sm:$0xff]
      %v1874 = vld [vmem:[#allocation2 + $0xdb] sm:$0xff]
      %v1875 = vld [vmem:[#allocation2 + $0xe3] sm:$0xff]
      %v1876 = vld [vmem:[#allocation2 + $0xeb] sm:$0xff]
      %v1877 = vld [vmem:[#allocation2 + $0xf3] sm:$0xff]
      %v1878 = vld [vmem:[#allocation2 + $0xfb] sm:$0xff]
      %v1879 = vld [vmem:[#allocation2 + $0x103] sm:$0xff]
      %v1880 = vld [vmem:[#allocation2 + $0x10b] sm:$0xff]
      %v1881 = vld [vmem:[#allocation2 + $0x113] sm:$0xff]
      %v1882 = vld [vmem:[#allocation2 + $0x11b] sm:$0xff]
      %v1883 = vld [vmem:[#allocation2 + $0x123] sm:$0xff]
      %v1884 = vld [vmem:[#allocation2 + $0x12b] sm:$0xff]
      %v1885 = vpack.c.bf16 %v1850, %v1849
      %v1886 = vpack.c.bf16 %v1852, %v1851
      %v1887 = vpack.c.bf16 %v1854, %v1853
      %v1888 = vpack.c.bf16 %v1856, %v1855
      %v1889 = vpack.c.bf16 %v1858, %v1857
      %v1890 = vpack.c.bf16 %v1860, %v1859
      %v1891 = vpack.c.bf16 %v1862, %v1861
      %v1892 = vpack.c.bf16 %v1864, %v1863
      %v1893 = vpack.c.bf16 %v1866, %v1865
      %v1894 = vpack.c.bf16 %v1868, %v1867
      %v1895 = vpack.c.bf16 %v1870, %v1869
      %v1896 = vpack.c.bf16 %v1872, %v1871
      %v1897 = vpack.c.bf16 %v1874, %v1873
      %v1898 = vpack.c.bf16 %v1876, %v1875
      %v1899 = vpack.c.bf16 %v1878, %v1877
      %v1900 = vpack.c.bf16 %v1880, %v1879
      %v1901 = vpack.c.bf16 %v1882, %v1881
      %v1902 = vpack.c.bf16 %v1884, %v1883
      %s1903 = scalar_lea.vmem %s1, 8
      %v1904 = vld [vmem:[%s1903] sm:$0x3]
      %v1906 = vsel %vm172, %v1885, 0
      %v1909 = vsel %vm172, %v1886, 0
      %v1912 = vsel %vm172, %v1887, 0
      %v1915 = vsel %vm172, %v1888, 0
      %v1918 = vsel %vm172, %v1889, 0
      %v1921 = vsel %vm172, %v1890, 0
      %v1924 = vsel %vm172, %v1891, 0
      %v1927 = vsel %vm172, %v1892, 0
      %v1930 = vsel %vm172, %v1893, 0
      %v1933 = vsel %vm172, %v1894, 0
      %v1936 = vsel %vm172, %v1895, 0
      %v1939 = vsel %vm172, %v1896, 0
      %v1942 = vsel %vm172, %v1897, 0
      %v1945 = vsel %vm172, %v1898, 0
      %v1948 = vsel %vm172, %v1899, 0
      %v1951 = vsel %vm172, %v1900, 0
      %v1954 = vsel %vm172, %v1901, 0
      %v1957 = vsel %vm172, %v1902, 0
      %v1960 = vsel %vm437, %v1904, 0
      %1962 = vmatprep.subr.bf16.mxu0 0
      %1963 = vmatpush1.bf16.msra.mxu0 %v1960
      %1964 = vmatprep.subr.bf16.mxu0 0
      %1965 = vmatpush1.bf16.msra.mxu0 0
      %1966 = vmatprep.subr.bf16.mxu0 0
      %1967 = vmatpush1.bf16.msra.mxu0 0
      %1968 = vmatprep.subr.bf16.mxu0 0
      %1969 = vmatpush1.bf16.msra.mxu0 0
      %1970 = vmatprep.subr.bf16.mxu0 0
      %1971 = vmatpush1.bf16.msra.mxu0 0
      %1972 = vmatprep.subr.bf16.mxu0 0
      %1973 = vmatpush1.bf16.msra.mxu0 0
      %1974 = vmatprep.subr.bf16.mxu0 0
      %1975 = vmatpush1.bf16.msra.mxu0 0
      %1976 = vmatprep.subr.bf16.mxu0 0
      %1977 = vmatpush1.bf16.msra.mxu0 0
      %1978 = vmatprep.subr.bf16.mxu0 0
      %1979 = vmatpush1.bf16.msra.mxu0 0
      %1980 = vmatprep.subr.bf16.mxu0 0
      %1981 = vmatpush1.bf16.msra.mxu0 0
      %1982 = vmatprep.subr.bf16.mxu0 0
      %1983 = vmatpush1.bf16.msra.mxu0 0
      %1984 = vmatprep.subr.bf16.mxu0 0
      %1985 = vmatpush1.bf16.msra.mxu0 0
      %1986 = vmatprep.subr.bf16.mxu0 0
      %1987 = vmatpush1.bf16.msra.mxu0 0
      %1988 = vmatprep.subr.bf16.mxu0 0
      %1989 = vmatpush1.bf16.msra.mxu0 0
      %1990 = vmatprep.subr.bf16.mxu0 0
      %1991 = vmatpush1.bf16.msra.mxu0 0
      %1992 = vmatprep.subr.bf16.mxu0 0
      %1993 = vmatpush1.bf16.msra.mxu0 0
      %1994 = vmatprep.mubr.bf16.mxu0 0
      %1995 = vmatmul.mubr.bf16.gmra.mrb[0].mxu0 %v1906
      %v1996 = vpop.f32.mrb[0].mxu0
      %v1997 = vadd.f32 0.0, %v1996
      %v1998 = vpop.f32.mrb[0].mxu0
      %v1999 = vpop.f32.mrb[0].mxu0
      %v2000 = vadd.f32 0.0, %v1999
      %v2001 = vpop.f32.mrb[0].mxu0
      %2002 = vmatprep.mubr.bf16.mxu0 0
      %2003 = vmatmul.mubr.bf16.gmra.mrb[0].mxu0 %v1909
      %v2004 = vpop.f32.mrb[0].mxu0
      %v2005 = vadd.f32 0.0, %v2004
      %v2006 = vpop.f32.mrb[0].mxu0
      %v2007 = vpop.f32.mrb[0].mxu0
      %v2008 = vadd.f32 0.0, %v2007
      %v2009 = vpop.f32.mrb[0].mxu0
      %2010 = vmatprep.mubr.bf16.mxu0 0
      %2011 = vmatmul.mubr.bf16.gmra.mrb[0].mxu0 %v1912
      %v2012 = vpop.f32.mrb[0].mxu0
      %v2013 = vadd.f32 0.0, %v2012
      %v2014 = vpop.f32.mrb[0].mxu0
      %v2015 = vpop.f32.mrb[0].mxu0
      %v2016 = vadd.f32 0.0, %v2015
      %v2017 = vpop.f32.mrb[0].mxu0
      %2018 = vmatprep.mubr.bf16.mxu0 0
      %2019 = vmatmul.mubr.bf16.gmra.mrb[0].mxu0 %v1915
      %v2020 = vpop.f32.mrb[0].mxu0
      %v2021 = vadd.f32 0.0, %v2020
      %v2022 = vpop.f32.mrb[0].mxu0
      %v2023 = vpop.f32.mrb[0].mxu0
      %v2024 = vadd.f32 0.0, %v2023
      %v2025 = vpop.f32.mrb[0].mxu0
      %2026 = vmatprep.mubr.bf16.mxu0 0
      %2027 = vmatmul.mubr.bf16.gmra.mrb[0].mxu0 %v1918
      %v2028 = vpop.f32.mrb[0].mxu0
      %v2029 = vadd.f32 0.0, %v2028
      %v2030 = vpop.f32.mrb[0].mxu0
      %v2031 = vpop.f32.mrb[0].mxu0
      %v2032 = vadd.f32 0.0, %v2031
      %v2033 = vpop.f32.mrb[0].mxu0
      %2034 = vmatprep.mubr.bf16.mxu0 0
      %2035 = vmatmul.mubr.bf16.gmra.mrb[0].mxu0 %v1921
      %v2036 = vpop.f32.mrb[0].mxu0
      %v2037 = vadd.f32 0.0, %v2036
      %v2038 = vpop.f32.mrb[0].mxu0
      %v2039 = vpop.f32.mrb[0].mxu0
      %v2040 = vadd.f32 0.0, %v2039
      %v2041 = vpop.f32.mrb[0].mxu0
      %2042 = vmatprep.mubr.bf16.mxu0 0
      %2043 = vmatmul.mubr.bf16.gmra.mrb[0].mxu0 %v1924
      %v2044 = vpop.f32.mrb[0].mxu0
      %v2045 = vadd.f32 0.0, %v2044
      %v2046 = vpop.f32.mrb[0].mxu0
      %v2047 = vpop.f32.mrb[0].mxu0
      %v2048 = vadd.f32 0.0, %v2047
      %v2049 = vpop.f32.mrb[0].mxu0
      %2050 = vmatprep.mubr.bf16.mxu0 0
      %2051 = vmatmul.mubr.bf16.gmra.mrb[0].mxu0 %v1927
      %v2052 = vpop.f32.mrb[0].mxu0
      %v2053 = vadd.f32 0.0, %v2052
      %v2054 = vpop.f32.mrb[0].mxu0
      %v2055 = vpop.f32.mrb[0].mxu0
      %v2056 = vadd.f32 0.0, %v2055
      %v2057 = vpop.f32.mrb[0].mxu0
      %2058 = vmatprep.mubr.bf16.mxu0 0
      %2059 = vmatmul.mubr.bf16.gmra.mrb[0].mxu0 %v1930
      %v2060 = vpop.f32.mrb[0].mxu0
      %v2061 = vadd.f32 0.0, %v2060
      %v2062 = vpop.f32.mrb[0].mxu0
      %v2063 = vpop.f32.mrb[0].mxu0
      %v2064 = vadd.f32 0.0, %v2063
      %v2065 = vpop.f32.mrb[0].mxu0
      %2066 = vmatprep.mubr.bf16.mxu0 0
      %2067 = vmatmul.mubr.bf16.gmra.mrb[0].mxu0 %v1933
      %v2068 = vpop.f32.mrb[0].mxu0
      %v2069 = vadd.f32 0.0, %v2068
      %v2070 = vpop.f32.mrb[0].mxu0
      %v2071 = vpop.f32.mrb[0].mxu0
      %v2072 = vadd.f32 0.0, %v2071
      %v2073 = vpop.f32.mrb[0].mxu0
      %2074 = vmatprep.mubr.bf16.mxu0 0
      %2075 = vmatmul.mubr.bf16.gmra.mrb[0].mxu0 %v1936
      %v2076 = vpop.f32.mrb[0].mxu0
      %v2077 = vadd.f32 0.0, %v2076
      %v2078 = vpop.f32.mrb[0].mxu0
      %v2079 = vpop.f32.mrb[0].mxu0
      %v2080 = vadd.f32 0.0, %v2079
      %v2081 = vpop.f32.mrb[0].mxu0
      %2082 = vmatprep.mubr.bf16.mxu0 0
      %2083 = vmatmul.mubr.bf16.gmra.mrb[0].mxu0 %v1939
      %v2084 = vpop.f32.mrb[0].mxu0
      %v2085 = vadd.f32 0.0, %v2084
      %v2086 = vpop.f32.mrb[0].mxu0
      %v2087 = vpop.f32.mrb[0].mxu0
      %v2088 = vadd.f32 0.0, %v2087
      %v2089 = vpop.f32.mrb[0].mxu0
      %2090 = vmatprep.mubr.bf16.mxu0 0
      %2091 = vmatmul.mubr.bf16.gmra.mrb[0].mxu0 %v1942
      %v2092 = vpop.f32.mrb[0].mxu0
      %v2093 = vadd.f32 0.0, %v2092
      %v2094 = vpop.f32.mrb[0].mxu0
      %v2095 = vpop.f32.mrb[0].mxu0
      %v2096 = vadd.f32 0.0, %v2095
      %v2097 = vpop.f32.mrb[0].mxu0
      %2098 = vmatprep.mubr.bf16.mxu0 0
      %2099 = vmatmul.mubr.bf16.gmra.mrb[0].mxu0 %v1945
      %v2100 = vpop.f32.mrb[0].mxu0
      %v2101 = vadd.f32 0.0, %v2100
      %v2102 = vpop.f32.mrb[0].mxu0
      %v2103 = vpop.f32.mrb[0].mxu0
      %v2104 = vadd.f32 0.0, %v2103
      %v2105 = vpop.f32.mrb[0].mxu0
      %2106 = vmatprep.mubr.bf16.mxu0 0
      %2107 = vmatmul.mubr.bf16.gmra.mrb[0].mxu0 %v1948
      %v2108 = vpop.f32.mrb[0].mxu0
      %v2109 = vadd.f32 0.0, %v2108
      %v2110 = vpop.f32.mrb[0].mxu0
      %v2111 = vpop.f32.mrb[0].mxu0
      %v2112 = vadd.f32 0.0, %v2111
      %v2113 = vpop.f32.mrb[0].mxu0
      %2114 = vmatprep.mubr.bf16.mxu0 0
      %2115 = vmatmul.mubr.bf16.gmra.mrb[0].mxu0 %v1951
      %v2116 = vpop.f32.mrb[0].mxu0
      %v2117 = vadd.f32 0.0, %v2116
      %v2118 = vpop.f32.mrb[0].mxu0
      %v2119 = vpop.f32.mrb[0].mxu0
      %v2120 = vadd.f32 0.0, %v2119
      %v2121 = vpop.f32.mrb[0].mxu0
      %2122 = vmatprep.mubr.bf16.mxu0 0
      %2123 = vmatmul.mubr.bf16.gmra.mrb[0].mxu0 %v1954
      %v2124 = vpop.f32.mrb[0].mxu0
      %v2125 = vadd.f32 0.0, %v2124
      %v2126 = vpop.f32.mrb[0].mxu0
      %v2127 = vpop.f32.mrb[0].mxu0
      %v2128 = vadd.f32 0.0, %v2127
      %v2129 = vpop.f32.mrb[0].mxu0
      %2130 = vmatprep.mubr.bf16.mxu0 0
      %2131 = vmatmul.mubr.bf16.gmra.mrb[0].mxu0 %v1957
      %v2132 = vpop.f32.mrb[0].mxu0
      %v2133 = vadd.f32 0.0, %v2132
      %v2134 = vpop.f32.mrb[0].mxu0
      %v2135 = vpop.f32.mrb[0].mxu0
      %v2136 = vadd.f32 0.0, %v2135
      %v2137 = vpop.f32.mrb[0].mxu0
      %2138 = vdwg.mxu0
      %v2139 = vld [vmem:[#allocation3] sm:$0xff]
      %v2140 = vld [vmem:[#allocation3 + $0x8] sm:$0xff]
      %v2141 = vld [vmem:[#allocation3 + $0x10] sm:$0xff]
      %v2142 = vld [vmem:[#allocation3 + $0x18] sm:$0xff]
      %v2143 = vld [vmem:[#allocation3 + $0x20] sm:$0xff]
      %v2144 = vld [vmem:[#allocation3 + $0x28] sm:$0xff]
      %v2145 = vld [vmem:[#allocation3 + $0x30] sm:$0xff]
      %v2146 = vld [vmem:[#allocation3 + $0x38] sm:$0xff]
      %v2147 = vld [vmem:[#allocation3 + $0x40] sm:$0xff]
      %v2148 = vld [vmem:[#allocation3 + $0x48] sm:$0xff]
      %v2149 = vld [vmem:[#allocation3 + $0x50] sm:$0xff]
      %v2150 = vld [vmem:[#allocation3 + $0x58] sm:$0xff]
      %v2151 = vld [vmem:[#allocation3 + $0x60] sm:$0xff]
      %v2152 = vld [vmem:[#allocation3 + $0x68] sm:$0xff]
      %v2153 = vld [vmem:[#allocation3 + $0x70] sm:$0xff]
      %v2154 = vld [vmem:[#allocation3 + $0x78] sm:$0xff]
      %v2155 = vld [vmem:[#allocation3 + $0x80] sm:$0xff]
      %v2156 = vld [vmem:[#allocation3 + $0x88] sm:$0xff]
      %v2157 = vld [vmem:[#allocation3 + $0x90] sm:$0xff]
      %v2158 = vld [vmem:[#allocation3 + $0x98] sm:$0xff]
      %v2159 = vld [vmem:[#allocation3 + $0xa0] sm:$0xff]
      %v2160 = vld [vmem:[#allocation3 + $0xa8] sm:$0xff]
      %v2161 = vld [vmem:[#allocation3 + $0xb0] sm:$0xff]
      %v2162 = vld [vmem:[#allocation3 + $0xb8] sm:$0xff]
      %v2163 = vld [vmem:[#allocation3 + $0xc0] sm:$0xff]
      %v2164 = vld [vmem:[#allocation3 + $0xc8] sm:$0xff]
      %v2165 = vld [vmem:[#allocation3 + $0xd0] sm:$0xff]
      %v2166 = vld [vmem:[#allocation3 + $0xd8] sm:$0xff]
      %v2167 = vld [vmem:[#allocation3 + $0xe0] sm:$0xff]
      %v2168 = vld [vmem:[#allocation3 + $0xe8] sm:$0xff]
      %v2169 = vld [vmem:[#allocation3 + $0xf0] sm:$0xff]
      %v2170 = vld [vmem:[#allocation3 + $0xf8] sm:$0xff]
      %v2171 = vld [vmem:[#allocation3 + $0x100] sm:$0xff]
      %v2172 = vld [vmem:[#allocation3 + $0x108] sm:$0xff]
      %v2173 = vld [vmem:[#allocation3 + $0x110] sm:$0xff]
      %v2174 = vld [vmem:[#allocation3 + $0x118] sm:$0xff]
      %v2175 = vadd.f32 %v2139, %v1997
      %v2176 = vadd.f32 %v2140, %v2000
      %v2177 = vadd.f32 %v2141, %v2005
      %v2178 = vadd.f32 %v2142, %v2008
      %v2179 = vadd.f32 %v2143, %v2013
      %v2180 = vadd.f32 %v2144, %v2016
      %v2181 = vadd.f32 %v2145, %v2021
      %v2182 = vadd.f32 %v2146, %v2024
      %v2183 = vadd.f32 %v2147, %v2029
      %v2184 = vadd.f32 %v2148, %v2032
      %v2185 = vadd.f32 %v2149, %v2037
      %v2186 = vadd.f32 %v2150, %v2040
      %v2187 = vadd.f32 %v2151, %v2045
      %v2188 = vadd.f32 %v2152, %v2048
      %v2189 = vadd.f32 %v2153, %v2053
      %v2190 = vadd.f32 %v2154, %v2056
      %v2191 = vadd.f32 %v2155, %v2061
      %v2192 = vadd.f32 %v2156, %v2064
      %v2193 = vadd.f32 %v2157, %v2069
      %v2194 = vadd.f32 %v2158, %v2072
      %v2195 = vadd.f32 %v2159, %v2077
      %v2196 = vadd.f32 %v2160, %v2080
      %v2197 = vadd.f32 %v2161, %v2085
      %v2198 = vadd.f32 %v2162, %v2088
      %v2199 = vadd.f32 %v2163, %v2093
      %v2200 = vadd.f32 %v2164, %v2096
      %v2201 = vadd.f32 %v2165, %v2101
      %v2202 = vadd.f32 %v2166, %v2104
      %v2203 = vadd.f32 %v2167, %v2109
      %v2204 = vadd.f32 %v2168, %v2112
      %v2205 = vadd.f32 %v2169, %v2117
      %v2206 = vadd.f32 %v2170, %v2120
      %v2207 = vadd.f32 %v2171, %v2125
      %v2208 = vadd.f32 %v2172, %v2128
      %v2209 = vadd.f32 %v2173, %v2133
      %v2210 = vadd.f32 %v2174, %v2136
      %2211 = vst.msk [vmem:[#allocation3] sm:$0xff] %vm618, %v2175
      %2212 = vst.msk [vmem:[#allocation3 + $0x8] sm:$0xff] %vm618, %v2176
      %2213 = vst.msk [vmem:[#allocation3 + $0x10] sm:$0xff] %vm618, %v2177
      %2214 = vst.msk [vmem:[#allocation3 + $0x18] sm:$0xff] %vm618, %v2178
      %2215 = vst.msk [vmem:[#allocation3 + $0x20] sm:$0xff] %vm618, %v2179
      %2216 = vst.msk [vmem:[#allocation3 + $0x28] sm:$0xff] %vm618, %v2180
      %2217 = vst.msk [vmem:[#allocation3 + $0x30] sm:$0xff] %vm618, %v2181
      %2218 = vst.msk [vmem:[#allocation3 + $0x38] sm:$0xff] %vm618, %v2182
      %2219 = vst.msk [vmem:[#allocation3 + $0x40] sm:$0xff] %vm618, %v2183
      %2220 = vst.msk [vmem:[#allocation3 + $0x48] sm:$0xff] %vm618, %v2184
      %2221 = vst.msk [vmem:[#allocation3 + $0x50] sm:$0xff] %vm618, %v2185
      %2222 = vst.msk [vmem:[#allocation3 + $0x58] sm:$0xff] %vm618, %v2186
      %2223 = vst.msk [vmem:[#allocation3 + $0x60] sm:$0xff] %vm618, %v2187
      %2224 = vst.msk [vmem:[#allocation3 + $0x68] sm:$0xff] %vm618, %v2188
      %2225 = vst.msk [vmem:[#allocation3 + $0x70] sm:$0xff] %vm618, %v2189
      %2226 = vst.msk [vmem:[#allocation3 + $0x78] sm:$0xff] %vm618, %v2190
      %2227 = vst.msk [vmem:[#allocation3 + $0x80] sm:$0xff] %vm618, %v2191
      %2228 = vst.msk [vmem:[#allocation3 + $0x88] sm:$0xff] %vm618, %v2192
      %2229 = vst.msk [vmem:[#allocation3 + $0x90] sm:$0xff] %vm618, %v2193
      %2230 = vst.msk [vmem:[#allocation3 + $0x98] sm:$0xff] %vm618, %v2194
      %2231 = vst.msk [vmem:[#allocation3 + $0xa0] sm:$0xff] %vm618, %v2195
      %2232 = vst.msk [vmem:[#allocation3 + $0xa8] sm:$0xff] %vm618, %v2196
      %2233 = vst.msk [vmem:[#allocation3 + $0xb0] sm:$0xff] %vm618, %v2197
      %2234 = vst.msk [vmem:[#allocation3 + $0xb8] sm:$0xff] %vm618, %v2198
      %2235 = vst.msk [vmem:[#allocation3 + $0xc0] sm:$0xff] %vm618, %v2199
      %2236 = vst.msk [vmem:[#allocation3 + $0xc8] sm:$0xff] %vm618, %v2200
      %2237 = vst.msk [vmem:[#allocation3 + $0xd0] sm:$0xff] %vm618, %v2201
      %2238 = vst.msk [vmem:[#allocation3 + $0xd8] sm:$0xff] %vm618, %v2202
      %2239 = vst.msk [vmem:[#allocation3 + $0xe0] sm:$0xff] %vm618, %v2203
      %2240 = vst.msk [vmem:[#allocation3 + $0xe8] sm:$0xff] %vm618, %v2204
      %2241 = vst.msk [vmem:[#allocation3 + $0xf0] sm:$0xff] %vm618, %v2205
      %2242 = vst.msk [vmem:[#allocation3 + $0xf8] sm:$0xff] %vm618, %v2206
      %2243 = vst.msk [vmem:[#allocation3 + $0x100] sm:$0xff] %vm618, %v2207
      %2244 = vst.msk [vmem:[#allocation3 + $0x108] sm:$0xff] %vm618, %v2208
      %2245 = vst.msk [vmem:[#allocation3 + $0x110] sm:$0xff] %vm618, %v2209
      %2246 = vst.msk [vmem:[#allocation3 + $0x118] sm:$0xff] %vm618, %v2210
      %v2247 = vld [vmem:[#allocation2 + $0x14] sm:$0xff]
      %v2248 = vld [vmem:[#allocation2 + $0x1c] sm:$0xff]
      %v2249 = vld [vmem:[#allocation2 + $0x24] sm:$0xff]
      %v2250 = vld [vmem:[#allocation2 + $0x2c] sm:$0xff]
      %v2251 = vld [vmem:[#allocation2 + $0x34] sm:$0xff]
      %v2252 = vld [vmem:[#allocation2 + $0x3c] sm:$0xff]
      %v2253 = vld [vmem:[#allocation2 + $0x44] sm:$0xff]
      %v2254 = vld [vmem:[#allocation2 + $0x4c] sm:$0xff]
      %v2255 = vld [vmem:[#allocation2 + $0x54] sm:$0xff]
      %v2256 = vld [vmem:[#allocation2 + $0x5c] sm:$0xff]
      %v2257 = vld [vmem:[#allocation2 + $0x64] sm:$0xff]
      %v2258 = vld [vmem:[#allocation2 + $0x6c] sm:$0xff]
      %v2259 = vld [vmem:[#allocation2 + $0x74] sm:$0xff]
      %v2260 = vld [vmem:[#allocation2 + $0x7c] sm:$0xff]
      %v2261 = vld [vmem:[#allocation2 + $0x84] sm:$0xff]
      %v2262 = vld [vmem:[#allocation2 + $0x8c] sm:$0xff]
      %v2263 = vld [vmem:[#allocation2 + $0x94] sm:$0xff]
      %v2264 = vld [vmem:[#allocation2 + $0x9c] sm:$0xff]
      %v2265 = vld [vmem:[#allocation2 + $0xa4] sm:$0xff]
      %v2266 = vld [vmem:[#allocation2 + $0xac] sm:$0xff]
      %v2267 = vld [vmem:[#allocation2 + $0xb4] sm:$0xff]
      %v2268 = vld [vmem:[#allocation2 + $0xbc] sm:$0xff]
      %v2269 = vld [vmem:[#allocation2 + $0xc4] sm:$0xff]
      %v2270 = vld [vmem:[#allocation2 + $0xcc] sm:$0xff]
      %v2271 = vld [vmem:[#allocation2 + $0xd4] sm:$0xff]
      %v2272 = vld [vmem:[#allocation2 + $0xdc] sm:$0xff]
      %v2273 = vld [vmem:[#allocation2 + $0xe4] sm:$0xff]
      %v2274 = vld [vmem:[#allocation2 + $0xec] sm:$0xff]
      %v2275 = vld [vmem:[#allocation2 + $0xf4] sm:$0xff]
      %v2276 = vld [vmem:[#allocation2 + $0xfc] sm:$0xff]
      %v2277 = vld [vmem:[#allocation2 + $0x104] sm:$0xff]
      %v2278 = vld [vmem:[#allocation2 + $0x10c] sm:$0xff]
      %v2279 = vld [vmem:[#allocation2 + $0x114] sm:$0xff]
      %v2280 = vld [vmem:[#allocation2 + $0x11c] sm:$0xff]
      %v2281 = vld [vmem:[#allocation2 + $0x124] sm:$0xff]
      %v2282 = vld [vmem:[#allocation2 + $0x12c] sm:$0xff]
      %v2283 = vpack.c.bf16 %v2248, %v2247
      %v2284 = vpack.c.bf16 %v2250, %v2249
      %v2285 = vpack.c.bf16 %v2252, %v2251
      %v2286 = vpack.c.bf16 %v2254, %v2253
      %v2287 = vpack.c.bf16 %v2256, %v2255
      %v2288 = vpack.c.bf16 %v2258, %v2257
      %v2289 = vpack.c.bf16 %v2260, %v2259
      %v2290 = vpack.c.bf16 %v2262, %v2261
      %v2291 = vpack.c.bf16 %v2264, %v2263
      %v2292 = vpack.c.bf16 %v2266, %v2265
      %v2293 = vpack.c.bf16 %v2268, %v2267
      %v2294 = vpack.c.bf16 %v2270, %v2269
      %v2295 = vpack.c.bf16 %v2272, %v2271
      %v2296 = vpack.c.bf16 %v2274, %v2273
      %v2297 = vpack.c.bf16 %v2276, %v2275
      %v2298 = vpack.c.bf16 %v2278, %v2277
      %v2299 = vpack.c.bf16 %v2280, %v2279
      %v2300 = vpack.c.bf16 %v2282, %v2281
      %s2301 = scalar_lea.vmem %s1, 10
      %v2302 = vld [vmem:[%s2301] sm:$0x3]
      %v2304 = vsel %vm172, %v2283, 0
      %v2307 = vsel %vm172, %v2284, 0
      %v2310 = vsel %vm172, %v2285, 0
      %v2313 = vsel %vm172, %v2286, 0
      %v2316 = vsel %vm172, %v2287, 0
      %v2319 = vsel %vm172, %v2288, 0
      %v2322 = vsel %vm172, %v2289, 0
      %v2325 = vsel %vm172, %v2290, 0
      %v2328 = vsel %vm172, %v2291, 0
      %v2331 = vsel %vm172, %v2292, 0
      %v2334 = vsel %vm172, %v2293, 0
      %v2337 = vsel %vm172, %v2294, 0
      %v2340 = vsel %vm172, %v2295, 0
      %v2343 = vsel %vm172, %v2296, 0
      %v2346 = vsel %vm172, %v2297, 0
      %v2349 = vsel %vm172, %v2298, 0
      %v2352 = vsel %vm172, %v2299, 0
      %v2355 = vsel %vm172, %v2300, 0
      %v2358 = vsel %vm437, %v2302, 0
      %2360 = vmatprep.subr.bf16.mxu0 0
      %2361 = vmatpush1.bf16.msra.mxu0 %v2358
      %2362 = vmatprep.subr.bf16.mxu0 0
      %2363 = vmatpush1.bf16.msra.mxu0 0
      %2364 = vmatprep.subr.bf16.mxu0 0
      %2365 = vmatpush1.bf16.msra.mxu0 0
      %2366 = vmatprep.subr.bf16.mxu0 0
      %2367 = vmatpush1.bf16.msra.mxu0 0
      %2368 = vmatprep.subr.bf16.mxu0 0
      %2369 = vmatpush1.bf16.msra.mxu0 0
      %2370 = vmatprep.subr.bf16.mxu0 0
      %2371 = vmatpush1.bf16.msra.mxu0 0
      %2372 = vmatprep.subr.bf16.mxu0 0
      %2373 = vmatpush1.bf16.msra.mxu0 0
      %2374 = vmatprep.subr.bf16.mxu0 0
      %2375 = vmatpush1.bf16.msra.mxu0 0
      %2376 = vmatprep.subr.bf16.mxu0 0
      %2377 = vmatpush1.bf16.msra.mxu0 0
      %2378 = vmatprep.subr.bf16.mxu0 0
      %2379 = vmatpush1.bf16.msra.mxu0 0
      %2380 = vmatprep.subr.bf16.mxu0 0
      %2381 = vmatpush1.bf16.msra.mxu0 0
      %2382 = vmatprep.subr.bf16.mxu0 0
      %2383 = vmatpush1.bf16.msra.mxu0 0
      %2384 = vmatprep.subr.bf16.mxu0 0
      %2385 = vmatpush1.bf16.msra.mxu0 0
      %2386 = vmatprep.subr.bf16.mxu0 0
      %2387 = vmatpush1.bf16.msra.mxu0 0
      %2388 = vmatprep.subr.bf16.mxu0 0
      %2389 = vmatpush1.bf16.msra.mxu0 0
      %2390 = vmatprep.subr.bf16.mxu0 0
      %2391 = vmatpush1.bf16.msra.mxu0 0
      %2392 = vmatprep.mubr.bf16.mxu0 0
      %2393 = vmatmul.mubr.bf16.gmra.mrb[0].mxu0 %v2304
      %v2394 = vpop.f32.mrb[0].mxu0
      %v2395 = vadd.f32 0.0, %v2394
      %v2396 = vpop.f32.mrb[0].mxu0
      %v2397 = vpop.f32.mrb[0].mxu0
      %v2398 = vadd.f32 0.0, %v2397
      %v2399 = vpop.f32.mrb[0].mxu0
      %2400 = vmatprep.mubr.bf16.mxu0 0
      %2401 = vmatmul.mubr.bf16.gmra.mrb[0].mxu0 %v2307
      %v2402 = vpop.f32.mrb[0].mxu0
      %v2403 = vadd.f32 0.0, %v2402
      %v2404 = vpop.f32.mrb[0].mxu0
      %v2405 = vpop.f32.mrb[0].mxu0
      %v2406 = vadd.f32 0.0, %v2405
      %v2407 = vpop.f32.mrb[0].mxu0
      %2408 = vmatprep.mubr.bf16.mxu0 0
      %2409 = vmatmul.mubr.bf16.gmra.mrb[0].mxu0 %v2310
      %v2410 = vpop.f32.mrb[0].mxu0
      %v2411 = vadd.f32 0.0, %v2410
      %v2412 = vpop.f32.mrb[0].mxu0
      %v2413 = vpop.f32.mrb[0].mxu0
      %v2414 = vadd.f32 0.0, %v2413
      %v2415 = vpop.f32.mrb[0].mxu0
      %2416 = vmatprep.mubr.bf16.mxu0 0
      %2417 = vmatmul.mubr.bf16.gmra.mrb[0].mxu0 %v2313
      %v2418 = vpop.f32.mrb[0].mxu0
      %v2419 = vadd.f32 0.0, %v2418
      %v2420 = vpop.f32.mrb[0].mxu0
      %v2421 = vpop.f32.mrb[0].mxu0
      %v2422 = vadd.f32 0.0, %v2421
      %v2423 = vpop.f32.mrb[0].mxu0
      %2424 = vmatprep.mubr.bf16.mxu0 0
      %2425 = vmatmul.mubr.bf16.gmra.mrb[0].mxu0 %v2316
      %v2426 = vpop.f32.mrb[0].mxu0
      %v2427 = vadd.f32 0.0, %v2426
      %v2428 = vpop.f32.mrb[0].mxu0
      %v2429 = vpop.f32.mrb[0].mxu0
      %v2430 = vadd.f32 0.0, %v2429
      %v2431 = vpop.f32.mrb[0].mxu0
      %2432 = vmatprep.mubr.bf16.mxu0 0
      %2433 = vmatmul.mubr.bf16.gmra.mrb[0].mxu0 %v2319
      %v2434 = vpop.f32.mrb[0].mxu0
      %v2435 = vadd.f32 0.0, %v2434
      %v2436 = vpop.f32.mrb[0].mxu0
      %v2437 = vpop.f32.mrb[0].mxu0
      %v2438 = vadd.f32 0.0, %v2437
      %v2439 = vpop.f32.mrb[0].mxu0
      %2440 = vmatprep.mubr.bf16.mxu0 0
      %2441 = vmatmul.mubr.bf16.gmra.mrb[0].mxu0 %v2322
      %v2442 = vpop.f32.mrb[0].mxu0
      %v2443 = vadd.f32 0.0, %v2442
      %v2444 = vpop.f32.mrb[0].mxu0
      %v2445 = vpop.f32.mrb[0].mxu0
      %v2446 = vadd.f32 0.0, %v2445
      %v2447 = vpop.f32.mrb[0].mxu0
      %2448 = vmatprep.mubr.bf16.mxu0 0
      %2449 = vmatmul.mubr.bf16.gmra.mrb[0].mxu0 %v2325
      %v2450 = vpop.f32.mrb[0].mxu0
      %v2451 = vadd.f32 0.0, %v2450
      %v2452 = vpop.f32.mrb[0].mxu0
      %v2453 = vpop.f32.mrb[0].mxu0
      %v2454 = vadd.f32 0.0, %v2453
      %v2455 = vpop.f32.mrb[0].mxu0
      %2456 = vmatprep.mubr.bf16.mxu0 0
      %2457 = vmatmul.mubr.bf16.gmra.mrb[0].mxu0 %v2328
      %v2458 = vpop.f32.mrb[0].mxu0
      %v2459 = vadd.f32 0.0, %v2458
      %v2460 = vpop.f32.mrb[0].mxu0
      %v2461 = vpop.f32.mrb[0].mxu0
      %v2462 = vadd.f32 0.0, %v2461
      %v2463 = vpop.f32.mrb[0].mxu0
      %2464 = vmatprep.mubr.bf16.mxu0 0
      %2465 = vmatmul.mubr.bf16.gmra.mrb[0].mxu0 %v2331
      %v2466 = vpop.f32.mrb[0].mxu0
      %v2467 = vadd.f32 0.0, %v2466
      %v2468 = vpop.f32.mrb[0].mxu0
      %v2469 = vpop.f32.mrb[0].mxu0
      %v2470 = vadd.f32 0.0, %v2469
      %v2471 = vpop.f32.mrb[0].mxu0
      %2472 = vmatprep.mubr.bf16.mxu0 0
      %2473 = vmatmul.mubr.bf16.gmra.mrb[0].mxu0 %v2334
      %v2474 = vpop.f32.mrb[0].mxu0
      %v2475 = vadd.f32 0.0, %v2474
      %v2476 = vpop.f32.mrb[0].mxu0
      %v2477 = vpop.f32.mrb[0].mxu0
      %v2478 = vadd.f32 0.0, %v2477
      %v2479 = vpop.f32.mrb[0].mxu0
      %2480 = vmatprep.mubr.bf16.mxu0 0
      %2481 = vmatmul.mubr.bf16.gmra.mrb[0].mxu0 %v2337
      %v2482 = vpop.f32.mrb[0].mxu0
      %v2483 = vadd.f32 0.0, %v2482
      %v2484 = vpop.f32.mrb[0].mxu0
      %v2485 = vpop.f32.mrb[0].mxu0
      %v2486 = vadd.f32 0.0, %v2485
      %v2487 = vpop.f32.mrb[0].mxu0
      %2488 = vmatprep.mubr.bf16.mxu0 0
      %2489 = vmatmul.mubr.bf16.gmra.mrb[0].mxu0 %v2340
      %v2490 = vpop.f32.mrb[0].mxu0
      %v2491 = vadd.f32 0.0, %v2490
      %v2492 = vpop.f32.mrb[0].mxu0
      %v2493 = vpop.f32.mrb[0].mxu0
      %v2494 = vadd.f32 0.0, %v2493
      %v2495 = vpop.f32.mrb[0].mxu0
      %2496 = vmatprep.mubr.bf16.mxu0 0
      %2497 = vmatmul.mubr.bf16.gmra.mrb[0].mxu0 %v2343
      %v2498 = vpop.f32.mrb[0].mxu0
      %v2499 = vadd.f32 0.0, %v2498
      %v2500 = vpop.f32.mrb[0].mxu0
      %v2501 = vpop.f32.mrb[0].mxu0
      %v2502 = vadd.f32 0.0, %v2501
      %v2503 = vpop.f32.mrb[0].mxu0
      %2504 = vmatprep.mubr.bf16.mxu0 0
      %2505 = vmatmul.mubr.bf16.gmra.mrb[0].mxu0 %v2346
      %v2506 = vpop.f32.mrb[0].mxu0
      %v2507 = vadd.f32 0.0, %v2506
      %v2508 = vpop.f32.mrb[0].mxu0
      %v2509 = vpop.f32.mrb[0].mxu0
      %v2510 = vadd.f32 0.0, %v2509
      %v2511 = vpop.f32.mrb[0].mxu0
      %2512 = vmatprep.mubr.bf16.mxu0 0
      %2513 = vmatmul.mubr.bf16.gmra.mrb[0].mxu0 %v2349
      %v2514 = vpop.f32.mrb[0].mxu0
      %v2515 = vadd.f32 0.0, %v2514
      %v2516 = vpop.f32.mrb[0].mxu0
      %v2517 = vpop.f32.mrb[0].mxu0
      %v2518 = vadd.f32 0.0, %v2517
      %v2519 = vpop.f32.mrb[0].mxu0
      %2520 = vmatprep.mubr.bf16.mxu0 0
      %2521 = vmatmul.mubr.bf16.gmra.mrb[0].mxu0 %v2352
      %v2522 = vpop.f32.mrb[0].mxu0
      %v2523 = vadd.f32 0.0, %v2522
      %v2524 = vpop.f32.mrb[0].mxu0
      %v2525 = vpop.f32.mrb[0].mxu0
      %v2526 = vadd.f32 0.0, %v2525
      %v2527 = vpop.f32.mrb[0].mxu0
      %2528 = vmatprep.mubr.bf16.mxu0 0
      %2529 = vmatmul.mubr.bf16.gmra.mrb[0].mxu0 %v2355
      %v2530 = vpop.f32.mrb[0].mxu0
      %v2531 = vadd.f32 0.0, %v2530
      %v2532 = vpop.f32.mrb[0].mxu0
      %v2533 = vpop.f32.mrb[0].mxu0
      %v2534 = vadd.f32 0.0, %v2533
      %v2535 = vpop.f32.mrb[0].mxu0
      %2536 = vdwg.mxu0
      %v2537 = vld [vmem:[#allocation3] sm:$0xff]
      %v2538 = vld [vmem:[#allocation3 + $0x8] sm:$0xff]
      %v2539 = vld [vmem:[#allocation3 + $0x10] sm:$0xff]
      %v2540 = vld [vmem:[#allocation3 + $0x18] sm:$0xff]
      %v2541 = vld [vmem:[#allocation3 + $0x20] sm:$0xff]
      %v2542 = vld [vmem:[#allocation3 + $0x28] sm:$0xff]
      %v2543 = vld [vmem:[#allocation3 + $0x30] sm:$0xff]
      %v2544 = vld [vmem:[#allocation3 + $0x38] sm:$0xff]
      %v2545 = vld [vmem:[#allocation3 + $0x40] sm:$0xff]
      %v2546 = vld [vmem:[#allocation3 + $0x48] sm:$0xff]
      %v2547 = vld [vmem:[#allocation3 + $0x50] sm:$0xff]
      %v2548 = vld [vmem:[#allocation3 + $0x58] sm:$0xff]
      %v2549 = vld [vmem:[#allocation3 + $0x60] sm:$0xff]
      %v2550 = vld [vmem:[#allocation3 + $0x68] sm:$0xff]
      %v2551 = vld [vmem:[#allocation3 + $0x70] sm:$0xff]
      %v2552 = vld [vmem:[#allocation3 + $0x78] sm:$0xff]
      %v2553 = vld [vmem:[#allocation3 + $0x80] sm:$0xff]
      %v2554 = vld [vmem:[#allocation3 + $0x88] sm:$0xff]
      %v2555 = vld [vmem:[#allocation3 + $0x90] sm:$0xff]
      %v2556 = vld [vmem:[#allocation3 + $0x98] sm:$0xff]
      %v2557 = vld [vmem:[#allocation3 + $0xa0] sm:$0xff]
      %v2558 = vld [vmem:[#allocation3 + $0xa8] sm:$0xff]
      %v2559 = vld [vmem:[#allocation3 + $0xb0] sm:$0xff]
      %v2560 = vld [vmem:[#allocation3 + $0xb8] sm:$0xff]
      %v2561 = vld [vmem:[#allocation3 + $0xc0] sm:$0xff]
      %v2562 = vld [vmem:[#allocation3 + $0xc8] sm:$0xff]
      %v2563 = vld [vmem:[#allocation3 + $0xd0] sm:$0xff]
      %v2564 = vld [vmem:[#allocation3 + $0xd8] sm:$0xff]
      %v2565 = vld [vmem:[#allocation3 + $0xe0] sm:$0xff]
      %v2566 = vld [vmem:[#allocation3 + $0xe8] sm:$0xff]
      %v2567 = vld [vmem:[#allocation3 + $0xf0] sm:$0xff]
      %v2568 = vld [vmem:[#allocation3 + $0xf8] sm:$0xff]
      %v2569 = vld [vmem:[#allocation3 + $0x100] sm:$0xff]
      %v2570 = vld [vmem:[#allocation3 + $0x108] sm:$0xff]
      %v2571 = vld [vmem:[#allocation3 + $0x110] sm:$0xff]
      %v2572 = vld [vmem:[#allocation3 + $0x118] sm:$0xff]
      %v2573 = vadd.f32 %v2537, %v2395
      %v2574 = vadd.f32 %v2538, %v2398
      %v2575 = vadd.f32 %v2539, %v2403
      %v2576 = vadd.f32 %v2540, %v2406
      %v2577 = vadd.f32 %v2541, %v2411
      %v2578 = vadd.f32 %v2542, %v2414
      %v2579 = vadd.f32 %v2543, %v2419
      %v2580 = vadd.f32 %v2544, %v2422
      %v2581 = vadd.f32 %v2545, %v2427
      %v2582 = vadd.f32 %v2546, %v2430
      %v2583 = vadd.f32 %v2547, %v2435
      %v2584 = vadd.f32 %v2548, %v2438
      %v2585 = vadd.f32 %v2549, %v2443
      %v2586 = vadd.f32 %v2550, %v2446
      %v2587 = vadd.f32 %v2551, %v2451
      %v2588 = vadd.f32 %v2552, %v2454
      %v2589 = vadd.f32 %v2553, %v2459
      %v2590 = vadd.f32 %v2554, %v2462
      %v2591 = vadd.f32 %v2555, %v2467
      %v2592 = vadd.f32 %v2556, %v2470
      %v2593 = vadd.f32 %v2557, %v2475
      %v2594 = vadd.f32 %v2558, %v2478
      %v2595 = vadd.f32 %v2559, %v2483
      %v2596 = vadd.f32 %v2560, %v2486
      %v2597 = vadd.f32 %v2561, %v2491
      %v2598 = vadd.f32 %v2562, %v2494
      %v2599 = vadd.f32 %v2563, %v2499
      %v2600 = vadd.f32 %v2564, %v2502
      %v2601 = vadd.f32 %v2565, %v2507
      %v2602 = vadd.f32 %v2566, %v2510
      %v2603 = vadd.f32 %v2567, %v2515
      %v2604 = vadd.f32 %v2568, %v2518
      %v2605 = vadd.f32 %v2569, %v2523
      %v2606 = vadd.f32 %v2570, %v2526
      %v2607 = vadd.f32 %v2571, %v2531
      %v2608 = vadd.f32 %v2572, %v2534
      %2609 = vst.msk [vmem:[#allocation3] sm:$0xff] %vm618, %v2573
      %2610 = vst.msk [vmem:[#allocation3 + $0x8] sm:$0xff] %vm618, %v2574
      %2611 = vst.msk [vmem:[#allocation3 + $0x10] sm:$0xff] %vm618, %v2575
      %2612 = vst.msk [vmem:[#allocation3 + $0x18] sm:$0xff] %vm618, %v2576
      %2613 = vst.msk [vmem:[#allocation3 + $0x20] sm:$0xff] %vm618, %v2577
      %2614 = vst.msk [vmem:[#allocation3 + $0x28] sm:$0xff] %vm618, %v2578
      %2615 = vst.msk [vmem:[#allocation3 + $0x30] sm:$0xff] %vm618, %v2579
      %2616 = vst.msk [vmem:[#allocation3 + $0x38] sm:$0xff] %vm618, %v2580
      %2617 = vst.msk [vmem:[#allocation3 + $0x40] sm:$0xff] %vm618, %v2581
      %2618 = vst.msk [vmem:[#allocation3 + $0x48] sm:$0xff] %vm618, %v2582
      %2619 = vst.msk [vmem:[#allocation3 + $0x50] sm:$0xff] %vm618, %v2583
      %2620 = vst.msk [vmem:[#allocation3 + $0x58] sm:$0xff] %vm618, %v2584
      %2621 = vst.msk [vmem:[#allocation3 + $0x60] sm:$0xff] %vm618, %v2585
      %2622 = vst.msk [vmem:[#allocation3 + $0x68] sm:$0xff] %vm618, %v2586
      %2623 = vst.msk [vmem:[#allocation3 + $0x70] sm:$0xff] %vm618, %v2587
      %2624 = vst.msk [vmem:[#allocation3 + $0x78] sm:$0xff] %vm618, %v2588
      %2625 = vst.msk [vmem:[#allocation3 + $0x80] sm:$0xff] %vm618, %v2589
      %2626 = vst.msk [vmem:[#allocation3 + $0x88] sm:$0xff] %vm618, %v2590
      %2627 = vst.msk [vmem:[#allocation3 + $0x90] sm:$0xff] %vm618, %v2591
      %2628 = vst.msk [vmem:[#allocation3 + $0x98] sm:$0xff] %vm618, %v2592
      %2629 = vst.msk [vmem:[#allocation3 + $0xa0] sm:$0xff] %vm618, %v2593
      %2630 = vst.msk [vmem:[#allocation3 + $0xa8] sm:$0xff] %vm618, %v2594
      %2631 = vst.msk [vmem:[#allocation3 + $0xb0] sm:$0xff] %vm618, %v2595
      %2632 = vst.msk [vmem:[#allocation3 + $0xb8] sm:$0xff] %vm618, %v2596
      %2633 = vst.msk [vmem:[#allocation3 + $0xc0] sm:$0xff] %vm618, %v2597
      %2634 = vst.msk [vmem:[#allocation3 + $0xc8] sm:$0xff] %vm618, %v2598
      %2635 = vst.msk [vmem:[#allocation3 + $0xd0] sm:$0xff] %vm618, %v2599
      %2636 = vst.msk [vmem:[#allocation3 + $0xd8] sm:$0xff] %vm618, %v2600
      %2637 = vst.msk [vmem:[#allocation3 + $0xe0] sm:$0xff] %vm618, %v2601
      %2638 = vst.msk [vmem:[#allocation3 + $0xe8] sm:$0xff] %vm618, %v2602
      %2639 = vst.msk [vmem:[#allocation3 + $0xf0] sm:$0xff] %vm618, %v2603
      %2640 = vst.msk [vmem:[#allocation3 + $0xf8] sm:$0xff] %vm618, %v2604
      %2641 = vst.msk [vmem:[#allocation3 + $0x100] sm:$0xff] %vm618, %v2605
      %2642 = vst.msk [vmem:[#allocation3 + $0x108] sm:$0xff] %vm618, %v2606
      %2643 = vst.msk [vmem:[#allocation3 + $0x110] sm:$0xff] %vm618, %v2607
      %2644 = vst.msk [vmem:[#allocation3 + $0x118] sm:$0xff] %vm618, %v2608
      %v2645 = vld [vmem:[#allocation2 + $0x24] sm:$0xff]
      %v2646 = vld [vmem:[#allocation2 + $0x2c] sm:$0xff]
      %v2647 = vld [vmem:[#allocation2 + $0x34] sm:$0xff]
      %v2648 = vld [vmem:[#allocation2 + $0x3c] sm:$0xff]
      %v2649 = vld [vmem:[#allocation2 + $0x44] sm:$0xff]
      %v2650 = vld [vmem:[#allocation2 + $0x4c] sm:$0xff]
      %v2651 = vld [vmem:[#allocation2 + $0x54] sm:$0xff]
      %v2652 = vld [vmem:[#allocation2 + $0x5c] sm:$0xff]
      %v2653 = vld [vmem:[#allocation2 + $0x64] sm:$0xff]
      %v2654 = vld [vmem:[#allocation2 + $0x6c] sm:$0xff]
      %v2655 = vld [vmem:[#allocation2 + $0x74] sm:$0xff]
      %v2656 = vld [vmem:[#allocation2 + $0x7c] sm:$0xff]
      %v2657 = vld [vmem:[#allocation2 + $0x84] sm:$0xff]
      %v2658 = vld [vmem:[#allocation2 + $0x8c] sm:$0xff]
      %v2659 = vld [vmem:[#allocation2 + $0x94] sm:$0xff]
      %v2660 = vld [vmem:[#allocation2 + $0x9c] sm:$0xff]
      %v2661 = vld [vmem:[#allocation2 + $0xa4] sm:$0xff]
      %v2662 = vld [vmem:[#allocation2 + $0xac] sm:$0xff]
      %v2663 = vld [vmem:[#allocation2 + $0xb4] sm:$0xff]
      %v2664 = vld [vmem:[#allocation2 + $0xbc] sm:$0xff]
      %v2665 = vld [vmem:[#allocation2 + $0xc4] sm:$0xff]
      %v2666 = vld [vmem:[#allocation2 + $0xcc] sm:$0xff]
      %v2667 = vld [vmem:[#allocation2 + $0xd4] sm:$0xff]
      %v2668 = vld [vmem:[#allocation2 + $0xdc] sm:$0xff]
      %v2669 = vld [vmem:[#allocation2 + $0xe4] sm:$0xff]
      %v2670 = vld [vmem:[#allocation2 + $0xec] sm:$0xff]
      %v2671 = vld [vmem:[#allocation2 + $0xf4] sm:$0xff]
      %v2672 = vld [vmem:[#allocation2 + $0xfc] sm:$0xff]
      %v2673 = vld [vmem:[#allocation2 + $0x104] sm:$0xff]
      %v2674 = vld [vmem:[#allocation2 + $0x10c] sm:$0xff]
      %v2675 = vld [vmem:[#allocation2 + $0x114] sm:$0xff]
      %v2676 = vld [vmem:[#allocation2 + $0x11c] sm:$0xff]
      %v2677 = vld [vmem:[#allocation2 + $0x124] sm:$0xff]
      %v2678 = vld [vmem:[#allocation2 + $0x12c] sm:$0xff]
      %v2679 = vld [vmem:[#allocation2 + $0x134] sm:$0xff]
      %v2680 = vld [vmem:[#allocation2 + $0x13c] sm:$0xff]
      %v2681 = vpack.c.bf16 %v2646, %v2645
      %v2682 = vpack.c.bf16 %v2648, %v2647
      %v2683 = vpack.c.bf16 %v2650, %v2649
      %v2684 = vpack.c.bf16 %v2652, %v2651
      %v2685 = vpack.c.bf16 %v2654, %v2653
      %v2686 = vpack.c.bf16 %v2656, %v2655
      %v2687 = vpack.c.bf16 %v2658, %v2657
      %v2688 = vpack.c.bf16 %v2660, %v2659
      %v2689 = vpack.c.bf16 %v2662, %v2661
      %v2690 = vpack.c.bf16 %v2664, %v2663
      %v2691 = vpack.c.bf16 %v2666, %v2665
      %v2692 = vpack.c.bf16 %v2668, %v2667
      %v2693 = vpack.c.bf16 %v2670, %v2669
      %v2694 = vpack.c.bf16 %v2672, %v2671
      %v2695 = vpack.c.bf16 %v2674, %v2673
      %v2696 = vpack.c.bf16 %v2676, %v2675
      %v2697 = vpack.c.bf16 %v2678, %v2677
      %v2698 = vpack.c.bf16 %v2680, %v2679
      %s2699 = scalar_lea.vmem %s1, 12
      %v2700 = vld [vmem:[%s2699] sm:$0x3]
      %v2702 = vsel %vm172, %v2681, 0
      %v2705 = vsel %vm172, %v2682, 0
      %v2708 = vsel %vm172, %v2683, 0
      %v2711 = vsel %vm172, %v2684, 0
      %v2714 = vsel %vm172, %v2685, 0
      %v2717 = vsel %vm172, %v2686, 0
      %v2720 = vsel %vm172, %v2687, 0
      %v2723 = vsel %vm172, %v2688, 0
      %v2726 = vsel %vm172, %v2689, 0
      %v2729 = vsel %vm172, %v2690, 0
      %v2732 = vsel %vm172, %v2691, 0
      %v2735 = vsel %vm172, %v2692, 0
      %v2738 = vsel %vm172, %v2693, 0
      %v2741 = vsel %vm172, %v2694, 0
      %v2744 = vsel %vm172, %v2695, 0
      %v2747 = vsel %vm172, %v2696, 0
      %v2750 = vsel %vm172, %v2697, 0
      %v2753 = vsel %vm172, %v2698, 0
      %v2756 = vsel %vm437, %v2700, 0
      %2758 = vmatprep.subr.bf16.mxu0 0
      %2759 = vmatpush1.bf16.msra.mxu0 %v2756
      %2760 = vmatprep.subr.bf16.mxu0 0
      %2761 = vmatpush1.bf16.msra.mxu0 0
      %2762 = vmatprep.subr.bf16.mxu0 0
      %2763 = vmatpush1.bf16.msra.mxu0 0
      %2764 = vmatprep.subr.bf16.mxu0 0
      %2765 = vmatpush1.bf16.msra.mxu0 0
      %2766 = vmatprep.subr.bf16.mxu0 0
      %2767 = vmatpush1.bf16.msra.mxu0 0
      %2768 = vmatprep.subr.bf16.mxu0 0
      %2769 = vmatpush1.bf16.msra.mxu0 0
      %2770 = vmatprep.subr.bf16.mxu0 0
      %2771 = vmatpush1.bf16.msra.mxu0 0
      %2772 = vmatprep.subr.bf16.mxu0 0
      %2773 = vmatpush1.bf16.msra.mxu0 0
      %2774 = vmatprep.subr.bf16.mxu0 0
      %2775 = vmatpush1.bf16.msra.mxu0 0
      %2776 = vmatprep.subr.bf16.mxu0 0
      %2777 = vmatpush1.bf16.msra.mxu0 0
      %2778 = vmatprep.subr.bf16.mxu0 0
      %2779 = vmatpush1.bf16.msra.mxu0 0
      %2780 = vmatprep.subr.bf16.mxu0 0
      %2781 = vmatpush1.bf16.msra.mxu0 0
      %2782 = vmatprep.subr.bf16.mxu0 0
      %2783 = vmatpush1.bf16.msra.mxu0 0
      %2784 = vmatprep.subr.bf16.mxu0 0
      %2785 = vmatpush1.bf16.msra.mxu0 0
      %2786 = vmatprep.subr.bf16.mxu0 0
      %2787 = vmatpush1.bf16.msra.mxu0 0
      %2788 = vmatprep.subr.bf16.mxu0 0
      %2789 = vmatpush1.bf16.msra.mxu0 0
      %2790 = vmatprep.mubr.bf16.mxu0 0
      %2791 = vmatmul.mubr.bf16.gmra.mrb[0].mxu0 %v2702
      %v2792 = vpop.f32.mrb[0].mxu0
      %v2793 = vadd.f32 0.0, %v2792
      %v2794 = vpop.f32.mrb[0].mxu0
      %v2795 = vpop.f32.mrb[0].mxu0
      %v2796 = vadd.f32 0.0, %v2795
      %v2797 = vpop.f32.mrb[0].mxu0
      %2798 = vmatprep.mubr.bf16.mxu0 0
      %2799 = vmatmul.mubr.bf16.gmra.mrb[0].mxu0 %v2705
      %v2800 = vpop.f32.mrb[0].mxu0
      %v2801 = vadd.f32 0.0, %v2800
      %v2802 = vpop.f32.mrb[0].mxu0
      %v2803 = vpop.f32.mrb[0].mxu0
      %v2804 = vadd.f32 0.0, %v2803
      %v2805 = vpop.f32.mrb[0].mxu0
      %2806 = vmatprep.mubr.bf16.mxu0 0
      %2807 = vmatmul.mubr.bf16.gmra.mrb[0].mxu0 %v2708
      %v2808 = vpop.f32.mrb[0].mxu0
      %v2809 = vadd.f32 0.0, %v2808
      %v2810 = vpop.f32.mrb[0].mxu0
      %v2811 = vpop.f32.mrb[0].mxu0
      %v2812 = vadd.f32 0.0, %v2811
      %v2813 = vpop.f32.mrb[0].mxu0
      %2814 = vmatprep.mubr.bf16.mxu0 0
      %2815 = vmatmul.mubr.bf16.gmra.mrb[0].mxu0 %v2711
      %v2816 = vpop.f32.mrb[0].mxu0
      %v2817 = vadd.f32 0.0, %v2816
      %v2818 = vpop.f32.mrb[0].mxu0
      %v2819 = vpop.f32.mrb[0].mxu0
      %v2820 = vadd.f32 0.0, %v2819
      %v2821 = vpop.f32.mrb[0].mxu0
      %2822 = vmatprep.mubr.bf16.mxu0 0
      %2823 = vmatmul.mubr.bf16.gmra.mrb[0].mxu0 %v2714
      %v2824 = vpop.f32.mrb[0].mxu0
      %v2825 = vadd.f32 0.0, %v2824
      %v2826 = vpop.f32.mrb[0].mxu0
      %v2827 = vpop.f32.mrb[0].mxu0
      %v2828 = vadd.f32 0.0, %v2827
      %v2829 = vpop.f32.mrb[0].mxu0
      %2830 = vmatprep.mubr.bf16.mxu0 0
      %2831 = vmatmul.mubr.bf16.gmra.mrb[0].mxu0 %v2717
      %v2832 = vpop.f32.mrb[0].mxu0
      %v2833 = vadd.f32 0.0, %v2832
      %v2834 = vpop.f32.mrb[0].mxu0
      %v2835 = vpop.f32.mrb[0].mxu0
      %v2836 = vadd.f32 0.0, %v2835
      %v2837 = vpop.f32.mrb[0].mxu0
      %2838 = vmatprep.mubr.bf16.mxu0 0
      %2839 = vmatmul.mubr.bf16.gmra.mrb[0].mxu0 %v2720
      %v2840 = vpop.f32.mrb[0].mxu0
      %v2841 = vadd.f32 0.0, %v2840
      %v2842 = vpop.f32.mrb[0].mxu0
      %v2843 = vpop.f32.mrb[0].mxu0
      %v2844 = vadd.f32 0.0, %v2843
      %v2845 = vpop.f32.mrb[0].mxu0
      %2846 = vmatprep.mubr.bf16.mxu0 0
      %2847 = vmatmul.mubr.bf16.gmra.mrb[0].mxu0 %v2723
      %v2848 = vpop.f32.mrb[0].mxu0
      %v2849 = vadd.f32 0.0, %v2848
      %v2850 = vpop.f32.mrb[0].mxu0
      %v2851 = vpop.f32.mrb[0].mxu0
      %v2852 = vadd.f32 0.0, %v2851
      %v2853 = vpop.f32.mrb[0].mxu0
      %2854 = vmatprep.mubr.bf16.mxu0 0
      %2855 = vmatmul.mubr.bf16.gmra.mrb[0].mxu0 %v2726
      %v2856 = vpop.f32.mrb[0].mxu0
      %v2857 = vadd.f32 0.0, %v2856
      %v2858 = vpop.f32.mrb[0].mxu0
      %v2859 = vpop.f32.mrb[0].mxu0
      %v2860 = vadd.f32 0.0, %v2859
      %v2861 = vpop.f32.mrb[0].mxu0
      %2862 = vmatprep.mubr.bf16.mxu0 0
      %2863 = vmatmul.mubr.bf16.gmra.mrb[0].mxu0 %v2729
      %v2864 = vpop.f32.mrb[0].mxu0
      %v2865 = vadd.f32 0.0, %v2864
      %v2866 = vpop.f32.mrb[0].mxu0
      %v2867 = vpop.f32.mrb[0].mxu0
      %v2868 = vadd.f32 0.0, %v2867
      %v2869 = vpop.f32.mrb[0].mxu0
      %2870 = vmatprep.mubr.bf16.mxu0 0
      %2871 = vmatmul.mubr.bf16.gmra.mrb[0].mxu0 %v2732
      %v2872 = vpop.f32.mrb[0].mxu0
      %v2873 = vadd.f32 0.0, %v2872
      %v2874 = vpop.f32.mrb[0].mxu0
      %v2875 = vpop.f32.mrb[0].mxu0
      %v2876 = vadd.f32 0.0, %v2875
      %v2877 = vpop.f32.mrb[0].mxu0
      %2878 = vmatprep.mubr.bf16.mxu0 0
      %2879 = vmatmul.mubr.bf16.gmra.mrb[0].mxu0 %v2735
      %v2880 = vpop.f32.mrb[0].mxu0
      %v2881 = vadd.f32 0.0, %v2880
      %v2882 = vpop.f32.mrb[0].mxu0
      %v2883 = vpop.f32.mrb[0].mxu0
      %v2884 = vadd.f32 0.0, %v2883
      %v2885 = vpop.f32.mrb[0].mxu0
      %2886 = vmatprep.mubr.bf16.mxu0 0
      %2887 = vmatmul.mubr.bf16.gmra.mrb[0].mxu0 %v2738
      %v2888 = vpop.f32.mrb[0].mxu0
      %v2889 = vadd.f32 0.0, %v2888
      %v2890 = vpop.f32.mrb[0].mxu0
      %v2891 = vpop.f32.mrb[0].mxu0
      %v2892 = vadd.f32 0.0, %v2891
      %v2893 = vpop.f32.mrb[0].mxu0
      %2894 = vmatprep.mubr.bf16.mxu0 0
      %2895 = vmatmul.mubr.bf16.gmra.mrb[0].mxu0 %v2741
      %v2896 = vpop.f32.mrb[0].mxu0
      %v2897 = vadd.f32 0.0, %v2896
      %v2898 = vpop.f32.mrb[0].mxu0
      %v2899 = vpop.f32.mrb[0].mxu0
      %v2900 = vadd.f32 0.0, %v2899
      %v2901 = vpop.f32.mrb[0].mxu0
      %2902 = vmatprep.mubr.bf16.mxu0 0
      %2903 = vmatmul.mubr.bf16.gmra.mrb[0].mxu0 %v2744
      %v2904 = vpop.f32.mrb[0].mxu0
      %v2905 = vadd.f32 0.0, %v2904
      %v2906 = vpop.f32.mrb[0].mxu0
      %v2907 = vpop.f32.mrb[0].mxu0
      %v2908 = vadd.f32 0.0, %v2907
      %v2909 = vpop.f32.mrb[0].mxu0
      %2910 = vmatprep.mubr.bf16.mxu0 0
      %2911 = vmatmul.mubr.bf16.gmra.mrb[0].mxu0 %v2747
      %v2912 = vpop.f32.mrb[0].mxu0
      %v2913 = vadd.f32 0.0, %v2912
      %v2914 = vpop.f32.mrb[0].mxu0
      %v2915 = vpop.f32.mrb[0].mxu0
      %v2916 = vadd.f32 0.0, %v2915
      %v2917 = vpop.f32.mrb[0].mxu0
      %2918 = vmatprep.mubr.bf16.mxu0 0
      %2919 = vmatmul.mubr.bf16.gmra.mrb[0].mxu0 %v2750
      %v2920 = vpop.f32.mrb[0].mxu0
      %v2921 = vadd.f32 0.0, %v2920
      %v2922 = vpop.f32.mrb[0].mxu0
      %v2923 = vpop.f32.mrb[0].mxu0
      %v2924 = vadd.f32 0.0, %v2923
      %v2925 = vpop.f32.mrb[0].mxu0
      %2926 = vmatprep.mubr.bf16.mxu0 0
      %2927 = vmatmul.mubr.bf16.gmra.mrb[0].mxu0 %v2753
      %v2928 = vpop.f32.mrb[0].mxu0
      %v2929 = vadd.f32 0.0, %v2928
      %v2930 = vpop.f32.mrb[0].mxu0
      %v2931 = vpop.f32.mrb[0].mxu0
      %v2932 = vadd.f32 0.0, %v2931
      %v2933 = vpop.f32.mrb[0].mxu0
      %2934 = vdwg.mxu0
      %v2935 = vld [vmem:[#allocation3] sm:$0xff]
      %v2936 = vld [vmem:[#allocation3 + $0x8] sm:$0xff]
      %v2937 = vld [vmem:[#allocation3 + $0x10] sm:$0xff]
      %v2938 = vld [vmem:[#allocation3 + $0x18] sm:$0xff]
      %v2939 = vld [vmem:[#allocation3 + $0x20] sm:$0xff]
      %v2940 = vld [vmem:[#allocation3 + $0x28] sm:$0xff]
      %v2941 = vld [vmem:[#allocation3 + $0x30] sm:$0xff]
      %v2942 = vld [vmem:[#allocation3 + $0x38] sm:$0xff]
      %v2943 = vld [vmem:[#allocation3 + $0x40] sm:$0xff]
      %v2944 = vld [vmem:[#allocation3 + $0x48] sm:$0xff]
      %v2945 = vld [vmem:[#allocation3 + $0x50] sm:$0xff]
      %v2946 = vld [vmem:[#allocation3 + $0x58] sm:$0xff]
      %v2947 = vld [vmem:[#allocation3 + $0x60] sm:$0xff]
      %v2948 = vld [vmem:[#allocation3 + $0x68] sm:$0xff]
      %v2949 = vld [vmem:[#allocation3 + $0x70] sm:$0xff]
      %v2950 = vld [vmem:[#allocation3 + $0x78] sm:$0xff]
      %v2951 = vld [vmem:[#allocation3 + $0x80] sm:$0xff]
      %v2952 = vld [vmem:[#allocation3 + $0x88] sm:$0xff]
      %v2953 = vld [vmem:[#allocation3 + $0x90] sm:$0xff]
      %v2954 = vld [vmem:[#allocation3 + $0x98] sm:$0xff]
      %v2955 = vld [vmem:[#allocation3 + $0xa0] sm:$0xff]
      %v2956 = vld [vmem:[#allocation3 + $0xa8] sm:$0xff]
      %v2957 = vld [vmem:[#allocation3 + $0xb0] sm:$0xff]
      %v2958 = vld [vmem:[#allocation3 + $0xb8] sm:$0xff]
      %v2959 = vld [vmem:[#allocation3 + $0xc0] sm:$0xff]
      %v2960 = vld [vmem:[#allocation3 + $0xc8] sm:$0xff]
      %v2961 = vld [vmem:[#allocation3 + $0xd0] sm:$0xff]
      %v2962 = vld [vmem:[#allocation3 + $0xd8] sm:$0xff]
      %v2963 = vld [vmem:[#allocation3 + $0xe0] sm:$0xff]
      %v2964 = vld [vmem:[#allocation3 + $0xe8] sm:$0xff]
      %v2965 = vld [vmem:[#allocation3 + $0xf0] sm:$0xff]
      %v2966 = vld [vmem:[#allocation3 + $0xf8] sm:$0xff]
      %v2967 = vld [vmem:[#allocation3 + $0x100] sm:$0xff]
      %v2968 = vld [vmem:[#allocation3 + $0x108] sm:$0xff]
      %v2969 = vld [vmem:[#allocation3 + $0x110] sm:$0xff]
      %v2970 = vld [vmem:[#allocation3 + $0x118] sm:$0xff]
      %v2971 = vadd.f32 %v2935, %v2793
      %v2972 = vadd.f32 %v2936, %v2796
      %v2973 = vadd.f32 %v2937, %v2801
      %v2974 = vadd.f32 %v2938, %v2804
      %v2975 = vadd.f32 %v2939, %v2809
      %v2976 = vadd.f32 %v2940, %v2812
      %v2977 = vadd.f32 %v2941, %v2817
      %v2978 = vadd.f32 %v2942, %v2820
      %v2979 = vadd.f32 %v2943, %v2825
      %v2980 = vadd.f32 %v2944, %v2828
      %v2981 = vadd.f32 %v2945, %v2833
      %v2982 = vadd.f32 %v2946, %v2836
      %v2983 = vadd.f32 %v2947, %v2841
      %v2984 = vadd.f32 %v2948, %v2844
      %v2985 = vadd.f32 %v2949, %v2849
      %v2986 = vadd.f32 %v2950, %v2852
      %v2987 = vadd.f32 %v2951, %v2857
      %v2988 = vadd.f32 %v2952, %v2860
      %v2989 = vadd.f32 %v2953, %v2865
      %v2990 = vadd.f32 %v2954, %v2868
      %v2991 = vadd.f32 %v2955, %v2873
      %v2992 = vadd.f32 %v2956, %v2876
      %v2993 = vadd.f32 %v2957, %v2881
      %v2994 = vadd.f32 %v2958, %v2884
      %v2995 = vadd.f32 %v2959, %v2889
      %v2996 = vadd.f32 %v2960, %v2892
      %v2997 = vadd.f32 %v2961, %v2897
      %v2998 = vadd.f32 %v2962, %v2900
      %v2999 = vadd.f32 %v2963, %v2905
      %v3000 = vadd.f32 %v2964, %v2908
      %v3001 = vadd.f32 %v2965, %v2913
      %v3002 = vadd.f32 %v2966, %v2916
      %v3003 = vadd.f32 %v2967, %v2921
      %v3004 = vadd.f32 %v2968, %v2924
      %v3005 = vadd.f32 %v2969, %v2929
      %v3006 = vadd.f32 %v2970, %v2932
      %3007 = vst.msk [vmem:[#allocation3] sm:$0xff] %vm618, %v2971
      %3008 = vst.msk [vmem:[#allocation3 + $0x8] sm:$0xff] %vm618, %v2972
      %3009 = vst.msk [vmem:[#allocation3 + $0x10] sm:$0xff] %vm618, %v2973
      %3010 = vst.msk [vmem:[#allocation3 + $0x18] sm:$0xff] %vm618, %v2974
      %3011 = vst.msk [vmem:[#allocation3 + $0x20] sm:$0xff] %vm618, %v2975
      %3012 = vst.msk [vmem:[#allocation3 + $0x28] sm:$0xff] %vm618, %v2976
      %3013 = vst.msk [vmem:[#allocation3 + $0x30] sm:$0xff] %vm618, %v2977
      %3014 = vst.msk [vmem:[#allocation3 + $0x38] sm:$0xff] %vm618, %v2978
      %3015 = vst.msk [vmem:[#allocation3 + $0x40] sm:$0xff] %vm618, %v2979
      %3016 = vst.msk [vmem:[#allocation3 + $0x48] sm:$0xff] %vm618, %v2980
      %3017 = vst.msk [vmem:[#allocation3 + $0x50] sm:$0xff] %vm618, %v2981
      %3018 = vst.msk [vmem:[#allocation3 + $0x58] sm:$0xff] %vm618, %v2982
      %3019 = vst.msk [vmem:[#allocation3 + $0x60] sm:$0xff] %vm618, %v2983
      %3020 = vst.msk [vmem:[#allocation3 + $0x68] sm:$0xff] %vm618, %v2984
      %3021 = vst.msk [vmem:[#allocation3 + $0x70] sm:$0xff] %vm618, %v2985
      %3022 = vst.msk [vmem:[#allocation3 + $0x78] sm:$0xff] %vm618, %v2986
      %3023 = vst.msk [vmem:[#allocation3 + $0x80] sm:$0xff] %vm618, %v2987
      %3024 = vst.msk [vmem:[#allocation3 + $0x88] sm:$0xff] %vm618, %v2988
      %3025 = vst.msk [vmem:[#allocation3 + $0x90] sm:$0xff] %vm618, %v2989
      %3026 = vst.msk [vmem:[#allocation3 + $0x98] sm:$0xff] %vm618, %v2990
      %3027 = vst.msk [vmem:[#allocation3 + $0xa0] sm:$0xff] %vm618, %v2991
      %3028 = vst.msk [vmem:[#allocation3 + $0xa8] sm:$0xff] %vm618, %v2992
      %3029 = vst.msk [vmem:[#allocation3 + $0xb0] sm:$0xff] %vm618, %v2993
      %3030 = vst.msk [vmem:[#allocation3 + $0xb8] sm:$0xff] %vm618, %v2994
      %3031 = vst.msk [vmem:[#allocation3 + $0xc0] sm:$0xff] %vm618, %v2995
      %3032 = vst.msk [vmem:[#allocation3 + $0xc8] sm:$0xff] %vm618, %v2996
      %3033 = vst.msk [vmem:[#allocation3 + $0xd0] sm:$0xff] %vm618, %v2997
      %3034 = vst.msk [vmem:[#allocation3 + $0xd8] sm:$0xff] %vm618, %v2998
      %3035 = vst.msk [vmem:[#allocation3 + $0xe0] sm:$0xff] %vm618, %v2999
      %3036 = vst.msk [vmem:[#allocation3 + $0xe8] sm:$0xff] %vm618, %v3000
      %3037 = vst.msk [vmem:[#allocation3 + $0xf0] sm:$0xff] %vm618, %v3001
      %3038 = vst.msk [vmem:[#allocation3 + $0xf8] sm:$0xff] %vm618, %v3002
      %3039 = vst.msk [vmem:[#allocation3 + $0x100] sm:$0xff] %vm618, %v3003
      %3040 = vst.msk [vmem:[#allocation3 + $0x108] sm:$0xff] %vm618, %v3004
      %3041 = vst.msk [vmem:[#allocation3 + $0x110] sm:$0xff] %vm618, %v3005
      %3042 = vst.msk [vmem:[#allocation3 + $0x118] sm:$0xff] %vm618, %v3006
      %v3043 = vld [vmem:[#allocation2 + $0x25] sm:$0xff]
      %v3044 = vld [vmem:[#allocation2 + $0x2d] sm:$0xff]
      %v3045 = vld [vmem:[#allocation2 + $0x35] sm:$0xff]
      %v3046 = vld [vmem:[#allocation2 + $0x3d] sm:$0xff]
      %v3047 = vld [vmem:[#allocation2 + $0x45] sm:$0xff]
      %v3048 = vld [vmem:[#allocation2 + $0x4d] sm:$0xff]
      %v3049 = vld [vmem:[#allocation2 + $0x55] sm:$0xff]
      %v3050 = vld [vmem:[#allocation2 + $0x5d] sm:$0xff]
      %v3051 = vld [vmem:[#allocation2 + $0x65] sm:$0xff]
      %v3052 = vld [vmem:[#allocation2 + $0x6d] sm:$0xff]
      %v3053 = vld [vmem:[#allocation2 + $0x75] sm:$0xff]
      %v3054 = vld [vmem:[#allocation2 + $0x7d] sm:$0xff]
      %v3055 = vld [vmem:[#allocation2 + $0x85] sm:$0xff]
      %v3056 = vld [vmem:[#allocation2 + $0x8d] sm:$0xff]
      %v3057 = vld [vmem:[#allocation2 + $0x95] sm:$0xff]
      %v3058 = vld [vmem:[#allocation2 + $0x9d] sm:$0xff]
      %v3059 = vld [vmem:[#allocation2 + $0xa5] sm:$0xff]
      %v3060 = vld [vmem:[#allocation2 + $0xad] sm:$0xff]
      %v3061 = vld [vmem:[#allocation2 + $0xb5] sm:$0xff]
      %v3062 = vld [vmem:[#allocation2 + $0xbd] sm:$0xff]
      %v3063 = vld [vmem:[#allocation2 + $0xc5] sm:$0xff]
      %v3064 = vld [vmem:[#allocation2 + $0xcd] sm:$0xff]
      %v3065 = vld [vmem:[#allocation2 + $0xd5] sm:$0xff]
      %v3066 = vld [vmem:[#allocation2 + $0xdd] sm:$0xff]
      %v3067 = vld [vmem:[#allocation2 + $0xe5] sm:$0xff]
      %v3068 = vld [vmem:[#allocation2 + $0xed] sm:$0xff]
      %v3069 = vld [vmem:[#allocation2 + $0xf5] sm:$0xff]
      %v3070 = vld [vmem:[#allocation2 + $0xfd] sm:$0xff]
      %v3071 = vld [vmem:[#allocation2 + $0x105] sm:$0xff]
      %v3072 = vld [vmem:[#allocation2 + $0x10d] sm:$0xff]
      %v3073 = vld [vmem:[#allocation2 + $0x115] sm:$0xff]
      %v3074 = vld [vmem:[#allocation2 + $0x11d] sm:$0xff]
      %v3075 = vld [vmem:[#allocation2 + $0x125] sm:$0xff]
      %v3076 = vld [vmem:[#allocation2 + $0x12d] sm:$0xff]
      %v3077 = vld [vmem:[#allocation2 + $0x135] sm:$0xff]
      %v3078 = vld [vmem:[#allocation2 + $0x13d] sm:$0xff]
      %v3079 = vpack.c.bf16 %v3044, %v3043
      %v3080 = vpack.c.bf16 %v3046, %v3045
      %v3081 = vpack.c.bf16 %v3048, %v3047
      %v3082 = vpack.c.bf16 %v3050, %v3049
      %v3083 = vpack.c.bf16 %v3052, %v3051
      %v3084 = vpack.c.bf16 %v3054, %v3053
      %v3085 = vpack.c.bf16 %v3056, %v3055
      %v3086 = vpack.c.bf16 %v3058, %v3057
      %v3087 = vpack.c.bf16 %v3060, %v3059
      %v3088 = vpack.c.bf16 %v3062, %v3061
      %v3089 = vpack.c.bf16 %v3064, %v3063
      %v3090 = vpack.c.bf16 %v3066, %v3065
      %v3091 = vpack.c.bf16 %v3068, %v3067
      %v3092 = vpack.c.bf16 %v3070, %v3069
      %v3093 = vpack.c.bf16 %v3072, %v3071
      %v3094 = vpack.c.bf16 %v3074, %v3073
      %v3095 = vpack.c.bf16 %v3076, %v3075
      %v3096 = vpack.c.bf16 %v3078, %v3077
      %s3097 = scalar_lea.vmem %s1, 14
      %v3098 = vld [vmem:[%s3097] sm:$0x3]
      %v3100 = vsel %vm172, %v3079, 0
      %v3103 = vsel %vm172, %v3080, 0
      %v3106 = vsel %vm172, %v3081, 0
      %v3109 = vsel %vm172, %v3082, 0
      %v3112 = vsel %vm172, %v3083, 0
      %v3115 = vsel %vm172, %v3084, 0
      %v3118 = vsel %vm172, %v3085, 0
      %v3121 = vsel %vm172, %v3086, 0
      %v3124 = vsel %vm172, %v3087, 0
      %v3127 = vsel %vm172, %v3088, 0
      %v3130 = vsel %vm172, %v3089, 0
      %v3133 = vsel %vm172, %v3090, 0
      %v3136 = vsel %vm172, %v3091, 0
      %v3139 = vsel %vm172, %v3092, 0
      %v3142 = vsel %vm172, %v3093, 0
      %v3145 = vsel %vm172, %v3094, 0
      %v3148 = vsel %vm172, %v3095, 0
      %v3151 = vsel %vm172, %v3096, 0
      %v3154 = vsel %vm437, %v3098, 0
      %3156 = vmatprep.subr.bf16.mxu0 0
      %3157 = vmatpush1.bf16.msra.mxu0 %v3154
      %3158 = vmatprep.subr.bf16.mxu0 0
      %3159 = vmatpush1.bf16.msra.mxu0 0
      %3160 = vmatprep.subr.bf16.mxu0 0
      %3161 = vmatpush1.bf16.msra.mxu0 0
      %3162 = vmatprep.subr.bf16.mxu0 0
      %3163 = vmatpush1.bf16.msra.mxu0 0
      %3164 = vmatprep.subr.bf16.mxu0 0
      %3165 = vmatpush1.bf16.msra.mxu0 0
      %3166 = vmatprep.subr.bf16.mxu0 0
      %3167 = vmatpush1.bf16.msra.mxu0 0
      %3168 = vmatprep.subr.bf16.mxu0 0
      %3169 = vmatpush1.bf16.msra.mxu0 0
      %3170 = vmatprep.subr.bf16.mxu0 0
      %3171 = vmatpush1.bf16.msra.mxu0 0
      %3172 = vmatprep.subr.bf16.mxu0 0
      %3173 = vmatpush1.bf16.msra.mxu0 0
      %3174 = vmatprep.subr.bf16.mxu0 0
      %3175 = vmatpush1.bf16.msra.mxu0 0
      %3176 = vmatprep.subr.bf16.mxu0 0
      %3177 = vmatpush1.bf16.msra.mxu0 0
      %3178 = vmatprep.subr.bf16.mxu0 0
      %3179 = vmatpush1.bf16.msra.mxu0 0
      %3180 = vmatprep.subr.bf16.mxu0 0
      %3181 = vmatpush1.bf16.msra.mxu0 0
      %3182 = vmatprep.subr.bf16.mxu0 0
      %3183 = vmatpush1.bf16.msra.mxu0 0
      %3184 = vmatprep.subr.bf16.mxu0 0
      %3185 = vmatpush1.bf16.msra.mxu0 0
      %3186 = vmatprep.subr.bf16.mxu0 0
      %3187 = vmatpush1.bf16.msra.mxu0 0
      %3188 = vmatprep.mubr.bf16.mxu0 0
      %3189 = vmatmul.mubr.bf16.gmra.mrb[0].mxu0 %v3100
      %v3190 = vpop.f32.mrb[0].mxu0
      %v3191 = vadd.f32 0.0, %v3190
      %v3192 = vpop.f32.mrb[0].mxu0
      %v3193 = vpop.f32.mrb[0].mxu0
      %v3194 = vadd.f32 0.0, %v3193
      %v3195 = vpop.f32.mrb[0].mxu0
      %3196 = vmatprep.mubr.bf16.mxu0 0
      %3197 = vmatmul.mubr.bf16.gmra.mrb[0].mxu0 %v3103
      %v3198 = vpop.f32.mrb[0].mxu0
      %v3199 = vadd.f32 0.0, %v3198
      %v3200 = vpop.f32.mrb[0].mxu0
      %v3201 = vpop.f32.mrb[0].mxu0
      %v3202 = vadd.f32 0.0, %v3201
      %v3203 = vpop.f32.mrb[0].mxu0
      %3204 = vmatprep.mubr.bf16.mxu0 0
      %3205 = vmatmul.mubr.bf16.gmra.mrb[0].mxu0 %v3106
      %v3206 = vpop.f32.mrb[0].mxu0
      %v3207 = vadd.f32 0.0, %v3206
      %v3208 = vpop.f32.mrb[0].mxu0
      %v3209 = vpop.f32.mrb[0].mxu0
      %v3210 = vadd.f32 0.0, %v3209
      %v3211 = vpop.f32.mrb[0].mxu0
      %3212 = vmatprep.mubr.bf16.mxu0 0
      %3213 = vmatmul.mubr.bf16.gmra.mrb[0].mxu0 %v3109
      %v3214 = vpop.f32.mrb[0].mxu0
      %v3215 = vadd.f32 0.0, %v3214
      %v3216 = vpop.f32.mrb[0].mxu0
      %v3217 = vpop.f32.mrb[0].mxu0
      %v3218 = vadd.f32 0.0, %v3217
      %v3219 = vpop.f32.mrb[0].mxu0
      %3220 = vmatprep.mubr.bf16.mxu0 0
      %3221 = vmatmul.mubr.bf16.gmra.mrb[0].mxu0 %v3112
      %v3222 = vpop.f32.mrb[0].mxu0
      %v3223 = vadd.f32 0.0, %v3222
      %v3224 = vpop.f32.mrb[0].mxu0
      %v3225 = vpop.f32.mrb[0].mxu0
      %v3226 = vadd.f32 0.0, %v3225
      %v3227 = vpop.f32.mrb[0].mxu0
      %3228 = vmatprep.mubr.bf16.mxu0 0
      %3229 = vmatmul.mubr.bf16.gmra.mrb[0].mxu0 %v3115
      %v3230 = vpop.f32.mrb[0].mxu0
      %v3231 = vadd.f32 0.0, %v3230
      %v3232 = vpop.f32.mrb[0].mxu0
      %v3233 = vpop.f32.mrb[0].mxu0
      %v3234 = vadd.f32 0.0, %v3233
      %v3235 = vpop.f32.mrb[0].mxu0
      %3236 = vmatprep.mubr.bf16.mxu0 0
      %3237 = vmatmul.mubr.bf16.gmra.mrb[0].mxu0 %v3118
      %v3238 = vpop.f32.mrb[0].mxu0
      %v3239 = vadd.f32 0.0, %v3238
      %v3240 = vpop.f32.mrb[0].mxu0
      %v3241 = vpop.f32.mrb[0].mxu0
      %v3242 = vadd.f32 0.0, %v3241
      %v3243 = vpop.f32.mrb[0].mxu0
      %3244 = vmatprep.mubr.bf16.mxu0 0
      %3245 = vmatmul.mubr.bf16.gmra.mrb[0].mxu0 %v3121
      %v3246 = vpop.f32.mrb[0].mxu0
      %v3247 = vadd.f32 0.0, %v3246
      %v3248 = vpop.f32.mrb[0].mxu0
      %v3249 = vpop.f32.mrb[0].mxu0
      %v3250 = vadd.f32 0.0, %v3249
      %v3251 = vpop.f32.mrb[0].mxu0
      %3252 = vmatprep.mubr.bf16.mxu0 0
      %3253 = vmatmul.mubr.bf16.gmra.mrb[0].mxu0 %v3124
      %v3254 = vpop.f32.mrb[0].mxu0
      %v3255 = vadd.f32 0.0, %v3254
      %v3256 = vpop.f32.mrb[0].mxu0
      %v3257 = vpop.f32.mrb[0].mxu0
      %v3258 = vadd.f32 0.0, %v3257
      %v3259 = vpop.f32.mrb[0].mxu0
      %3260 = vmatprep.mubr.bf16.mxu0 0
      %3261 = vmatmul.mubr.bf16.gmra.mrb[0].mxu0 %v3127
      %v3262 = vpop.f32.mrb[0].mxu0
      %v3263 = vadd.f32 0.0, %v3262
      %v3264 = vpop.f32.mrb[0].mxu0
      %v3265 = vpop.f32.mrb[0].mxu0
      %v3266 = vadd.f32 0.0, %v3265
      %v3267 = vpop.f32.mrb[0].mxu0
      %3268 = vmatprep.mubr.bf16.mxu0 0
      %3269 = vmatmul.mubr.bf16.gmra.mrb[0].mxu0 %v3130
      %v3270 = vpop.f32.mrb[0].mxu0
      %v3271 = vadd.f32 0.0, %v3270
      %v3272 = vpop.f32.mrb[0].mxu0
      %v3273 = vpop.f32.mrb[0].mxu0
      %v3274 = vadd.f32 0.0, %v3273
      %v3275 = vpop.f32.mrb[0].mxu0
      %3276 = vmatprep.mubr.bf16.mxu0 0
      %3277 = vmatmul.mubr.bf16.gmra.mrb[0].mxu0 %v3133
      %v3278 = vpop.f32.mrb[0].mxu0
      %v3279 = vadd.f32 0.0, %v3278
      %v3280 = vpop.f32.mrb[0].mxu0
      %v3281 = vpop.f32.mrb[0].mxu0
      %v3282 = vadd.f32 0.0, %v3281
      %v3283 = vpop.f32.mrb[0].mxu0
      %3284 = vmatprep.mubr.bf16.mxu0 0
      %3285 = vmatmul.mubr.bf16.gmra.mrb[0].mxu0 %v3136
      %v3286 = vpop.f32.mrb[0].mxu0
      %v3287 = vadd.f32 0.0, %v3286
      %v3288 = vpop.f32.mrb[0].mxu0
      %v3289 = vpop.f32.mrb[0].mxu0
      %v3290 = vadd.f32 0.0, %v3289
      %v3291 = vpop.f32.mrb[0].mxu0
      %3292 = vmatprep.mubr.bf16.mxu0 0
      %3293 = vmatmul.mubr.bf16.gmra.mrb[0].mxu0 %v3139
      %v3294 = vpop.f32.mrb[0].mxu0
      %v3295 = vadd.f32 0.0, %v3294
      %v3296 = vpop.f32.mrb[0].mxu0
      %v3297 = vpop.f32.mrb[0].mxu0
      %v3298 = vadd.f32 0.0, %v3297
      %v3299 = vpop.f32.mrb[0].mxu0
      %3300 = vmatprep.mubr.bf16.mxu0 0
      %3301 = vmatmul.mubr.bf16.gmra.mrb[0].mxu0 %v3142
      %v3302 = vpop.f32.mrb[0].mxu0
      %v3303 = vadd.f32 0.0, %v3302
      %v3304 = vpop.f32.mrb[0].mxu0
      %v3305 = vpop.f32.mrb[0].mxu0
      %v3306 = vadd.f32 0.0, %v3305
      %v3307 = vpop.f32.mrb[0].mxu0
      %3308 = vmatprep.mubr.bf16.mxu0 0
      %3309 = vmatmul.mubr.bf16.gmra.mrb[0].mxu0 %v3145
      %v3310 = vpop.f32.mrb[0].mxu0
      %v3311 = vadd.f32 0.0, %v3310
      %v3312 = vpop.f32.mrb[0].mxu0
      %v3313 = vpop.f32.mrb[0].mxu0
      %v3314 = vadd.f32 0.0, %v3313
      %v3315 = vpop.f32.mrb[0].mxu0
      %3316 = vmatprep.mubr.bf16.mxu0 0
      %3317 = vmatmul.mubr.bf16.gmra.mrb[0].mxu0 %v3148
      %v3318 = vpop.f32.mrb[0].mxu0
      %v3319 = vadd.f32 0.0, %v3318
      %v3320 = vpop.f32.mrb[0].mxu0
      %v3321 = vpop.f32.mrb[0].mxu0
      %v3322 = vadd.f32 0.0, %v3321
      %v3323 = vpop.f32.mrb[0].mxu0
      %3324 = vmatprep.mubr.bf16.mxu0 0
      %3325 = vmatmul.mubr.bf16.gmra.mrb[0].mxu0 %v3151
      %v3326 = vpop.f32.mrb[0].mxu0
      %v3327 = vadd.f32 0.0, %v3326
      %v3328 = vpop.f32.mrb[0].mxu0
      %v3329 = vpop.f32.mrb[0].mxu0
      %v3330 = vadd.f32 0.0, %v3329
      %v3331 = vpop.f32.mrb[0].mxu0
      %3332 = vdwg.mxu0
      %v3333 = vld [vmem:[#allocation3] sm:$0xff]
      %v3334 = vld [vmem:[#allocation3 + $0x8] sm:$0xff]
      %v3335 = vld [vmem:[#allocation3 + $0x10] sm:$0xff]
      %v3336 = vld [vmem:[#allocation3 + $0x18] sm:$0xff]
      %v3337 = vld [vmem:[#allocation3 + $0x20] sm:$0xff]
      %v3338 = vld [vmem:[#allocation3 + $0x28] sm:$0xff]
      %v3339 = vld [vmem:[#allocation3 + $0x30] sm:$0xff]
      %v3340 = vld [vmem:[#allocation3 + $0x38] sm:$0xff]
      %v3341 = vld [vmem:[#allocation3 + $0x40] sm:$0xff]
      %v3342 = vld [vmem:[#allocation3 + $0x48] sm:$0xff]
      %v3343 = vld [vmem:[#allocation3 + $0x50] sm:$0xff]
      %v3344 = vld [vmem:[#allocation3 + $0x58] sm:$0xff]
      %v3345 = vld [vmem:[#allocation3 + $0x60] sm:$0xff]
      %v3346 = vld [vmem:[#allocation3 + $0x68] sm:$0xff]
      %v3347 = vld [vmem:[#allocation3 + $0x70] sm:$0xff]
      %v3348 = vld [vmem:[#allocation3 + $0x78] sm:$0xff]
      %v3349 = vld [vmem:[#allocation3 + $0x80] sm:$0xff]
      %v3350 = vld [vmem:[#allocation3 + $0x88] sm:$0xff]
      %v3351 = vld [vmem:[#allocation3 + $0x90] sm:$0xff]
      %v3352 = vld [vmem:[#allocation3 + $0x98] sm:$0xff]
      %v3353 = vld [vmem:[#allocation3 + $0xa0] sm:$0xff]
      %v3354 = vld [vmem:[#allocation3 + $0xa8] sm:$0xff]
      %v3355 = vld [vmem:[#allocation3 + $0xb0] sm:$0xff]
      %v3356 = vld [vmem:[#allocation3 + $0xb8] sm:$0xff]
      %v3357 = vld [vmem:[#allocation3 + $0xc0] sm:$0xff]
      %v3358 = vld [vmem:[#allocation3 + $0xc8] sm:$0xff]
      %v3359 = vld [vmem:[#allocation3 + $0xd0] sm:$0xff]
      %v3360 = vld [vmem:[#allocation3 + $0xd8] sm:$0xff]
      %v3361 = vld [vmem:[#allocation3 + $0xe0] sm:$0xff]
      %v3362 = vld [vmem:[#allocation3 + $0xe8] sm:$0xff]
      %v3363 = vld [vmem:[#allocation3 + $0xf0] sm:$0xff]
      %v3364 = vld [vmem:[#allocation3 + $0xf8] sm:$0xff]
      %v3365 = vld [vmem:[#allocation3 + $0x100] sm:$0xff]
      %v3366 = vld [vmem:[#allocation3 + $0x108] sm:$0xff]
      %v3367 = vld [vmem:[#allocation3 + $0x110] sm:$0xff]
      %v3368 = vld [vmem:[#allocation3 + $0x118] sm:$0xff]
      %v3369 = vadd.f32 %v3333, %v3191
      %v3370 = vadd.f32 %v3334, %v3194
      %v3371 = vadd.f32 %v3335, %v3199
      %v3372 = vadd.f32 %v3336, %v3202
      %v3373 = vadd.f32 %v3337, %v3207
      %v3374 = vadd.f32 %v3338, %v3210
      %v3375 = vadd.f32 %v3339, %v3215
      %v3376 = vadd.f32 %v3340, %v3218
      %v3377 = vadd.f32 %v3341, %v3223
      %v3378 = vadd.f32 %v3342, %v3226
      %v3379 = vadd.f32 %v3343, %v3231
      %v3380 = vadd.f32 %v3344, %v3234
      %v3381 = vadd.f32 %v3345, %v3239
      %v3382 = vadd.f32 %v3346, %v3242
      %v3383 = vadd.f32 %v3347, %v3247
      %v3384 = vadd.f32 %v3348, %v3250
      %v3385 = vadd.f32 %v3349, %v3255
      %v3386 = vadd.f32 %v3350, %v3258
      %v3387 = vadd.f32 %v3351, %v3263
      %v3388 = vadd.f32 %v3352, %v3266
      %v3389 = vadd.f32 %v3353, %v3271
      %v3390 = vadd.f32 %v3354, %v3274
      %v3391 = vadd.f32 %v3355, %v3279
      %v3392 = vadd.f32 %v3356, %v3282
      %v3393 = vadd.f32 %v3357, %v3287
      %v3394 = vadd.f32 %v3358, %v3290
      %v3395 = vadd.f32 %v3359, %v3295
      %v3396 = vadd.f32 %v3360, %v3298
      %v3397 = vadd.f32 %v3361, %v3303
      %v3398 = vadd.f32 %v3362, %v3306
      %v3399 = vadd.f32 %v3363, %v3311
      %v3400 = vadd.f32 %v3364, %v3314
      %v3401 = vadd.f32 %v3365, %v3319
      %v3402 = vadd.f32 %v3366, %v3322
      %v3403 = vadd.f32 %v3367, %v3327
      %v3404 = vadd.f32 %v3368, %v3330
      %3405 = vst.msk [vmem:[#allocation3] sm:$0xff] %vm618, %v3369
      %3406 = vst.msk [vmem:[#allocation3 + $0x8] sm:$0xff] %vm618, %v3370
      %3407 = vst.msk [vmem:[#allocation3 + $0x10] sm:$0xff] %vm618, %v3371
      %3408 = vst.msk [vmem:[#allocation3 + $0x18] sm:$0xff] %vm618, %v3372
      %3409 = vst.msk [vmem:[#allocation3 + $0x20] sm:$0xff] %vm618, %v3373
      %3410 = vst.msk [vmem:[#allocation3 + $0x28] sm:$0xff] %vm618, %v3374
      %3411 = vst.msk [vmem:[#allocation3 + $0x30] sm:$0xff] %vm618, %v3375
      %3412 = vst.msk [vmem:[#allocation3 + $0x38] sm:$0xff] %vm618, %v3376
      %3413 = vst.msk [vmem:[#allocation3 + $0x40] sm:$0xff] %vm618, %v3377
      %3414 = vst.msk [vmem:[#allocation3 + $0x48] sm:$0xff] %vm618, %v3378
      %3415 = vst.msk [vmem:[#allocation3 + $0x50] sm:$0xff] %vm618, %v3379
      %3416 = vst.msk [vmem:[#allocation3 + $0x58] sm:$0xff] %vm618, %v3380
      %3417 = vst.msk [vmem:[#allocation3 + $0x60] sm:$0xff] %vm618, %v3381
      %3418 = vst.msk [vmem:[#allocation3 + $0x68] sm:$0xff] %vm618, %v3382
      %3419 = vst.msk [vmem:[#allocation3 + $0x70] sm:$0xff] %vm618, %v3383
      %3420 = vst.msk [vmem:[#allocation3 + $0x78] sm:$0xff] %vm618, %v3384
      %3421 = vst.msk [vmem:[#allocation3 + $0x80] sm:$0xff] %vm618, %v3385
      %3422 = vst.msk [vmem:[#allocation3 + $0x88] sm:$0xff] %vm618, %v3386
      %3423 = vst.msk [vmem:[#allocation3 + $0x90] sm:$0xff] %vm618, %v3387
      %3424 = vst.msk [vmem:[#allocation3 + $0x98] sm:$0xff] %vm618, %v3388
      %3425 = vst.msk [vmem:[#allocation3 + $0xa0] sm:$0xff] %vm618, %v3389
      %3426 = vst.msk [vmem:[#allocation3 + $0xa8] sm:$0xff] %vm618, %v3390
      %3427 = vst.msk [vmem:[#allocation3 + $0xb0] sm:$0xff] %vm618, %v3391
      %3428 = vst.msk [vmem:[#allocation3 + $0xb8] sm:$0xff] %vm618, %v3392
      %3429 = vst.msk [vmem:[#allocation3 + $0xc0] sm:$0xff] %vm618, %v3393
      %3430 = vst.msk [vmem:[#allocation3 + $0xc8] sm:$0xff] %vm618, %v3394
      %3431 = vst.msk [vmem:[#allocation3 + $0xd0] sm:$0xff] %vm618, %v3395
      %3432 = vst.msk [vmem:[#allocation3 + $0xd8] sm:$0xff] %vm618, %v3396
      %3433 = vst.msk [vmem:[#allocation3 + $0xe0] sm:$0xff] %vm618, %v3397
      %3434 = vst.msk [vmem:[#allocation3 + $0xe8] sm:$0xff] %vm618, %v3398
      %3435 = vst.msk [vmem:[#allocation3 + $0xf0] sm:$0xff] %vm618, %v3399
      %3436 = vst.msk [vmem:[#allocation3 + $0xf8] sm:$0xff] %vm618, %v3400
      %3437 = vst.msk [vmem:[#allocation3 + $0x100] sm:$0xff] %vm618, %v3401
      %3438 = vst.msk [vmem:[#allocation3 + $0x108] sm:$0xff] %vm618, %v3402
      %3439 = vst.msk [vmem:[#allocation3 + $0x110] sm:$0xff] %vm618, %v3403
      %3440 = vst.msk [vmem:[#allocation3 + $0x118] sm:$0xff] %vm618, %v3404
      %v3441 = vld [vmem:[#allocation2 + $0x26] sm:$0xff]
      %v3442 = vld [vmem:[#allocation2 + $0x2e] sm:$0xff]
      %v3443 = vld [vmem:[#allocation2 + $0x36] sm:$0xff]
      %v3444 = vld [vmem:[#allocation2 + $0x3e] sm:$0xff]
      %v3445 = vld [vmem:[#allocation2 + $0x46] sm:$0xff]
      %v3446 = vld [vmem:[#allocation2 + $0x4e] sm:$0xff]
      %v3447 = vld [vmem:[#allocation2 + $0x56] sm:$0xff]
      %v3448 = vld [vmem:[#allocation2 + $0x5e] sm:$0xff]
      %v3449 = vld [vmem:[#allocation2 + $0x66] sm:$0xff]
      %v3450 = vld [vmem:[#allocation2 + $0x6e] sm:$0xff]
      %v3451 = vld [vmem:[#allocation2 + $0x76] sm:$0xff]
      %v3452 = vld [vmem:[#allocation2 + $0x7e] sm:$0xff]
      %v3453 = vld [vmem:[#allocation2 + $0x86] sm:$0xff]
      %v3454 = vld [vmem:[#allocation2 + $0x8e] sm:$0xff]
      %v3455 = vld [vmem:[#allocation2 + $0x96] sm:$0xff]
      %v3456 = vld [vmem:[#allocation2 + $0x9e] sm:$0xff]
      %v3457 = vld [vmem:[#allocation2 + $0xa6] sm:$0xff]
      %v3458 = vld [vmem:[#allocation2 + $0xae] sm:$0xff]
      %v3459 = vld [vmem:[#allocation2 + $0xb6] sm:$0xff]
      %v3460 = vld [vmem:[#allocation2 + $0xbe] sm:$0xff]
      %v3461 = vld [vmem:[#allocation2 + $0xc6] sm:$0xff]
      %v3462 = vld [vmem:[#allocation2 + $0xce] sm:$0xff]
      %v3463 = vld [vmem:[#allocation2 + $0xd6] sm:$0xff]
      %v3464 = vld [vmem:[#allocation2 + $0xde] sm:$0xff]
      %v3465 = vld [vmem:[#allocation2 + $0xe6] sm:$0xff]
      %v3466 = vld [vmem:[#allocation2 + $0xee] sm:$0xff]
      %v3467 = vld [vmem:[#allocation2 + $0xf6] sm:$0xff]
      %v3468 = vld [vmem:[#allocation2 + $0xfe] sm:$0xff]
      %v3469 = vld [vmem:[#allocation2 + $0x106] sm:$0xff]
      %v3470 = vld [vmem:[#allocation2 + $0x10e] sm:$0xff]
      %v3471 = vld [vmem:[#allocation2 + $0x116] sm:$0xff]
      %v3472 = vld [vmem:[#allocation2 + $0x11e] sm:$0xff]
      %v3473 = vld [vmem:[#allocation2 + $0x126] sm:$0xff]
      %v3474 = vld [vmem:[#allocation2 + $0x12e] sm:$0xff]
      %v3475 = vld [vmem:[#allocation2 + $0x136] sm:$0xff]
      %v3476 = vld [vmem:[#allocation2 + $0x13e] sm:$0xff]
      %v3477 = vpack.c.bf16 %v3442, %v3441
      %v3478 = vpack.c.bf16 %v3444, %v3443
      %v3479 = vpack.c.bf16 %v3446, %v3445
      %v3480 = vpack.c.bf16 %v3448, %v3447
      %v3481 = vpack.c.bf16 %v3450, %v3449
      %v3482 = vpack.c.bf16 %v3452, %v3451
      %v3483 = vpack.c.bf16 %v3454, %v3453
      %v3484 = vpack.c.bf16 %v3456, %v3455
      %v3485 = vpack.c.bf16 %v3458, %v3457
      %v3486 = vpack.c.bf16 %v3460, %v3459
      %v3487 = vpack.c.bf16 %v3462, %v3461
      %v3488 = vpack.c.bf16 %v3464, %v3463
      %v3489 = vpack.c.bf16 %v3466, %v3465
      %v3490 = vpack.c.bf16 %v3468, %v3467
      %v3491 = vpack.c.bf16 %v3470, %v3469
      %v3492 = vpack.c.bf16 %v3472, %v3471
      %v3493 = vpack.c.bf16 %v3474, %v3473
      %v3494 = vpack.c.bf16 %v3476, %v3475
      %s3495 = scalar_lea.vmem %s1, 16
      %v3496 = vld [vmem:[%s3495] sm:$0x3]
      %v3498 = vsel %vm172, %v3477, 0
      %v3501 = vsel %vm172, %v3478, 0
      %v3504 = vsel %vm172, %v3479, 0
      %v3507 = vsel %vm172, %v3480, 0
      %v3510 = vsel %vm172, %v3481, 0
      %v3513 = vsel %vm172, %v3482, 0
      %v3516 = vsel %vm172, %v3483, 0
      %v3519 = vsel %vm172, %v3484, 0
      %v3522 = vsel %vm172, %v3485, 0
      %v3525 = vsel %vm172, %v3486, 0
      %v3528 = vsel %vm172, %v3487, 0
      %v3531 = vsel %vm172, %v3488, 0
      %v3534 = vsel %vm172, %v3489, 0
      %v3537 = vsel %vm172, %v3490, 0
      %v3540 = vsel %vm172, %v3491, 0
      %v3543 = vsel %vm172, %v3492, 0
      %v3546 = vsel %vm172, %v3493, 0
      %v3549 = vsel %vm172, %v3494, 0
      %v3552 = vsel %vm437, %v3496, 0
      %3554 = vmatprep.subr.bf16.mxu0 0
      %3555 = vmatpush1.bf16.msra.mxu0 %v3552
      %3556 = vmatprep.subr.bf16.mxu0 0
      %3557 = vmatpush1.bf16.msra.mxu0 0
      %3558 = vmatprep.subr.bf16.mxu0 0
      %3559 = vmatpush1.bf16.msra.mxu0 0
      %3560 = vmatprep.subr.bf16.mxu0 0
      %3561 = vmatpush1.bf16.msra.mxu0 0
      %3562 = vmatprep.subr.bf16.mxu0 0
      %3563 = vmatpush1.bf16.msra.mxu0 0
      %3564 = vmatprep.subr.bf16.mxu0 0
      %3565 = vmatpush1.bf16.msra.mxu0 0
      %3566 = vmatprep.subr.bf16.mxu0 0
      %3567 = vmatpush1.bf16.msra.mxu0 0
      %3568 = vmatprep.subr.bf16.mxu0 0
      %3569 = vmatpush1.bf16.msra.mxu0 0
      %3570 = vmatprep.subr.bf16.mxu0 0
      %3571 = vmatpush1.bf16.msra.mxu0 0
      %3572 = vmatprep.subr.bf16.mxu0 0
      %3573 = vmatpush1.bf16.msra.mxu0 0
      %3574 = vmatprep.subr.bf16.mxu0 0
      %3575 = vmatpush1.bf16.msra.mxu0 0
      %3576 = vmatprep.subr.bf16.mxu0 0
      %3577 = vmatpush1.bf16.msra.mxu0 0
      %3578 = vmatprep.subr.bf16.mxu0 0
      %3579 = vmatpush1.bf16.msra.mxu0 0
      %3580 = vmatprep.subr.bf16.mxu0 0
      %3581 = vmatpush1.bf16.msra.mxu0 0
      %3582 = vmatprep.subr.bf16.mxu0 0
      %3583 = vmatpush1.bf16.msra.mxu0 0
      %3584 = vmatprep.subr.bf16.mxu0 0
      %3585 = vmatpush1.bf16.msra.mxu0 0
      %3586 = vmatprep.mubr.bf16.mxu0 0
      %3587 = vmatmul.mubr.bf16.gmra.mrb[0].mxu0 %v3498
      %v3588 = vpop.f32.mrb[0].mxu0
      %v3589 = vadd.f32 0.0, %v3588
      %v3590 = vpop.f32.mrb[0].mxu0
      %v3591 = vpop.f32.mrb[0].mxu0
      %v3592 = vadd.f32 0.0, %v3591
      %v3593 = vpop.f32.mrb[0].mxu0
      %3594 = vmatprep.mubr.bf16.mxu0 0
      %3595 = vmatmul.mubr.bf16.gmra.mrb[0].mxu0 %v3501
      %v3596 = vpop.f32.mrb[0].mxu0
      %v3597 = vadd.f32 0.0, %v3596
      %v3598 = vpop.f32.mrb[0].mxu0
      %v3599 = vpop.f32.mrb[0].mxu0
      %v3600 = vadd.f32 0.0, %v3599
      %v3601 = vpop.f32.mrb[0].mxu0
      %3602 = vmatprep.mubr.bf16.mxu0 0
      %3603 = vmatmul.mubr.bf16.gmra.mrb[0].mxu0 %v3504
      %v3604 = vpop.f32.mrb[0].mxu0
      %v3605 = vadd.f32 0.0, %v3604
      %v3606 = vpop.f32.mrb[0].mxu0
      %v3607 = vpop.f32.mrb[0].mxu0
      %v3608 = vadd.f32 0.0, %v3607
      %v3609 = vpop.f32.mrb[0].mxu0
      %3610 = vmatprep.mubr.bf16.mxu0 0
      %3611 = vmatmul.mubr.bf16.gmra.mrb[0].mxu0 %v3507
      %v3612 = vpop.f32.mrb[0].mxu0
      %v3613 = vadd.f32 0.0, %v3612
      %v3614 = vpop.f32.mrb[0].mxu0
      %v3615 = vpop.f32.mrb[0].mxu0
      %v3616 = vadd.f32 0.0, %v3615
      %v3617 = vpop.f32.mrb[0].mxu0
      %3618 = vmatprep.mubr.bf16.mxu0 0
      %3619 = vmatmul.mubr.bf16.gmra.mrb[0].mxu0 %v3510
      %v3620 = vpop.f32.mrb[0].mxu0
      %v3621 = vadd.f32 0.0, %v3620
      %v3622 = vpop.f32.mrb[0].mxu0
      %v3623 = vpop.f32.mrb[0].mxu0
      %v3624 = vadd.f32 0.0, %v3623
      %v3625 = vpop.f32.mrb[0].mxu0
      %3626 = vmatprep.mubr.bf16.mxu0 0
      %3627 = vmatmul.mubr.bf16.gmra.mrb[0].mxu0 %v3513
      %v3628 = vpop.f32.mrb[0].mxu0
      %v3629 = vadd.f32 0.0, %v3628
      %v3630 = vpop.f32.mrb[0].mxu0
      %v3631 = vpop.f32.mrb[0].mxu0
      %v3632 = vadd.f32 0.0, %v3631
      %v3633 = vpop.f32.mrb[0].mxu0
      %3634 = vmatprep.mubr.bf16.mxu0 0
      %3635 = vmatmul.mubr.bf16.gmra.mrb[0].mxu0 %v3516
      %v3636 = vpop.f32.mrb[0].mxu0
      %v3637 = vadd.f32 0.0, %v3636
      %v3638 = vpop.f32.mrb[0].mxu0
      %v3639 = vpop.f32.mrb[0].mxu0
      %v3640 = vadd.f32 0.0, %v3639
      %v3641 = vpop.f32.mrb[0].mxu0
      %3642 = vmatprep.mubr.bf16.mxu0 0
      %3643 = vmatmul.mubr.bf16.gmra.mrb[0].mxu0 %v3519
      %v3644 = vpop.f32.mrb[0].mxu0
      %v3645 = vadd.f32 0.0, %v3644
      %v3646 = vpop.f32.mrb[0].mxu0
      %v3647 = vpop.f32.mrb[0].mxu0
      %v3648 = vadd.f32 0.0, %v3647
      %v3649 = vpop.f32.mrb[0].mxu0
      %3650 = vmatprep.mubr.bf16.mxu0 0
      %3651 = vmatmul.mubr.bf16.gmra.mrb[0].mxu0 %v3522
      %v3652 = vpop.f32.mrb[0].mxu0
      %v3653 = vadd.f32 0.0, %v3652
      %v3654 = vpop.f32.mrb[0].mxu0
      %v3655 = vpop.f32.mrb[0].mxu0
      %v3656 = vadd.f32 0.0, %v3655
      %v3657 = vpop.f32.mrb[0].mxu0
      %3658 = vmatprep.mubr.bf16.mxu0 0
      %3659 = vmatmul.mubr.bf16.gmra.mrb[0].mxu0 %v3525
      %v3660 = vpop.f32.mrb[0].mxu0
      %v3661 = vadd.f32 0.0, %v3660
      %v3662 = vpop.f32.mrb[0].mxu0
      %v3663 = vpop.f32.mrb[0].mxu0
      %v3664 = vadd.f32 0.0, %v3663
      %v3665 = vpop.f32.mrb[0].mxu0
      %3666 = vmatprep.mubr.bf16.mxu0 0
      %3667 = vmatmul.mubr.bf16.gmra.mrb[0].mxu0 %v3528
      %v3668 = vpop.f32.mrb[0].mxu0
      %v3669 = vadd.f32 0.0, %v3668
      %v3670 = vpop.f32.mrb[0].mxu0
      %v3671 = vpop.f32.mrb[0].mxu0
      %v3672 = vadd.f32 0.0, %v3671
      %v3673 = vpop.f32.mrb[0].mxu0
      %3674 = vmatprep.mubr.bf16.mxu0 0
      %3675 = vmatmul.mubr.bf16.gmra.mrb[0].mxu0 %v3531
      %v3676 = vpop.f32.mrb[0].mxu0
      %v3677 = vadd.f32 0.0, %v3676
      %v3678 = vpop.f32.mrb[0].mxu0
      %v3679 = vpop.f32.mrb[0].mxu0
      %v3680 = vadd.f32 0.0, %v3679
      %v3681 = vpop.f32.mrb[0].mxu0
      %3682 = vmatprep.mubr.bf16.mxu0 0
      %3683 = vmatmul.mubr.bf16.gmra.mrb[0].mxu0 %v3534
      %v3684 = vpop.f32.mrb[0].mxu0
      %v3685 = vadd.f32 0.0, %v3684
      %v3686 = vpop.f32.mrb[0].mxu0
      %v3687 = vpop.f32.mrb[0].mxu0
      %v3688 = vadd.f32 0.0, %v3687
      %v3689 = vpop.f32.mrb[0].mxu0
      %3690 = vmatprep.mubr.bf16.mxu0 0
      %3691 = vmatmul.mubr.bf16.gmra.mrb[0].mxu0 %v3537
      %v3692 = vpop.f32.mrb[0].mxu0
      %v3693 = vadd.f32 0.0, %v3692
      %v3694 = vpop.f32.mrb[0].mxu0
      %v3695 = vpop.f32.mrb[0].mxu0
      %v3696 = vadd.f32 0.0, %v3695
      %v3697 = vpop.f32.mrb[0].mxu0
      %3698 = vmatprep.mubr.bf16.mxu0 0
      %3699 = vmatmul.mubr.bf16.gmra.mrb[0].mxu0 %v3540
      %v3700 = vpop.f32.mrb[0].mxu0
      %v3701 = vadd.f32 0.0, %v3700
      %v3702 = vpop.f32.mrb[0].mxu0
      %v3703 = vpop.f32.mrb[0].mxu0
      %v3704 = vadd.f32 0.0, %v3703
      %v3705 = vpop.f32.mrb[0].mxu0
      %3706 = vmatprep.mubr.bf16.mxu0 0
      %3707 = vmatmul.mubr.bf16.gmra.mrb[0].mxu0 %v3543
      %v3708 = vpop.f32.mrb[0].mxu0
      %v3709 = vadd.f32 0.0, %v3708
      %v3710 = vpop.f32.mrb[0].mxu0
      %v3711 = vpop.f32.mrb[0].mxu0
      %v3712 = vadd.f32 0.0, %v3711
      %v3713 = vpop.f32.mrb[0].mxu0
      %3714 = vmatprep.mubr.bf16.mxu0 0
      %3715 = vmatmul.mubr.bf16.gmra.mrb[0].mxu0 %v3546
      %v3716 = vpop.f32.mrb[0].mxu0
      %v3717 = vadd.f32 0.0, %v3716
      %v3718 = vpop.f32.mrb[0].mxu0
      %v3719 = vpop.f32.mrb[0].mxu0
      %v3720 = vadd.f32 0.0, %v3719
      %v3721 = vpop.f32.mrb[0].mxu0
      %3722 = vmatprep.mubr.bf16.mxu0 0
      %3723 = vmatmul.mubr.bf16.gmra.mrb[0].mxu0 %v3549
      %v3724 = vpop.f32.mrb[0].mxu0
      %v3725 = vadd.f32 0.0, %v3724
      %v3726 = vpop.f32.mrb[0].mxu0
      %v3727 = vpop.f32.mrb[0].mxu0
      %v3728 = vadd.f32 0.0, %v3727
      %v3729 = vpop.f32.mrb[0].mxu0
      %3730 = vdwg.mxu0
      %v3731 = vld [vmem:[#allocation3] sm:$0xff]
      %v3732 = vld [vmem:[#allocation3 + $0x8] sm:$0xff]
      %v3733 = vld [vmem:[#allocation3 + $0x10] sm:$0xff]
      %v3734 = vld [vmem:[#allocation3 + $0x18] sm:$0xff]
      %v3735 = vld [vmem:[#allocation3 + $0x20] sm:$0xff]
      %v3736 = vld [vmem:[#allocation3 + $0x28] sm:$0xff]
      %v3737 = vld [vmem:[#allocation3 + $0x30] sm:$0xff]
      %v3738 = vld [vmem:[#allocation3 + $0x38] sm:$0xff]
      %v3739 = vld [vmem:[#allocation3 + $0x40] sm:$0xff]
      %v3740 = vld [vmem:[#allocation3 + $0x48] sm:$0xff]
      %v3741 = vld [vmem:[#allocation3 + $0x50] sm:$0xff]
      %v3742 = vld [vmem:[#allocation3 + $0x58] sm:$0xff]
      %v3743 = vld [vmem:[#allocation3 + $0x60] sm:$0xff]
      %v3744 = vld [vmem:[#allocation3 + $0x68] sm:$0xff]
      %v3745 = vld [vmem:[#allocation3 + $0x70] sm:$0xff]
      %v3746 = vld [vmem:[#allocation3 + $0x78] sm:$0xff]
      %v3747 = vld [vmem:[#allocation3 + $0x80] sm:$0xff]
      %v3748 = vld [vmem:[#allocation3 + $0x88] sm:$0xff]
      %v3749 = vld [vmem:[#allocation3 + $0x90] sm:$0xff]
      %v3750 = vld [vmem:[#allocation3 + $0x98] sm:$0xff]
      %v3751 = vld [vmem:[#allocation3 + $0xa0] sm:$0xff]
      %v3752 = vld [vmem:[#allocation3 + $0xa8] sm:$0xff]
      %v3753 = vld [vmem:[#allocation3 + $0xb0] sm:$0xff]
      %v3754 = vld [vmem:[#allocation3 + $0xb8] sm:$0xff]
      %v3755 = vld [vmem:[#allocation3 + $0xc0] sm:$0xff]
      %v3756 = vld [vmem:[#allocation3 + $0xc8] sm:$0xff]
      %v3757 = vld [vmem:[#allocation3 + $0xd0] sm:$0xff]
      %v3758 = vld [vmem:[#allocation3 + $0xd8] sm:$0xff]
      %v3759 = vld [vmem:[#allocation3 + $0xe0] sm:$0xff]
      %v3760 = vld [vmem:[#allocation3 + $0xe8] sm:$0xff]
      %v3761 = vld [vmem:[#allocation3 + $0xf0] sm:$0xff]
      %v3762 = vld [vmem:[#allocation3 + $0xf8] sm:$0xff]
      %v3763 = vld [vmem:[#allocation3 + $0x100] sm:$0xff]
      %v3764 = vld [vmem:[#allocation3 + $0x108] sm:$0xff]
      %v3765 = vld [vmem:[#allocation3 + $0x110] sm:$0xff]
      %v3766 = vld [vmem:[#allocation3 + $0x118] sm:$0xff]
      %v3767 = vadd.f32 %v3731, %v3589
      %v3768 = vadd.f32 %v3732, %v3592
      %v3769 = vadd.f32 %v3733, %v3597
      %v3770 = vadd.f32 %v3734, %v3600
      %v3771 = vadd.f32 %v3735, %v3605
      %v3772 = vadd.f32 %v3736, %v3608
      %v3773 = vadd.f32 %v3737, %v3613
      %v3774 = vadd.f32 %v3738, %v3616
      %v3775 = vadd.f32 %v3739, %v3621
      %v3776 = vadd.f32 %v3740, %v3624
      %v3777 = vadd.f32 %v3741, %v3629
      %v3778 = vadd.f32 %v3742, %v3632
      %v3779 = vadd.f32 %v3743, %v3637
      %v3780 = vadd.f32 %v3744, %v3640
      %v3781 = vadd.f32 %v3745, %v3645
      %v3782 = vadd.f32 %v3746, %v3648
      %v3783 = vadd.f32 %v3747, %v3653
      %v3784 = vadd.f32 %v3748, %v3656
      %v3785 = vadd.f32 %v3749, %v3661
      %v3786 = vadd.f32 %v3750, %v3664
      %v3787 = vadd.f32 %v3751, %v3669
      %v3788 = vadd.f32 %v3752, %v3672
      %v3789 = vadd.f32 %v3753, %v3677
      %v3790 = vadd.f32 %v3754, %v3680
      %v3791 = vadd.f32 %v3755, %v3685
      %v3792 = vadd.f32 %v3756, %v3688
      %v3793 = vadd.f32 %v3757, %v3693
      %v3794 = vadd.f32 %v3758, %v3696
      %v3795 = vadd.f32 %v3759, %v3701
      %v3796 = vadd.f32 %v3760, %v3704
      %v3797 = vadd.f32 %v3761, %v3709
      %v3798 = vadd.f32 %v3762, %v3712
      %v3799 = vadd.f32 %v3763, %v3717
      %v3800 = vadd.f32 %v3764, %v3720
      %v3801 = vadd.f32 %v3765, %v3725
      %v3802 = vadd.f32 %v3766, %v3728
      %3803 = vst.msk [vmem:[#allocation3] sm:$0xff] %vm618, %v3767
      %3804 = vst.msk [vmem:[#allocation3 + $0x8] sm:$0xff] %vm618, %v3768
      %3805 = vst.msk [vmem:[#allocation3 + $0x10] sm:$0xff] %vm618, %v3769
      %3806 = vst.msk [vmem:[#allocation3 + $0x18] sm:$0xff] %vm618, %v3770
      %3807 = vst.msk [vmem:[#allocation3 + $0x20] sm:$0xff] %vm618, %v3771
      %3808 = vst.msk [vmem:[#allocation3 + $0x28] sm:$0xff] %vm618, %v3772
      %3809 = vst.msk [vmem:[#allocation3 + $0x30] sm:$0xff] %vm618, %v3773
      %3810 = vst.msk [vmem:[#allocation3 + $0x38] sm:$0xff] %vm618, %v3774
      %3811 = vst.msk [vmem:[#allocation3 + $0x40] sm:$0xff] %vm618, %v3775
      %3812 = vst.msk [vmem:[#allocation3 + $0x48] sm:$0xff] %vm618, %v3776
      %3813 = vst.msk [vmem:[#allocation3 + $0x50] sm:$0xff] %vm618, %v3777
      %3814 = vst.msk [vmem:[#allocation3 + $0x58] sm:$0xff] %vm618, %v3778
      %3815 = vst.msk [vmem:[#allocation3 + $0x60] sm:$0xff] %vm618, %v3779
      %3816 = vst.msk [vmem:[#allocation3 + $0x68] sm:$0xff] %vm618, %v3780
      %3817 = vst.msk [vmem:[#allocation3 + $0x70] sm:$0xff] %vm618, %v3781
      %3818 = vst.msk [vmem:[#allocation3 + $0x78] sm:$0xff] %vm618, %v3782
      %3819 = vst.msk [vmem:[#allocation3 + $0x80] sm:$0xff] %vm618, %v3783
      %3820 = vst.msk [vmem:[#allocation3 + $0x88] sm:$0xff] %vm618, %v3784
      %3821 = vst.msk [vmem:[#allocation3 + $0x90] sm:$0xff] %vm618, %v3785
      %3822 = vst.msk [vmem:[#allocation3 + $0x98] sm:$0xff] %vm618, %v3786
      %3823 = vst.msk [vmem:[#allocation3 + $0xa0] sm:$0xff] %vm618, %v3787
      %3824 = vst.msk [vmem:[#allocation3 + $0xa8] sm:$0xff] %vm618, %v3788
      %3825 = vst.msk [vmem:[#allocation3 + $0xb0] sm:$0xff] %vm618, %v3789
      %3826 = vst.msk [vmem:[#allocation3 + $0xb8] sm:$0xff] %vm618, %v3790
      %3827 = vst.msk [vmem:[#allocation3 + $0xc0] sm:$0xff] %vm618, %v3791
      %3828 = vst.msk [vmem:[#allocation3 + $0xc8] sm:$0xff] %vm618, %v3792
      %3829 = vst.msk [vmem:[#allocation3 + $0xd0] sm:$0xff] %vm618, %v3793
      %3830 = vst.msk [vmem:[#allocation3 + $0xd8] sm:$0xff] %vm618, %v3794
      %3831 = vst.msk [vmem:[#allocation3 + $0xe0] sm:$0xff] %vm618, %v3795
      %3832 = vst.msk [vmem:[#allocation3 + $0xe8] sm:$0xff] %vm618, %v3796
      %3833 = vst.msk [vmem:[#allocation3 + $0xf0] sm:$0xff] %vm618, %v3797
      %3834 = vst.msk [vmem:[#allocation3 + $0xf8] sm:$0xff] %vm618, %v3798
      %3835 = vst.msk [vmem:[#allocation3 + $0x100] sm:$0xff] %vm618, %v3799
      %3836 = vst.msk [vmem:[#allocation3 + $0x108] sm:$0xff] %vm618, %v3800
      %3837 = vst.msk [vmem:[#allocation3 + $0x110] sm:$0xff] %vm618, %v3801
      %3838 = vst.msk [vmem:[#allocation3 + $0x118] sm:$0xff] %vm618, %v3802
      %v3839 = vld [vmem:[#allocation3] sm:$0xff]
      %v3840 = vld [vmem:[#allocation3 + $0x8] sm:$0xff]
      %v3841 = vld [vmem:[#allocation3 + $0x10] sm:$0xff]
      %v3842 = vld [vmem:[#allocation3 + $0x18] sm:$0xff]
      %v3843 = vld [vmem:[#allocation3 + $0x20] sm:$0xff]
      %v3844 = vld [vmem:[#allocation3 + $0x28] sm:$0xff]
      %v3845 = vld [vmem:[#allocation3 + $0x30] sm:$0xff]
      %v3846 = vld [vmem:[#allocation3 + $0x38] sm:$0xff]
      %v3847 = vld [vmem:[#allocation3 + $0x40] sm:$0xff]
      %v3848 = vld [vmem:[#allocation3 + $0x48] sm:$0xff]
      %v3849 = vld [vmem:[#allocation3 + $0x50] sm:$0xff]
      %v3850 = vld [vmem:[#allocation3 + $0x58] sm:$0xff]
      %v3851 = vld [vmem:[#allocation3 + $0x60] sm:$0xff]
      %v3852 = vld [vmem:[#allocation3 + $0x68] sm:$0xff]
      %v3853 = vld [vmem:[#allocation3 + $0x70] sm:$0xff]
      %v3854 = vld [vmem:[#allocation3 + $0x78] sm:$0xff]
      %v3855 = vld [vmem:[#allocation3 + $0x80] sm:$0xff]
      %v3856 = vld [vmem:[#allocation3 + $0x88] sm:$0xff]
      %v3857 = vld [vmem:[#allocation3 + $0x90] sm:$0xff]
      %v3858 = vld [vmem:[#allocation3 + $0x98] sm:$0xff]
      %v3859 = vld [vmem:[#allocation3 + $0xa0] sm:$0xff]
      %v3860 = vld [vmem:[#allocation3 + $0xa8] sm:$0xff]
      %v3861 = vld [vmem:[#allocation3 + $0xb0] sm:$0xff]
      %v3862 = vld [vmem:[#allocation3 + $0xb8] sm:$0xff]
      %v3863 = vld [vmem:[#allocation3 + $0xc0] sm:$0xff]
      %v3864 = vld [vmem:[#allocation3 + $0xc8] sm:$0xff]
      %v3865 = vld [vmem:[#allocation3 + $0xd0] sm:$0xff]
      %v3866 = vld [vmem:[#allocation3 + $0xd8] sm:$0xff]
      %v3867 = vld [vmem:[#allocation3 + $0xe0] sm:$0xff]
      %v3868 = vld [vmem:[#allocation3 + $0xe8] sm:$0xff]
      %v3869 = vld [vmem:[#allocation3 + $0xf0] sm:$0xff]
      %v3870 = vld [vmem:[#allocation3 + $0xf8] sm:$0xff]
      %v3871 = vld [vmem:[#allocation3 + $0x100] sm:$0xff]
      %v3872 = vld [vmem:[#allocation3 + $0x108] sm:$0xff]
      %v3873 = vld [vmem:[#allocation3 + $0x110] sm:$0xff]
      %v3874 = vld [vmem:[#allocation3 + $0x118] sm:$0xff]
      %v3875 = vld [vmem:[%s2] sm:$0x1]
      %v3877 = vlaneseq
      %v3878 = vshrl.u32 %v3877, 7
      %v3879 = vsub.s32 0, %v3878
      %v3880 = vrot.slane %v3875, %v3879
      %v3882 = vadd.f32 %v3839, %v3880
      %v3883 = vadd.f32 %v3840, %v3880
      %v3884 = vadd.f32 %v3841, %v3880
      %v3885 = vadd.f32 %v3842, %v3880
      %v3886 = vadd.f32 %v3843, %v3880
      %v3887 = vadd.f32 %v3844, %v3880
      %v3888 = vadd.f32 %v3845, %v3880
      %v3889 = vadd.f32 %v3846, %v3880
      %v3890 = vadd.f32 %v3847, %v3880
      %v3891 = vadd.f32 %v3848, %v3880
      %v3892 = vadd.f32 %v3849, %v3880
      %v3893 = vadd.f32 %v3850, %v3880
      %v3894 = vadd.f32 %v3851, %v3880
      %v3895 = vadd.f32 %v3852, %v3880
      %v3896 = vadd.f32 %v3853, %v3880
      %v3897 = vadd.f32 %v3854, %v3880
      %v3898 = vadd.f32 %v3855, %v3880
      %v3899 = vadd.f32 %v3856, %v3880
      %v3900 = vadd.f32 %v3857, %v3880
      %v3901 = vadd.f32 %v3858, %v3880
      %v3902 = vadd.f32 %v3859, %v3880
      %v3903 = vadd.f32 %v3860, %v3880
      %v3904 = vadd.f32 %v3861, %v3880
      %v3905 = vadd.f32 %v3862, %v3880
      %v3906 = vadd.f32 %v3863, %v3880
      %v3907 = vadd.f32 %v3864, %v3880
      %v3908 = vadd.f32 %v3865, %v3880
      %v3909 = vadd.f32 %v3866, %v3880
      %v3910 = vadd.f32 %v3867, %v3880
      %v3911 = vadd.f32 %v3868, %v3880
      %v3912 = vadd.f32 %v3869, %v3880
      %v3913 = vadd.f32 %v3870, %v3880
      %v3914 = vadd.f32 %v3871, %v3880
      %v3915 = vadd.f32 %v3872, %v3880
      %v3916 = vadd.f32 %v3873, %v3880
      %v3917 = vadd.f32 %v3874, %v3880
      %v3918 = vmax.f32 %v3882, 0.0
      %v3919 = vmax.f32 %v3883, 0.0
      %v3920 = vmax.f32 %v3884, 0.0
      %v3921 = vmax.f32 %v3885, 0.0
      %v3922 = vmax.f32 %v3886, 0.0
      %v3923 = vmax.f32 %v3887, 0.0
      %v3924 = vmax.f32 %v3888, 0.0
      %v3925 = vmax.f32 %v3889, 0.0
      %v3926 = vmax.f32 %v3890, 0.0
      %v3927 = vmax.f32 %v3891, 0.0
      %v3928 = vmax.f32 %v3892, 0.0
      %v3929 = vmax.f32 %v3893, 0.0
      %v3930 = vmax.f32 %v3894, 0.0
      %v3931 = vmax.f32 %v3895, 0.0
      %v3932 = vmax.f32 %v3896, 0.0
      %v3933 = vmax.f32 %v3897, 0.0
      %v3934 = vmax.f32 %v3898, 0.0
      %v3935 = vmax.f32 %v3899, 0.0
      %v3936 = vmax.f32 %v3900, 0.0
      %v3937 = vmax.f32 %v3901, 0.0
      %v3938 = vmax.f32 %v3902, 0.0
      %v3939 = vmax.f32 %v3903, 0.0
      %v3940 = vmax.f32 %v3904, 0.0
      %v3941 = vmax.f32 %v3905, 0.0
      %v3942 = vmax.f32 %v3906, 0.0
      %v3943 = vmax.f32 %v3907, 0.0
      %v3944 = vmax.f32 %v3908, 0.0
      %v3945 = vmax.f32 %v3909, 0.0
      %v3946 = vmax.f32 %v3910, 0.0
      %v3947 = vmax.f32 %v3911, 0.0
      %v3948 = vmax.f32 %v3912, 0.0
      %v3949 = vmax.f32 %v3913, 0.0
      %v3950 = vmax.f32 %v3914, 0.0
      %v3951 = vmax.f32 %v3915, 0.0
      %v3952 = vmax.f32 %v3916, 0.0
      %v3953 = vmax.f32 %v3917, 0.0
      %3954 = vst.msk [vmem:[%s170] sm:$0xff] %vm618, %v3918
      %3955 = vst.msk [vmem:[%s170 + $0x8] sm:$0xff] %vm618, %v3919
      %s3956 = scalar_lea.vmem %s170, 16
      %vm3957 = vcmask 64514
      %3958 = vst.msk [vmem:[%s3956 - $0x2] sm:$0xfc] %vm3957, %v3920
      %3959 = vst.msk [vmem:[%s3956 + $0x6] sm:$0xff] %vm618, %v3921
      %vm3960 = vcmask 58368
      %3961 = vst.msk [vmem:[%s3956 + $0xe] sm:$0x3] %vm3960, %v3922
      %s3962 = scalar_lea.vmem %s170, 32
      %vm3963 = vcmask 64516
      %3964 = vst.msk [vmem:[%s3962 - $0x4] sm:$0xf0] %vm3963, %v3922
      %3965 = vst.msk [vmem:[%s3962 + $0x4] sm:$0xff] %vm618, %v3923
      %vm3966 = vcmask 60416
      %3967 = vst.msk [vmem:[%s3962 + $0xc] sm:$0xf] %vm3966, %v3924
      %s3968 = scalar_lea.vmem %s170, 48
      %vm3969 = vcmask 64518
      %3970 = vst.msk [vmem:[%s3968 - $0x6] sm:$0xc0] %vm3969, %v3924
      %3971 = vst.msk [vmem:[%s3968 + $0x2] sm:$0xff] %vm618, %v3925
      %vm3972 = vcmask 62464
      %3973 = vst.msk [vmem:[%s3968 + $0xa] sm:$0x3f] %vm3972, %v3926
      %s3974 = scalar_lea.vmem %s170, 64
      %3975 = vst.msk [vmem:[%s3974] sm:$0xff] %vm618, %v3927
      %3976 = vst.msk [vmem:[%s3974 + $0x8] sm:$0xff] %vm618, %v3928
      %s3977 = scalar_lea.vmem %s170, 80
      %3978 = vst.msk [vmem:[%s3977 - $0x2] sm:$0xfc] %vm3957, %v3929
      %3979 = vst.msk [vmem:[%s3977 + $0x6] sm:$0xff] %vm618, %v3930
      %3980 = vst.msk [vmem:[%s3977 + $0xe] sm:$0x3] %vm3960, %v3931
      %s3981 = scalar_lea.vmem %s170, 96
      %3982 = vst.msk [vmem:[%s3981 - $0x4] sm:$0xf0] %vm3963, %v3931
      %3983 = vst.msk [vmem:[%s3981 + $0x4] sm:$0xff] %vm618, %v3932
      %3984 = vst.msk [vmem:[%s3981 + $0xc] sm:$0xf] %vm3966, %v3933
      %s3985 = scalar_lea.vmem %s170, 112
      %3986 = vst.msk [vmem:[%s3985 - $0x6] sm:$0xc0] %vm3969, %v3933
      %3987 = vst.msk [vmem:[%s3985 + $0x2] sm:$0xff] %vm618, %v3934
      %3988 = vst.msk [vmem:[%s3985 + $0xa] sm:$0x3f] %vm3972, %v3935
      %s3989 = scalar_lea.vmem %s170, 128
      %3990 = vst.msk [vmem:[%s3989] sm:$0xff] %vm618, %v3936
      %3991 = vst.msk [vmem:[%s3989 + $0x8] sm:$0xff] %vm618, %v3937
      %s3992 = scalar_lea.vmem %s170, 144
      %3993 = vst.msk [vmem:[%s3992 - $0x2] sm:$0xfc] %vm3957, %v3938
      %3994 = vst.msk [vmem:[%s3992 + $0x6] sm:$0xff] %vm618, %v3939
      %3995 = vst.msk [vmem:[%s3992 + $0xe] sm:$0x3] %vm3960, %v3940
      %s3996 = scalar_lea.vmem %s170, 160
      %3997 = vst.msk [vmem:[%s3996 - $0x4] sm:$0xf0] %vm3963, %v3940
      %3998 = vst.msk [vmem:[%s3996 + $0x4] sm:$0xff] %vm618, %v3941
      %3999 = vst.msk [vmem:[%s3996 + $0xc] sm:$0xf] %vm3966, %v3942
      %s4000 = scalar_lea.vmem %s170, 176
      %4001 = vst.msk [vmem:[%s4000 - $0x6] sm:$0xc0] %vm3969, %v3942
      %4002 = vst.msk [vmem:[%s4000 + $0x2] sm:$0xff] %vm618, %v3943
      %4003 = vst.msk [vmem:[%s4000 + $0xa] sm:$0x3f] %vm3972, %v3944
      %s4004 = scalar_lea.vmem %s170, 192
      %4005 = vst.msk [vmem:[%s4004] sm:$0xff] %vm618, %v3945
      %4006 = vst.msk [vmem:[%s4004 + $0x8] sm:$0xff] %vm618, %v3946
      %s4007 = scalar_lea.vmem %s170, 208
      %4008 = vst.msk [vmem:[%s4007 - $0x2] sm:$0xfc] %vm3957, %v3947
      %4009 = vst.msk [vmem:[%s4007 + $0x6] sm:$0xff] %vm618, %v3948
      %4010 = vst.msk [vmem:[%s4007 + $0xe] sm:$0x3] %vm3960, %v3949
      %s4011 = scalar_lea.vmem %s170, 224
      %4012 = vst.msk [vmem:[%s4011 - $0x4] sm:$0xf0] %vm3963, %v3949
      %4013 = vst.msk [vmem:[%s4011 + $0x4] sm:$0xff] %vm618, %v3950
      %4014 = vst.msk [vmem:[%s4011 + $0xc] sm:$0xf] %vm3966, %v3951
      %s4015 = scalar_lea.vmem %s170, 240
      %4016 = vst.msk [vmem:[%s4015 - $0x6] sm:$0xc0] %vm3969, %v3951
      %4017 = vst.msk [vmem:[%s4015 + $0x2] sm:$0xff] %vm618, %v3952
      %4018 = vst.msk [vmem:[%s4015 + $0xa] sm:$0x3f] %vm3972, %v3953
      %p4019 = scmp.lt.s32.totalorder %s14, 1
      %s4020 = scalar_select %p4019, %s14, 1
      %s4021 = smul.addr %s4020, 32
      %s4022 = smul.addr %s4021, 8
      %s4023 = scalar_lea.vmem %s3, %s4022
      // Predicated region
      $region33: #{block_forward.1} parent=31 // pred_check
        %p4024 = pneg %p100
      $region34: #{block_forward.1} parent=31 // pred_check_branch
        %4026 = sbr.rel (%p4024) target = $region36
      $region35: #{block_forward.1} parent=31 // pred_region
        _
      $region36: #{block_forward.1} parent=31 // pred_fallthru
        _
    $region32: #{block_forward.1} parent=5 // pred_fallthru
      _
    %p4027 = scmp.le.s32.totalorder 2, %s9
    // Predicated region
    $region37: #{block_forward.1} parent=5 // pred_check
      %p4028 = pneg %p4027
    $region38: #{block_forward.1} parent=5 // pred_check_branch
      %4030 = sbr.rel (%p4028) target = $region40
    $region39: #{block_forward.1} parent=5 // pred_region
      %s4031 = ssub.s32 %s9, 2
      // Predicated region
      $region41: #{block_forward.1} parent=39 // pred_check
        %p4032 = pneg %p106
      $region42: #{block_forward.1} parent=39 // pred_check_branch
        %4034 = sbr.rel (%p4032) target = $region44
      $region43: #{block_forward.1} parent=39 // pred_region
        %p4035 = scmp.lt.s32.totalorder %s15, 1
        %s4036 = scalar_select %p4035, %s15, 1
        %s4037 = smul.addr %s4036, 32
        %s4038 = smul.addr %s4037, 8
        %s4039 = scalar_lea.vmem %s3, %s4038
      $region44: #{block_forward.1} parent=39 // pred_fallthru
        _
    $region40: #{block_forward.1} parent=5 // pred_fallthru
      _
  $region6: #{block_forward.1} parent=0 // loop_footer
    %s13 = sadd.s32 1, %s9
  $region7: #{block_forward.1} parent=0 // loop_footer_branch
    %8 = sbr.rel target = $region3
  $region8: #{block_forward.1} parent=0 // loop_exit
    _

</llo_original>
